<compile_context>
chip_gen: v7x
topology: tpu7x:2x2x1
jax: 0.10.0
libtpu: 0.0.40
codegen_flags: <defaults>
</compile_context>

<pallas_src>
import jax
import jax.numpy as jnp
from jax.experimental import pallas as pl
from jax.experimental.pallas import tpu as pltpu

LN_EPS = 1e-5


def _gelu(x):
    # tanh-approximate GELU
    c = jnp.asarray(0.7978845608028654, x.dtype)  # sqrt(2/pi)
    return 0.5 * x * (1.0 + jnp.tanh(c * (x + 0.044715 * x * x * x)))


def spectral_resnet_block_kernel(
    x_ref,      # (N, BD)      input dtype, Bb batches packed along lanes
    uinv_ref,   # (N, N)       bf16
    u_ref,      # (N, N)       bf16
    cheb_ref,   # (N, K*BD)    bf16, T_k replicated across each (Bb*D) block
    mavg_ref,   # (BD, BD)     f32, block-averaging matrix for LayerNorm stats
    bias_ref,   # (8, BH)      f32 slab: rows 0..3 = ln_g, ln_b, bk, b2 (width BD),
                #              row 4 = b1 (width BH)
    wk_ref,     # (K*BD, BD)   bf16, fused per-order filters (batch block-diag)
    w1_ref,     # (BD, BH)     bf16, batch block-diag
    w2_ref,     # (BH, BD)     bf16, batch block-diag
    o_ref,      # (N, BD)
):
    f32, bf16 = jnp.float32, jnp.bfloat16
    n, bd = x_ref.shape
    n_cheb = cheb_ref.shape[-1] // bd            # static

    ln_g = bias_ref[0:1, :bd]
    ln_b = bias_ref[1:2, :bd]
    bk = bias_ref[2:3, :bd]
    b2 = bias_ref[3:4, :bd]
    b1 = bias_ref[4:5, :]

    x = x_ref[...].astype(f32)

    # ---- LayerNorm over each D-sized column block. One block-averaging
    #      matmul over row-concatenated [x; x*x] gives E[x] and E[x^2]
    #      simultaneously (no mu -> xc -> var chain); f32 operands. ----
    stats = jnp.dot(jnp.concatenate([x, x * x], axis=0), mavg_ref[...],
                    preferred_element_type=f32)            # (2N, BD)
    mu = stats[:n, :]
    var = stats[n:, :] - mu * mu
    h = (x - mu) * jax.lax.rsqrt(var + LN_EPS) * ln_g + ln_b

    # ---- node -> spectral domain (bf16 operands, f32 accumulation) ----
    xhat = jnp.dot(uinv_ref[...], h.astype(bf16), preferred_element_type=f32)

    # ---- fused Chebyshev filter: all K orders in ONE deep-contraction matmul.
    #      Intermediate built directly in bf16 (no wide f32 copy). ----
    xhat_bf = xhat.astype(bf16)
    scaled = jnp.concatenate(
        [xhat_bf * cheb_ref[:, k * bd:(k + 1) * bd] for k in range(n_cheb)],
        axis=-1)                                            # (N, K*BD) bf16
    s = jnp.dot(scaled, wk_ref[...], preferred_element_type=f32) + bk

    # ---- spectral -> node domain + activation ----
    y = _gelu(jnp.dot(u_ref[...], s.astype(bf16), preferred_element_type=f32))

    # ---- node-space MLP with residual ----
    hid = _gelu(jnp.dot(y.astype(bf16), w1_ref[...],
                        preferred_element_type=f32) + b1)
    m = jnp.dot(hid.astype(bf16), w2_ref[...],
                preferred_element_type=f32) + b2

    o_ref[...] = (y + m).astype(o_ref.dtype)


def chebyshev_basis(eigenvalues, K):
    """T_k of eigenvalues rescaled to [-1, 1]; returns (N, K)."""
    lam_max = jnp.maximum(jnp.max(eigenvalues),
                          jnp.asarray(1e-6, eigenvalues.dtype))  # guard zeros
    lam = 2.0 * eigenvalues / lam_max - 1.0
    terms = [jnp.ones_like(lam), lam]
    for _ in range(2, K):
        terms.append(2.0 * lam * terms[-1] - terms[-2])
    return jnp.stack(terms[:K], axis=-1)


def spectral_resnet_block(x, eigenvalues, eigenvectors, inv_eigenvectors,
                          params, *, batch_block=None):
    B, N, D = x.shape
    K = params["wk"].shape[0]
    H = params["w1"].shape[1]
    f32, bf16 = jnp.float32, jnp.bfloat16

    # ---- Bb selection: lane-dense (Bb*D == 128 exactly), never larger just
    #      for "more lanes" (kron waste); Bb = 1 once D >= 128. ----
    if batch_block is None:
        batch_block = (128 // D) if (D < 128 and 128 % D == 0) else 1
    Bb = max(1, min(batch_block, B))
    while B % Bb:
        Bb -= 1
    G = B // Bb
    BD, BH = Bb * D, Bb * H

    eye_b = jnp.eye(Bb, dtype=f32)

    # Chebyshev scalars replicated over each batch block, pre-cast to bf16
    # (T_k in [-1, 1]) -> kernel does a pure bf16 broadcast multiply.
    cheb = chebyshev_basis(eigenvalues.astype(f32), K)               # (N, K)
    cheb_rep = jnp.repeat(cheb, BD, axis=1).astype(bf16)             # (N, K*BD)

    # Per-order filters fused into one contraction; replicated block-diagonally
    # over the packed batch block (exact — no cross-batch mixing).
    wk_big = jnp.concatenate(
        [jnp.kron(eye_b, params["wk"][k].astype(f32)) for k in range(K)],
        axis=0).astype(bf16)                                         # (K*BD, BD)
    w1_big = jnp.kron(eye_b, params["w1"].astype(f32)).astype(bf16)  # (BD, BH)
    w2_big = jnp.kron(eye_b, params["w2"].astype(f32)).astype(bf16)  # (BH, BD)

    # One coalesced bias/gain slab: rows 0..3 width BD (zero-padded to BH),
    # row 4 = MLP hidden bias (width BH). Single DMA instead of five.
    def _rep(v):
        return jnp.tile(v.reshape(1, -1).astype(f32), (1, Bb))

    def _pad(r):
        return jnp.pad(r, ((0, 0), (0, BH - r.shape[1])))

    bias_slab = jnp.concatenate([
        _pad(_rep(params["ln_g"])),
        _pad(_rep(params["ln_b"])),
        _pad(_rep(params["bk"])),
        _pad(_rep(params["b2"])),
        _rep(params["b1"]),
        jnp.zeros((3, BH), f32),
    ], axis=0)                                                       # (8, BH)

    # x @ m_avg broadcasts each D-block's mean across that block (f32 exact;
    # 1/D with D a power of two is exactly representable anyway).
    m_avg = jnp.kron(eye_b, jnp.full((D, D), 1.0 / D, dtype=f32))    # (BD, BD)

    # bf16 weights for the MXU (f32 accumulation inside the kernel).
    u_bf = eigenvectors.astype(bf16)
    uinv_bf = inv_eigenvectors.astype(bf16)

    # (B, N, D) -> (G, N, Bb*D): batch packed along lanes (wrapper plumbing).
    xp = x.reshape(G, Bb, N, D).transpose(0, 2, 1, 3).reshape(G, N, BD)

    weights = (uinv_bf, u_bf, cheb_rep, m_avg, bias_slab,
               wk_big, w1_big, w2_big)
    weight_shapes = [(N, N), (N, N), (N, K * BD), (BD, BD), (8, BH),
                     (K * BD, BD), (BD, BH), (BH, BD)]

    # Physical-VMEM-aware cap: ~48 MiB on v7x (64 MiB phys), ~96 MiB on
    # v5e/v6e (128 MiB phys).
    try:
        phys_vmem = int(pltpu.get_tpu_info().vmem_capacity_bytes)
    except Exception:
        phys_vmem = 64 * 2**20
    vmem_cap = int(0.75 * phys_vmem)

    def _run(single_buffer_weights):
        def wspec(shape):
            if single_buffer_weights:
                return pl.BlockSpec(shape, lambda g: tuple(0 for _ in shape),
                                    pipeline_mode=pl.Buffered(1))
            return pl.BlockSpec(shape, lambda g: tuple(0 for _ in shape))

        weight_bytes = sum(int(a.size) * a.dtype.itemsize for a in weights)
        if not single_buffer_weights:
            weight_bytes *= 2                      # default double-buffering
        io_bytes = 2 * 2 * N * BD * x.dtype.itemsize   # pipelined x / out
        inter_bytes = (N * BD * 4) * 8 + (N * BH * 4) * 2 + (N * K * BD * 2) * 2
        est_bytes = weight_bytes + io_bytes + inter_bytes
        vmem_limit = int(min(vmem_cap, max(32 * 2**20, 2 * est_bytes)))

        return pl.pallas_call(
            spectral_resnet_block_kernel,
            out_shape=jax.ShapeDtypeStruct((G, N, BD), x.dtype),
            grid=(G,),
            in_specs=[pl.BlockSpec((None, N, BD), lambda g: (g, 0, 0))]
                     + [wspec(s) for s in weight_shapes],
            out_specs=pl.BlockSpec((None, N, BD), lambda g: (g, 0, 0)),
            compiler_params=pltpu.CompilerParams(
                dimension_semantics=("parallel",),
                vmem_limit_bytes=vmem_limit),
        )(xp, *weights)

    try:
        out_p = _run(True)
    except Exception:
        # Fallback if pipeline_mode=pl.Buffered(1) is unsupported by this
        # jax/Mosaic build — default double-buffered specs.
        out_p = _run(False)

    # (G, N, Bb*D) -> (B, N, D)
    return out_p.reshape(G, N, Bb, D).transpose(0, 2, 1, 3).reshape(B, N, D)


def reference(x, eigenvalues, eigenvectors, inv_eigenvectors, params):
    """Pure-JAX reference mirroring the kernel's precision policy
    (bf16 matmul operands, f32 accumulation, exact f32 LayerNorm)."""
    f32, bf16 = jnp.float32, jnp.bfloat16
    B, N, D = x.shape
    K = params["wk"].shape[0]
    H = params["w1"].shape[1]
    cheb = chebyshev_basis(eigenvalues.astype(f32), K)              # (N, K)

    xf = x.astype(f32)
    mu = jnp.mean(xf, axis=-1, keepdims=True)
    xc = xf - mu
    var = jnp.mean(xc * xc, axis=-1, keepdims=True)
    h = (xc * jax.lax.rsqrt(var + LN_EPS) * params["ln_g"].reshape(1, 1, D)
         + params["ln_b"].reshape(1, 1, D))

    xhat = jnp.einsum("mn,bnd->bmd", inv_eigenvectors.astype(bf16),
                      h.astype(bf16), preferred_element_type=f32)
    scaled = (cheb[None, :, :, None] * xhat[:, :, None, :]).reshape(B, N, K * D)
    wk_flat = params["wk"].astype(bf16).reshape(K * D, D)
    s = jnp.einsum("bnc,ce->bne", scaled.astype(bf16), wk_flat,
                   preferred_element_type=f32) + params["bk"].reshape(1, 1, D)
    y = _gelu(jnp.einsum("mn,bnd->bmd", eigenvectors.astype(bf16),
                         s.astype(bf16), preferred_element_type=f32))

    hid = _gelu(jnp.einsum("bnd,dh->bnh", y.astype(bf16),
                           params["w1"].astype(bf16),
                           preferred_element_type=f32)
                + params["b1"].reshape(1, 1, H))
    m = (jnp.einsum("bnh,hd->bnd", hid.astype(bf16),
                    params["w2"].astype(bf16),
                    preferred_element_type=f32)
         + params["b2"].reshape(1, 1, D))
    return (y + m).astype(x.dtype)


if __name__ == "__main__":
    B, N, D = 8, 16, 32          # batch, graph nodes, n_embed
    K = 4                        # filter_approximation_rank
    MULT = 4                     # linear_size_multiplier
    H = MULT * D
    INIT_STD = 0.02

    key = jax.random.PRNGKey(0)
    ks = jax.random.split(key, 8)

    x = jax.random.normal(ks[0], (B, N, D), dtype=jnp.float32)
    eigenvalues = jax.random.uniform(ks[1], (N,), dtype=jnp.float32,
                                     minval=0.0, maxval=2.0)
    eigenvectors = jax.random.normal(ks[2], (N, N), dtype=jnp.float32)
    inv_eigenvectors = jax.random.normal(ks[3], (N, N), dtype=jnp.float32)

    params = {
        "ln_g": jnp.ones((D,), jnp.float32),
        "ln_b": jnp.zeros((D,), jnp.float32),
        "wk": INIT_STD * jax.random.normal(ks[4], (K, D, D), dtype=jnp.float32),
        "bk": jnp.zeros((D,), jnp.float32),
        "w1": INIT_STD * jax.random.normal(ks[5], (D, H), dtype=jnp.float32),
        "b1": jnp.zeros((H,), jnp.float32),
        "w2": INIT_STD * jax.random.normal(ks[6], (H, D), dtype=jnp.float32),
        "b2": jnp.zeros((D,), jnp.float32),
    }

    out = jax.block_until_ready(
        spectral_resnet_block(x, eigenvalues, eigenvectors,
                              inv_eigenvectors, params))
    ref = jax.block_until_ready(
        reference(x, eigenvalues, eigenvectors, inv_eigenvectors, params))

    assert out.shape == (B, N, D)
    max_diff = float(jnp.max(jnp.abs(out - ref)))
    assert jnp.allclose(out, ref, atol=5e-2, rtol=5e-2), max_diff

    print("KERNEL_OK")
</pallas_src>

<mosaic_0001>
module attributes {stable_mosaic.version = 11 : i64} {
  func.func @spectral_resnet_block_kernel(%arg0: i32, %arg1: memref<1x16x128xf32, #tpu.memory_space<vmem>>, %arg2: memref<16x16xbf16, #tpu.memory_space<vmem>>, %arg3: memref<16x16xbf16, #tpu.memory_space<vmem>>, %arg4: memref<16x512xbf16, #tpu.memory_space<vmem>>, %arg5: memref<128x128xf32, #tpu.memory_space<vmem>>, %arg6: memref<8x512xf32, #tpu.memory_space<vmem>>, %arg7: memref<512x128xbf16, #tpu.memory_space<vmem>>, %arg8: memref<128x512xbf16, #tpu.memory_space<vmem>>, %arg9: memref<512x128xbf16, #tpu.memory_space<vmem>>, %arg10: memref<1x16x128xf32, #tpu.memory_space<vmem>>) attributes {dimension_semantics = [#tpu.dimension_semantics<parallel>], iteration_bounds = array<i64: 2>, scalar_prefetch = 0 : i64, scratch_operands = 0 : i64, tpu.core_type = #tpu.core_type<tc>, window_params = [{transform_indices = @transform_0, window_bounds = array<i64: 1, 16, 128>}, {pipeline_mode = #tpu.pipeline_mode<synchronous>, transform_indices = @transform_1, window_bounds = array<i64: 16, 16>}, {pipeline_mode = #tpu.pipeline_mode<synchronous>, transform_indices = @transform_2, window_bounds = array<i64: 16, 16>}, {pipeline_mode = #tpu.pipeline_mode<synchronous>, transform_indices = @transform_3, window_bounds = array<i64: 16, 512>}, {pipeline_mode = #tpu.pipeline_mode<synchronous>, transform_indices = @transform_4, window_bounds = array<i64: 128, 128>}, {pipeline_mode = #tpu.pipeline_mode<synchronous>, transform_indices = @transform_5, window_bounds = array<i64: 8, 512>}, {pipeline_mode = #tpu.pipeline_mode<synchronous>, transform_indices = @transform_6, window_bounds = array<i64: 512, 128>}, {pipeline_mode = #tpu.pipeline_mode<synchronous>, transform_indices = @transform_7, window_bounds = array<i64: 128, 512>}, {pipeline_mode = #tpu.pipeline_mode<synchronous>, transform_indices = @transform_8, window_bounds = array<i64: 512, 128>}, {transform_indices = @transform_9, window_bounds = array<i64: 1, 16, 128>}]} {
    %c0 = arith.constant 0 : index
    %c0_0 = arith.constant 0 : index
    %0 = vector.load %arg6[%c0, %c0_0] : memref<8x512xf32, #tpu.memory_space<vmem>>, vector<1x128xf32>
    %c1 = arith.constant 1 : index
    %c0_1 = arith.constant 0 : index
    %1 = vector.load %arg6[%c1, %c0_1] : memref<8x512xf32, #tpu.memory_space<vmem>>, vector<1x128xf32>
    %c2 = arith.constant 2 : index
    %c0_2 = arith.constant 0 : index
    %2 = vector.load %arg6[%c2, %c0_2] : memref<8x512xf32, #tpu.memory_space<vmem>>, vector<1x128xf32>
    %c3 = arith.constant 3 : index
    %c0_3 = arith.constant 0 : index
    %3 = vector.load %arg6[%c3, %c0_3] : memref<8x512xf32, #tpu.memory_space<vmem>>, vector<1x128xf32>
    %c4 = arith.constant 4 : index
    %c0_4 = arith.constant 0 : index
    %4 = vector.load %arg6[%c4, %c0_4] : memref<8x512xf32, #tpu.memory_space<vmem>>, vector<1x512xf32>
    %c0_5 = arith.constant 0 : index
    %c0_6 = arith.constant 0 : index
    %c0_7 = arith.constant 0 : index
    %5 = vector.load %arg1[%c0_5, %c0_6, %c0_7] : memref<1x16x128xf32, #tpu.memory_space<vmem>>, vector<1x16x128xf32>
    %6 = vector.shape_cast %5 : vector<1x16x128xf32> to vector<16x128xf32>
    %7 = arith.mulf %6, %6 : vector<16x128xf32>
    %8 = tpu.concatenate %6, %7 in 0 : vector<16x128xf32>, vector<16x128xf32> -> vector<32x128xf32>
    %c0_8 = arith.constant 0 : index
    %c0_9 = arith.constant 0 : index
    %9 = vector.load %arg5[%c0_8, %c0_9] : memref<128x128xf32, #tpu.memory_space<vmem>>, vector<128x128xf32>
    %cst = arith.constant dense<0.000000e+00> : vector<32x128xf32>
    %10 = tpu.matmul %8, %9, %cst {dimension_numbers = #tpu.dot_dimension_numbers<[1], [0], [0], [1], [0, 0, 1, 1], [], []>} : vector<32x128xf32>, vector<128x128xf32>, vector<32x128xf32> -> vector<32x128xf32>
    %11 = vector.extract_strided_slice %10 {offsets = [0, 0], sizes = [16, 128], strides = [1, 1]} : vector<32x128xf32> to vector<16x128xf32>
    %12 = vector.extract_strided_slice %10 {offsets = [16, 0], sizes = [16, 128], strides = [1, 1]} : vector<32x128xf32> to vector<16x128xf32>
    %13 = arith.mulf %11, %11 : vector<16x128xf32>
    %14 = arith.subf %12, %13 : vector<16x128xf32>
    %15 = arith.subf %6, %11 : vector<16x128xf32>
    %cst_10 = arith.constant 9.99999974E-6 : f32
    %16 = vector.broadcast %cst_10 : f32 to vector<16x128xf32>
    %17 = arith.addf %14, %16 : vector<16x128xf32>
    %18 = math.rsqrt %17 : vector<16x128xf32>
    %19 = arith.mulf %15, %18 : vector<16x128xf32>
    %20 = vector.broadcast %0 : vector<1x128xf32> to vector<16x128xf32>
    %21 = arith.mulf %19, %20 : vector<16x128xf32>
    %22 = vector.broadcast %1 : vector<1x128xf32> to vector<16x128xf32>
    %23 = arith.addf %21, %22 : vector<16x128xf32>
    %c0_11 = arith.constant 0 : index
    %c0_12 = arith.constant 0 : index
    %24 = vector.load %arg2[%c0_11, %c0_12] : memref<16x16xbf16, #tpu.memory_space<vmem>>, vector<16x16xbf16>
    %25 = arith.truncf %23 : vector<16x128xf32> to vector<16x128xbf16>
    %cst_13 = arith.constant dense<0.000000e+00> : vector<16x128xf32>
    %26 = tpu.matmul %24, %25, %cst_13 {dimension_numbers = #tpu.dot_dimension_numbers<[1], [0], [0], [1], [0, 0, 1, 1], [], []>} : vector<16x16xbf16>, vector<16x128xbf16>, vector<16x128xf32> -> vector<16x128xf32>
    %27 = arith.truncf %26 : vector<16x128xf32> to vector<16x128xbf16>
    %c0_14 = arith.constant 0 : index
    %c0_15 = arith.constant 0 : index
    %28 = vector.load %arg4[%c0_14, %c0_15] : memref<16x512xbf16, #tpu.memory_space<vmem>>, vector<16x128xbf16>
    %29 = arith.mulf %27, %28 : vector<16x128xbf16>
    %c0_16 = arith.constant 0 : index
    %c128 = arith.constant 128 : index
    %30 = vector.load %arg4[%c0_16, %c128] : memref<16x512xbf16, #tpu.memory_space<vmem>>, vector<16x128xbf16>
    %31 = arith.mulf %27, %30 : vector<16x128xbf16>
    %c0_17 = arith.constant 0 : index
    %c256 = arith.constant 256 : index
    %32 = vector.load %arg4[%c0_17, %c256] : memref<16x512xbf16, #tpu.memory_space<vmem>>, vector<16x128xbf16>
    %33 = arith.mulf %27, %32 : vector<16x128xbf16>
    %c0_18 = arith.constant 0 : index
    %c384 = arith.constant 384 : index
    %34 = vector.load %arg4[%c0_18, %c384] : memref<16x512xbf16, #tpu.memory_space<vmem>>, vector<16x128xbf16>
    %35 = arith.mulf %27, %34 : vector<16x128xbf16>
    %36 = tpu.concatenate %29, %31, %33, %35 in 1 : vector<16x128xbf16>, vector<16x128xbf16>, vector<16x128xbf16>, vector<16x128xbf16> -> vector<16x512xbf16>
    %c0_19 = arith.constant 0 : index
    %c0_20 = arith.constant 0 : index
    %37 = vector.load %arg7[%c0_19, %c0_20] : memref<512x128xbf16, #tpu.memory_space<vmem>>, vector<512x128xbf16>
    %cst_21 = arith.constant dense<0.000000e+00> : vector<16x128xf32>
    %38 = tpu.matmul %36, %37, %cst_21 {dimension_numbers = #tpu.dot_dimension_numbers<[1], [0], [0], [1], [0, 0, 1, 1], [], []>} : vector<16x512xbf16>, vector<512x128xbf16>, vector<16x128xf32> -> vector<16x128xf32>
    %39 = vector.broadcast %2 : vector<1x128xf32> to vector<16x128xf32>
    %40 = arith.addf %38, %39 : vector<16x128xf32>
    %c0_22 = arith.constant 0 : index
    %c0_23 = arith.constant 0 : index
    %41 = vector.load %arg3[%c0_22, %c0_23] : memref<16x16xbf16, #tpu.memory_space<vmem>>, vector<16x16xbf16>
    %42 = arith.truncf %40 : vector<16x128xf32> to vector<16x128xbf16>
    %cst_24 = arith.constant dense<0.000000e+00> : vector<16x128xf32>
    %43 = tpu.matmul %41, %42, %cst_24 {dimension_numbers = #tpu.dot_dimension_numbers<[1], [0], [0], [1], [0, 0, 1, 1], [], []>} : vector<16x16xbf16>, vector<16x128xbf16>, vector<16x128xf32> -> vector<16x128xf32>
    %cst_25 = arith.constant 5.000000e-01 : f32
    %44 = vector.broadcast %cst_25 : f32 to vector<16x128xf32>
    %45 = arith.mulf %44, %43 : vector<16x128xf32>
    %cst_26 = arith.constant 4.471500e-02 : f32
    %46 = vector.broadcast %cst_26 : f32 to vector<16x128xf32>
    %47 = arith.mulf %46, %43 : vector<16x128xf32>
    %48 = arith.mulf %47, %43 : vector<16x128xf32>
    %49 = arith.mulf %48, %43 : vector<16x128xf32>
    %50 = arith.addf %43, %49 : vector<16x128xf32>
    %cst_27 = arith.constant 0.797884583 : f32
    %51 = vector.broadcast %cst_27 : f32 to vector<16x128xf32>
    %52 = arith.mulf %51, %50 : vector<16x128xf32>
    %53 = math.tanh %52 : vector<16x128xf32>
    %cst_28 = arith.constant 1.000000e+00 : f32
    %54 = vector.broadcast %cst_28 : f32 to vector<16x128xf32>
    %55 = arith.addf %54, %53 : vector<16x128xf32>
    %56 = arith.mulf %45, %55 : vector<16x128xf32>
    %57 = arith.truncf %56 : vector<16x128xf32> to vector<16x128xbf16>
    %c0_29 = arith.constant 0 : index
    %c0_30 = arith.constant 0 : index
    %58 = vector.load %arg8[%c0_29, %c0_30] : memref<128x512xbf16, #tpu.memory_space<vmem>>, vector<128x512xbf16>
    %cst_31 = arith.constant dense<0.000000e+00> : vector<16x512xf32>
    %59 = tpu.matmul %57, %58, %cst_31 {dimension_numbers = #tpu.dot_dimension_numbers<[1], [0], [0], [1], [0, 0, 1, 1], [], []>} : vector<16x128xbf16>, vector<128x512xbf16>, vector<16x512xf32> -> vector<16x512xf32>
    %60 = vector.broadcast %4 : vector<1x512xf32> to vector<16x512xf32>
    %61 = arith.addf %59, %60 : vector<16x512xf32>
    %cst_32 = arith.constant 5.000000e-01 : f32
    %62 = vector.broadcast %cst_32 : f32 to vector<16x512xf32>
    %63 = arith.mulf %62, %61 : vector<16x512xf32>
    %cst_33 = arith.constant 4.471500e-02 : f32
    %64 = vector.broadcast %cst_33 : f32 to vector<16x512xf32>
    %65 = arith.mulf %64, %61 : vector<16x512xf32>
    %66 = arith.mulf %65, %61 : vector<16x512xf32>
    %67 = arith.mulf %66, %61 : vector<16x512xf32>
    %68 = arith.addf %61, %67 : vector<16x512xf32>
    %cst_34 = arith.constant 0.797884583 : f32
    %69 = vector.broadcast %cst_34 : f32 to vector<16x512xf32>
    %70 = arith.mulf %69, %68 : vector<16x512xf32>
    %71 = math.tanh %70 : vector<16x512xf32>
    %cst_35 = arith.constant 1.000000e+00 : f32
    %72 = vector.broadcast %cst_35 : f32 to vector<16x512xf32>
    %73 = arith.addf %72, %71 : vector<16x512xf32>
    %74 = arith.mulf %63, %73 : vector<16x512xf32>
    %75 = arith.truncf %74 : vector<16x512xf32> to vector<16x512xbf16>
    %c0_36 = arith.constant 0 : index
    %c0_37 = arith.constant 0 : index
    %76 = vector.load %arg9[%c0_36, %c0_37] : memref<512x128xbf16, #tpu.memory_space<vmem>>, vector<512x128xbf16>
    %cst_38 = arith.constant dense<0.000000e+00> : vector<16x128xf32>
    %77 = tpu.matmul %75, %76, %cst_38 {dimension_numbers = #tpu.dot_dimension_numbers<[1], [0], [0], [1], [0, 0, 1, 1], [], []>} : vector<16x512xbf16>, vector<512x128xbf16>, vector<16x128xf32> -> vector<16x128xf32>
    %78 = vector.broadcast %3 : vector<1x128xf32> to vector<16x128xf32>
    %79 = arith.addf %77, %78 : vector<16x128xf32>
    %80 = arith.addf %56, %79 : vector<16x128xf32>
    %c0_39 = arith.constant 0 : index
    %c0_40 = arith.constant 0 : index
    %c0_41 = arith.constant 0 : index
    %81 = vector.load %arg10[%c0_39, %c0_40, %c0_41] : memref<1x16x128xf32, #tpu.memory_space<vmem>>, vector<1x16x128xf32>
    %82 = vector.shape_cast %81 : vector<1x16x128xf32> to vector<16x128xf32>
    %83 = vector.shape_cast %80 : vector<16x128xf32> to vector<1x16x128xf32>
    tpu.vector_store %arg10[%c0_39, %c0_40, %c0_41], %83 {strides = array<i32>} : memref<1x16x128xf32, #tpu.memory_space<vmem>>, vector<1x16x128xf32>,
    return
  }
  func.func @transform_0(%arg0: i32) -> (i32, i32, i32) {
    %c0_i32 = arith.constant 0 : i32
    %c0_i32_0 = arith.constant 0 : i32
    %c0_i32_1 = arith.constant 0 : i32
    return %arg0, %c0_i32, %c0_i32_0 : i32, i32, i32
  }
  func.func @transform_1(%arg0: i32) -> (i32, i32) {
    %c0_i32 = arith.constant 0 : i32
    %c0_i32_0 = arith.constant 0 : i32
    %c0_i32_1 = arith.constant 0 : i32
    return %c0_i32, %c0_i32_0 : i32, i32
  }
  func.func @transform_2(%arg0: i32) -> (i32, i32) {
    %c0_i32 = arith.constant 0 : i32
    %c0_i32_0 = arith.constant 0 : i32
    %c0_i32_1 = arith.constant 0 : i32
    return %c0_i32, %c0_i32_0 : i32, i32
  }
  func.func @transform_3(%arg0: i32) -> (i32, i32) {
    %c0_i32 = arith.constant 0 : i32
    %c0_i32_0 = arith.constant 0 : i32
    %c0_i32_1 = arith.constant 0 : i32
    return %c0_i32, %c0_i32_0 : i32, i32
  }
  func.func @transform_4(%arg0: i32) -> (i32, i32) {
    %c0_i32 = arith.constant 0 : i32
    %c0_i32_0 = arith.constant 0 : i32
    %c0_i32_1 = arith.constant 0 : i32
    return %c0_i32, %c0_i32_0 : i32, i32
  }
  func.func @transform_5(%arg0: i32) -> (i32, i32) {
    %c0_i32 = arith.constant 0 : i32
    %c0_i32_0 = arith.constant 0 : i32
    %c0_i32_1 = arith.constant 0 : i32
    return %c0_i32, %c0_i32_0 : i32, i32
  }
  func.func @transform_6(%arg0: i32) -> (i32, i32) {
    %c0_i32 = arith.constant 0 : i32
    %c0_i32_0 = arith.constant 0 : i32
    %c0_i32_1 = arith.constant 0 : i32
    return %c0_i32, %c0_i32_0 : i32, i32
  }
  func.func @transform_7(%arg0: i32) -> (i32, i32) {
    %c0_i32 = arith.constant 0 : i32
    %c0_i32_0 = arith.constant 0 : i32
    %c0_i32_1 = arith.constant 0 : i32
    return %c0_i32, %c0_i32_0 : i32, i32
  }
  func.func @transform_8(%arg0: i32) -> (i32, i32) {
    %c0_i32 = arith.constant 0 : i32
    %c0_i32_0 = arith.constant 0 : i32
    %c0_i32_1 = arith.constant 0 : i32
    return %c0_i32, %c0_i32_0 : i32, i32
  }
  func.func @transform_9(%arg0: i32) -> (i32, i32, i32) {
    %c0_i32 = arith.constant 0 : i32
    %c0_i32_0 = arith.constant 0 : i32
    %c0_i32_1 = arith.constant 0 : i32
    return %arg0, %c0_i32, %c0_i32_0 : i32, i32, i32
  }
}

module attributes {stable_mosaic.version = 11 : i64} {
  func.func @spectral_resnet_block_kernel(%arg0: i32, %arg1: memref<1x16x128xf32, #tpu.memory_space<vmem>>, %arg2: memref<16x16xbf16, #tpu.memory_space<vmem>>, %arg3: memref<16x16xbf16, #tpu.memory_space<vmem>>, %arg4: memref<16x512xbf16, #tpu.memory_space<vmem>>, %arg5: memref<128x128xf32, #tpu.memory_space<vmem>>, %arg6: memref<8x512xf32, #tpu.memory_space<vmem>>, %arg7: memref<512x128xbf16, #tpu.memory_space<vmem>>, %arg8: memref<128x512xbf16, #tpu.memory_space<vmem>>, %arg9: memref<512x128xbf16, #tpu.memory_space<vmem>>, %arg10: memref<1x16x128xf32, #tpu.memory_space<vmem>>) attributes {dimension_semantics = [#tpu.dimension_semantics<parallel>], iteration_bounds = array<i64: 2>, scalar_prefetch = 0 : i64, scratch_operands = 0 : i64, tpu.core_type = #tpu.core_type<tc>, window_params = [{transform_indices = @transform_0, window_bounds = array<i64: 1, 16, 128>}, {pipeline_mode = #tpu.pipeline_mode<synchronous>, transform_indices = @transform_1, window_bounds = array<i64: 16, 16>}, {pipeline_mode = #tpu.pipeline_mode<synchronous>, transform_indices = @transform_2, window_bounds = array<i64: 16, 16>}, {pipeline_mode = #tpu.pipeline_mode<synchronous>, transform_indices = @transform_3, window_bounds = array<i64: 16, 512>}, {pipeline_mode = #tpu.pipeline_mode<synchronous>, transform_indices = @transform_4, window_bounds = array<i64: 128, 128>}, {pipeline_mode = #tpu.pipeline_mode<synchronous>, transform_indices = @transform_5, window_bounds = array<i64: 8, 512>}, {pipeline_mode = #tpu.pipeline_mode<synchronous>, transform_indices = @transform_6, window_bounds = array<i64: 512, 128>}, {pipeline_mode = #tpu.pipeline_mode<synchronous>, transform_indices = @transform_7, window_bounds = array<i64: 128, 512>}, {pipeline_mode = #tpu.pipeline_mode<synchronous>, transform_indices = @transform_8, window_bounds = array<i64: 512, 128>}, {transform_indices = @transform_9, window_bounds = array<i64: 1, 16, 128>}]} {
    %c0 = arith.constant 0 : index
    %c0_0 = arith.constant 0 : index
    %0 = vector.load %arg6[%c0, %c0_0] : memref<8x512xf32, #tpu.memory_space<vmem>>, vector<1x128xf32>
    %c1 = arith.constant 1 : index
    %c0_1 = arith.constant 0 : index
    %1 = vector.load %arg6[%c1, %c0_1] : memref<8x512xf32, #tpu.memory_space<vmem>>, vector<1x128xf32>
    %c2 = arith.constant 2 : index
    %c0_2 = arith.constant 0 : index
    %2 = vector.load %arg6[%c2, %c0_2] : memref<8x512xf32, #tpu.memory_space<vmem>>, vector<1x128xf32>
    %c3 = arith.constant 3 : index
    %c0_3 = arith.constant 0 : index
    %3 = vector.load %arg6[%c3, %c0_3] : memref<8x512xf32, #tpu.memory_space<vmem>>, vector<1x128xf32>
    %c4 = arith.constant 4 : index
    %c0_4 = arith.constant 0 : index
    %4 = vector.load %arg6[%c4, %c0_4] : memref<8x512xf32, #tpu.memory_space<vmem>>, vector<1x512xf32>
    %c0_5 = arith.constant 0 : index
    %c0_6 = arith.constant 0 : index
    %c0_7 = arith.constant 0 : index
    %5 = vector.load %arg1[%c0_5, %c0_6, %c0_7] : memref<1x16x128xf32, #tpu.memory_space<vmem>>, vector<1x16x128xf32>
    %6 = vector.shape_cast %5 : vector<1x16x128xf32> to vector<16x128xf32>
    %7 = arith.mulf %6, %6 : vector<16x128xf32>
    %8 = tpu.concatenate %6, %7 in 0 : vector<16x128xf32>, vector<16x128xf32> -> vector<32x128xf32>
    %c0_8 = arith.constant 0 : index
    %c0_9 = arith.constant 0 : index
    %9 = vector.load %arg5[%c0_8, %c0_9] : memref<128x128xf32, #tpu.memory_space<vmem>>, vector<128x128xf32>
    %cst = arith.constant dense<0.000000e+00> : vector<32x128xf32>
    %10 = tpu.matmul %8, %9, %cst {dimension_numbers = #tpu.dot_dimension_numbers<[1], [0], [0], [1], [0, 0, 1, 1], [], []>} : vector<32x128xf32>, vector<128x128xf32>, vector<32x128xf32> -> vector<32x128xf32>
    %11 = vector.extract_strided_slice %10 {offsets = [0, 0], sizes = [16, 128], strides = [1, 1]} : vector<32x128xf32> to vector<16x128xf32>
    %12 = vector.extract_strided_slice %10 {offsets = [16, 0], sizes = [16, 128], strides = [1, 1]} : vector<32x128xf32> to vector<16x128xf32>
    %13 = arith.mulf %11, %11 : vector<16x128xf32>
    %14 = arith.subf %12, %13 : vector<16x128xf32>
    %15 = arith.subf %6, %11 : vector<16x128xf32>
    %cst_10 = arith.constant 9.99999974E-6 : f32
    %16 = vector.broadcast %cst_10 : f32 to vector<16x128xf32>
    %17 = arith.addf %14, %16 : vector<16x128xf32>
    %18 = math.rsqrt %17 : vector<16x128xf32>
    %19 = arith.mulf %15, %18 : vector<16x128xf32>
    %20 = vector.broadcast %0 : vector<1x128xf32> to vector<16x128xf32>
    %21 = arith.mulf %19, %20 : vector<16x128xf32>
    %22 = vector.broadcast %1 : vector<1x128xf32> to vector<16x128xf32>
    %23 = arith.addf %21, %22 : vector<16x128xf32>
    %c0_11 = arith.constant 0 : index
    %c0_12 = arith.constant 0 : index
    %24 = vector.load %arg2[%c0_11, %c0_12] : memref<16x16xbf16, #tpu.memory_space<vmem>>, vector<16x16xbf16>
    %25 = arith.truncf %23 : vector<16x128xf32> to vector<16x128xbf16>
    %cst_13 = arith.constant dense<0.000000e+00> : vector<16x128xf32>
    %26 = tpu.matmul %24, %25, %cst_13 {dimension_numbers = #tpu.dot_dimension_numbers<[1], [0], [0], [1], [0, 0, 1, 1], [], []>} : vector<16x16xbf16>, vector<16x128xbf16>, vector<16x128xf32> -> vector<16x128xf32>
    %27 = arith.truncf %26 : vector<16x128xf32> to vector<16x128xbf16>
    %c0_14 = arith.constant 0 : index
    %c0_15 = arith.constant 0 : index
    %28 = vector.load %arg4[%c0_14, %c0_15] : memref<16x512xbf16, #tpu.memory_space<vmem>>, vector<16x128xbf16>
    %29 = arith.mulf %27, %28 : vector<16x128xbf16>
    %c0_16 = arith.constant 0 : index
    %c128 = arith.constant 128 : index
    %30 = vector.load %arg4[%c0_16, %c128] : memref<16x512xbf16, #tpu.memory_space<vmem>>, vector<16x128xbf16>
    %31 = arith.mulf %27, %30 : vector<16x128xbf16>
    %c0_17 = arith.constant 0 : index
    %c256 = arith.constant 256 : index
    %32 = vector.load %arg4[%c0_17, %c256] : memref<16x512xbf16, #tpu.memory_space<vmem>>, vector<16x128xbf16>
    %33 = arith.mulf %27, %32 : vector<16x128xbf16>
    %c0_18 = arith.constant 0 : index
    %c384 = arith.constant 384 : index
    %34 = vector.load %arg4[%c0_18, %c384] : memref<16x512xbf16, #tpu.memory_space<vmem>>, vector<16x128xbf16>
    %35 = arith.mulf %27, %34 : vector<16x128xbf16>
    %36 = tpu.concatenate %29, %31, %33, %35 in 1 : vector<16x128xbf16>, vector<16x128xbf16>, vector<16x128xbf16>, vector<16x128xbf16> -> vector<16x512xbf16>
    %c0_19 = arith.constant 0 : index
    %c0_20 = arith.constant 0 : index
    %37 = vector.load %arg7[%c0_19, %c0_20] : memref<512x128xbf16, #tpu.memory_space<vmem>>, vector<512x128xbf16>
    %cst_21 = arith.constant dense<0.000000e+00> : vector<16x128xf32>
    %38 = tpu.matmul %36, %37, %cst_21 {dimension_numbers = #tpu.dot_dimension_numbers<[1], [0], [0], [1], [0, 0, 1, 1], [], []>} : vector<16x512xbf16>, vector<512x128xbf16>, vector<16x128xf32> -> vector<16x128xf32>
    %39 = vector.broadcast %2 : vector<1x128xf32> to vector<16x128xf32>
    %40 = arith.addf %38, %39 : vector<16x128xf32>
    %c0_22 = arith.constant 0 : index
    %c0_23 = arith.constant 0 : index
    %41 = vector.load %arg3[%c0_22, %c0_23] : memref<16x16xbf16, #tpu.memory_space<vmem>>, vector<16x16xbf16>
    %42 = arith.truncf %40 : vector<16x128xf32> to vector<16x128xbf16>
    %cst_24 = arith.constant dense<0.000000e+00> : vector<16x128xf32>
    %43 = tpu.matmul %41, %42, %cst_24 {dimension_numbers = #tpu.dot_dimension_numbers<[1], [0], [0], [1], [0, 0, 1, 1], [], []>} : vector<16x16xbf16>, vector<16x128xbf16>, vector<16x128xf32> -> vector<16x128xf32>
    %cst_25 = arith.constant 5.000000e-01 : f32
    %44 = vector.broadcast %cst_25 : f32 to vector<16x128xf32>
    %45 = arith.mulf %44, %43 : vector<16x128xf32>
    %cst_26 = arith.constant 4.471500e-02 : f32
    %46 = vector.broadcast %cst_26 : f32 to vector<16x128xf32>
    %47 = arith.mulf %46, %43 : vector<16x128xf32>
    %48 = arith.mulf %47, %43 : vector<16x128xf32>
    %49 = arith.mulf %48, %43 : vector<16x128xf32>
    %50 = arith.addf %43, %49 : vector<16x128xf32>
    %cst_27 = arith.constant 0.797884583 : f32
    %51 = vector.broadcast %cst_27 : f32 to vector<16x128xf32>
    %52 = arith.mulf %51, %50 : vector<16x128xf32>
    %53 = math.tanh %52 : vector<16x128xf32>
    %cst_28 = arith.constant 1.000000e+00 : f32
    %54 = vector.broadcast %cst_28 : f32 to vector<16x128xf32>
    %55 = arith.addf %54, %53 : vector<16x128xf32>
    %56 = arith.mulf %45, %55 : vector<16x128xf32>
    %57 = arith.truncf %56 : vector<16x128xf32> to vector<16x128xbf16>
    %c0_29 = arith.constant 0 : index
    %c0_30 = arith.constant 0 : index
    %58 = vector.load %arg8[%c0_29, %c0_30] : memref<128x512xbf16, #tpu.memory_space<vmem>>, vector<128x512xbf16>
    %cst_31 = arith.constant dense<0.000000e+00> : vector<16x512xf32>
    %59 = tpu.matmul %57, %58, %cst_31 {dimension_numbers = #tpu.dot_dimension_numbers<[1], [0], [0], [1], [0, 0, 1, 1], [], []>} : vector<16x128xbf16>, vector<128x512xbf16>, vector<16x512xf32> -> vector<16x512xf32>
    %60 = vector.broadcast %4 : vector<1x512xf32> to vector<16x512xf32>
    %61 = arith.addf %59, %60 : vector<16x512xf32>
    %cst_32 = arith.constant 5.000000e-01 : f32
    %62 = vector.broadcast %cst_32 : f32 to vector<16x512xf32>
    %63 = arith.mulf %62, %61 : vector<16x512xf32>
    %cst_33 = arith.constant 4.471500e-02 : f32
    %64 = vector.broadcast %cst_33 : f32 to vector<16x512xf32>
    %65 = arith.mulf %64, %61 : vector<16x512xf32>
    %66 = arith.mulf %65, %61 : vector<16x512xf32>
    %67 = arith.mulf %66, %61 : vector<16x512xf32>
    %68 = arith.addf %61, %67 : vector<16x512xf32>
    %cst_34 = arith.constant 0.797884583 : f32
    %69 = vector.broadcast %cst_34 : f32 to vector<16x512xf32>
    %70 = arith.mulf %69, %68 : vector<16x512xf32>
    %71 = math.tanh %70 : vector<16x512xf32>
    %cst_35 = arith.constant 1.000000e+00 : f32
    %72 = vector.broadcast %cst_35 : f32 to vector<16x512xf32>
    %73 = arith.addf %72, %71 : vector<16x512xf32>
    %74 = arith.mulf %63, %73 : vector<16x512xf32>
    %75 = arith.truncf %74 : vector<16x512xf32> to vector<16x512xbf16>
    %c0_36 = arith.constant 0 : index
    %c0_37 = arith.constant 0 : index
    %76 = vector.load %arg9[%c0_36, %c0_37] : memref<512x128xbf16, #tpu.memory_space<vmem>>, vector<512x128xbf16>
    %cst_38 = arith.constant dense<0.000000e+00> : vector<16x128xf32>
    %77 = tpu.matmul %75, %76, %cst_38 {dimension_numbers = #tpu.dot_dimension_numbers<[1], [0], [0], [1], [0, 0, 1, 1], [], []>} : vector<16x512xbf16>, vector<512x128xbf16>, vector<16x128xf32> -> vector<16x128xf32>
    %78 = vector.broadcast %3 : vector<1x128xf32> to vector<16x128xf32>
    %79 = arith.addf %77, %78 : vector<16x128xf32>
    %80 = arith.addf %56, %79 : vector<16x128xf32>
    %c0_39 = arith.constant 0 : index
    %c0_40 = arith.constant 0 : index
    %c0_41 = arith.constant 0 : index
    %81 = vector.load %arg10[%c0_39, %c0_40, %c0_41] : memref<1x16x128xf32, #tpu.memory_space<vmem>>, vector<1x16x128xf32>
    %82 = vector.shape_cast %81 : vector<1x16x128xf32> to vector<16x128xf32>
    %83 = vector.shape_cast %80 : vector<16x128xf32> to vector<1x16x128xf32>
    tpu.vector_store %arg10[%c0_39, %c0_40, %c0_41], %83 {strides = array<i32>} : memref<1x16x128xf32, #tpu.memory_space<vmem>>, vector<1x16x128xf32>,
    return
  }
  func.func @transform_0(%arg0: i32) -> (i32, i32, i32) {
    %c0_i32 = arith.constant 0 : i32
    %c0_i32_0 = arith.constant 0 : i32
    %c0_i32_1 = arith.constant 0 : i32
    return %arg0, %c0_i32, %c0_i32_0 : i32, i32, i32
  }
  func.func @transform_1(%arg0: i32) -> (i32, i32) {
    %c0_i32 = arith.constant 0 : i32
    %c0_i32_0 = arith.constant 0 : i32
    %c0_i32_1 = arith.constant 0 : i32
    return %c0_i32, %c0_i32_0 : i32, i32
  }
  func.func @transform_2(%arg0: i32) -> (i32, i32) {
    %c0_i32 = arith.constant 0 : i32
    %c0_i32_0 = arith.constant 0 : i32
    %c0_i32_1 = arith.constant 0 : i32
    return %c0_i32, %c0_i32_0 : i32, i32
  }
  func.func @transform_3(%arg0: i32) -> (i32, i32) {
    %c0_i32 = arith.constant 0 : i32
    %c0_i32_0 = arith.constant 0 : i32
    %c0_i32_1 = arith.constant 0 : i32
    return %c0_i32, %c0_i32_0 : i32, i32
  }
  func.func @transform_4(%arg0: i32) -> (i32, i32) {
    %c0_i32 = arith.constant 0 : i32
    %c0_i32_0 = arith.constant 0 : i32
    %c0_i32_1 = arith.constant 0 : i32
    return %c0_i32, %c0_i32_0 : i32, i32
  }
  func.func @transform_5(%arg0: i32) -> (i32, i32) {
    %c0_i32 = arith.constant 0 : i32
    %c0_i32_0 = arith.constant 0 : i32
    %c0_i32_1 = arith.constant 0 : i32
    return %c0_i32, %c0_i32_0 : i32, i32
  }
  func.func @transform_6(%arg0: i32) -> (i32, i32) {
    %c0_i32 = arith.constant 0 : i32
    %c0_i32_0 = arith.constant 0 : i32
    %c0_i32_1 = arith.constant 0 : i32
    return %c0_i32, %c0_i32_0 : i32, i32
  }
  func.func @transform_7(%arg0: i32) -> (i32, i32) {
    %c0_i32 = arith.constant 0 : i32
    %c0_i32_0 = arith.constant 0 : i32
    %c0_i32_1 = arith.constant 0 : i32
    return %c0_i32, %c0_i32_0 : i32, i32
  }
  func.func @transform_8(%arg0: i32) -> (i32, i32) {
    %c0_i32 = arith.constant 0 : i32
    %c0_i32_0 = arith.constant 0 : i32
    %c0_i32_1 = arith.constant 0 : i32
    return %c0_i32, %c0_i32_0 : i32, i32
  }
  func.func @transform_9(%arg0: i32) -> (i32, i32, i32) {
    %c0_i32 = arith.constant 0 : i32
    %c0_i32_0 = arith.constant 0 : i32
    %c0_i32_1 = arith.constant 0 : i32
    return %arg0, %c0_i32, %c0_i32_0 : i32, i32, i32
  }
}

</mosaic_0001>

<llo_original>
// kernel: tpu_custom_call.1
$region0: #{tpu_custom_call.1}
  #allocation0 [shape = 'u32[]', space=smem, size = 0x4, offset = 0x4, fixed_abs, tag = 'smem constant byte address 0x4 - core index']
  #allocation1 [shape = 'u32[144,128]{1,0:T(1,128)}', space=vmem, size = 0x12000, scoped, tag = 'internal scratch']
  %s0 = inlined_call_operand.hbm [shape: f32[2,16,128], index: 0, kind: input, shape index: {}]
  %s1 = inlined_call_operand.hbm [shape: bf16[16,16], index: 1, kind: input, shape index: {}]
  %s2 = inlined_call_operand.hbm [shape: bf16[16,16], index: 2, kind: input, shape index: {}]
  %s3 = inlined_call_operand.hbm [shape: bf16[16,512], index: 3, kind: input, shape index: {}]
  %s4 = inlined_call_operand.hbm [shape: f32[128,128], index: 4, kind: input, shape index: {}]
  %s5 = inlined_call_operand.hbm [shape: f32[8,512], index: 5, kind: input, shape index: {}]
  %s6 = inlined_call_operand.hbm [shape: bf16[512,128], index: 6, kind: input, shape index: {}]
  %s7 = inlined_call_operand.hbm [shape: bf16[128,512], index: 7, kind: input, shape index: {}]
  %s8 = inlined_call_operand.hbm [shape: bf16[512,128], index: 8, kind: input, shape index: {}]
  %s9 = inlined_call_operand.hbm [shape: f32[2,16,128], index: 9, kind: output, shape index: {}]
  %s10 = sld [smem:[#allocation0]]
  $region105: #{tpu_custom_call.1} parent=0
    _
  %s12 = ssub.s32 1, %s10
  %s13 = scalar_select 0, %s12, %s10
  $region1: #{tpu_custom_call.1} parent=0
    #allocation2 [shape = 'u8[16384]{0}', space=vmem, size = 0x4000, scoped, tag = 'input window, operand 0']
    #allocation3 [shape = 's32[2]{0}', space=sflag, size = 0x8, scoped, tag = 'scoped memory for tpu_custom_call.1']
    #allocation4 [shape = 's32[2]{0}', space=sflag, size = 0x8, scoped, tag = 'scoped memory for tpu_custom_call.1']
    #allocation5 [shape = 'u8[4096]{0}', space=vmem, size = 0x1000, scoped, tag = 'input window, operand 1, single buffered']
    #allocation6 [shape = 's32[1]{0}', space=sflag, size = 0x4, scoped, tag = 'scoped memory for tpu_custom_call.1']
    #allocation7 [shape = 'u8[4096]{0}', space=vmem, size = 0x1000, scoped, tag = 'input window, operand 2, single buffered']
    #allocation8 [shape = 'u8[16384]{0}', space=vmem, size = 0x4000, scoped, tag = 'input window, operand 3, single buffered']
    #allocation9 [shape = 's32[1]{0}', space=sflag, size = 0x4, scoped, tag = 'scoped memory for tpu_custom_call.1']
    #allocation10 [shape = 'u8[65536]{0}', space=vmem, size = 0x10000, scoped, tag = 'input window, operand 4, single buffered']
    #allocation11 [shape = 'u8[16384]{0}', space=vmem, size = 0x4000, scoped, tag = 'input window, operand 5, single buffered']
    #allocation12 [shape = 's32[1]{0}', space=sflag, size = 0x4, scoped, tag = 'scoped memory for tpu_custom_call.1']
    #allocation13 [shape = 'u8[131072]{0}', space=vmem, size = 0x20000, scoped, tag = 'input window, operand 6, single buffered']
    #allocation14 [shape = 'u8[131072]{0}', space=vmem, size = 0x20000, scoped, tag = 'input window, operand 7, single buffered']
    #allocation15 [shape = 's32[1]{0}', space=sflag, size = 0x4, scoped, tag = 'scoped memory for tpu_custom_call.1']
    #allocation16 [shape = 'u8[131072]{0}', space=vmem, size = 0x20000, scoped, tag = 'input window, operand 8, single buffered']
    #allocation17 [shape = 'u8[16384]{0}', space=vmem, size = 0x4000, scoped, tag = 'output window, operand 0']
    %14 = vsyncpa [#allocation3], 0
    %s15 = scalar_lea.sflag [#allocation3], 1
    %16 = vsyncpa %s15, 0
    %17 = vsyncpa [#allocation6], 0
    %18 = vsyncpa [#allocation9], 0
    %19 = vsyncpa [#allocation12], 0
    %20 = vsyncpa [#allocation15], 0
    %21 = vsyncpa [#allocation4], 0
    %s22 = scalar_lea.sflag [#allocation4], 1
    %23 = vsyncpa %s22, 0
    loop: start=0, step=1, limit=4
    $region2: #{tpu_custom_call.1} parent=1 // loop_pre_header
      _
    $region3: #{tpu_custom_call.1} parent=1 // loop_header
      %s25 = sphi 0, %s29
      %p26 = scmp.ge.s32.totalorder %s25, 4
      %s35 = sphi 0, %s37
      %s38 = sphi 0, %s35
      %s39 = sphi 0, %s38
      %s55 = sphi 0, %s39
      %s59 = sphi 0, %s59
      %s61 = sphi 0, %s59
      %s62 = sphi 0, %s61
      %s76 = sphi 0, %s62
      %s80 = sphi 0, %s80
      %s82 = sphi 0, %s80
      %s83 = sphi 0, %s82
      %s97 = sphi 0, %s83
      %s101 = sphi 0, %s101
      %s103 = sphi 0, %s101
      %s104 = sphi 0, %s103
      %s118 = sphi 0, %s104
      %s122 = sphi 0, %s122
      %s124 = sphi 0, %s122
      %s125 = sphi 0, %s124
      %s139 = sphi 0, %s125
      %s143 = sphi 0, %s143
      %s145 = sphi 0, %s143
      %s146 = sphi 0, %s145
      %s160 = sphi 0, %s146
      %s164 = sphi 0, %s164
      %s166 = sphi 0, %s164
      %s167 = sphi 0, %s166
      %s181 = sphi 0, %s167
      %s185 = sphi 0, %s185
      %s187 = sphi 0, %s185
      %s188 = sphi 0, %s187
      %s202 = sphi 0, %s188
      %s206 = sphi 0, %s206
      %s208 = sphi 0, %s206
      %s209 = sphi 0, %s208
      %s223 = sphi 0, %s209
      %s229 = sphi 0, %s231
      %s232 = sphi 0, %s229
      %s233 = sphi 0, %s232
      %s249 = sphi 0, %s233
    $region4: #{tpu_custom_call.1} parent=1 // loop_header_branch
      %28 = sbr.rel (%p26) target = $region8
    $region5: #{tpu_custom_call.1} parent=1 // loop_body
      %s30 = ssub.s32 %s25, 1
      %s31 = ssub.s32 %s25, 2
      %s32 = sadd.s32 %s25, 1
      %s33 = ssub.s32 %s25, %s32
      %p34 = scmp.eq.s32.totalorder %s33, 0
      %s36 = sadd.s32 %s35, 1
      %s37 = scalar_select %p34, %s35, %s36
      %p40 = pneg %p34
      %p41 = scmp.eq.s32.totalorder %s25, 1
      %p42 = por %p40, %p41
      %p43 = scmp.ne.s32.totalorder %s35, %s38
      %p44 = scmp.eq.s32.totalorder %s25, 0
      %p45 = por %p43, %p44
      %p46 = scmp.ne.s32.totalorder %s35, %s38
      %p47 = scmp.eq.s32.totalorder %s30, 1
      %p48 = por %p46, %p47
      %p49 = scmp.ne.s32.totalorder %s38, %s39
      %p50 = scmp.eq.s32.totalorder %s30, 0
      %p51 = por %p49, %p50
      %p52 = scmp.ne.s32.totalorder %s38, %s39
      %p53 = scmp.eq.s32.totalorder %s31, 1
      %p54 = por %p52, %p53
      %p56 = scmp.ne.s32.totalorder %s39, %s55
      %p57 = scmp.eq.s32.totalorder %s31, 0
      %p58 = por %p56, %p57
      %s60 = sadd.s32 %s59, 1
      %p63 = scmp.eq.s32.totalorder %s25, 1
      %p64 = scmp.ne.s32.totalorder %s59, %s61
      %p65 = scmp.eq.s32.totalorder %s25, 0
      %p66 = por %p64, %p65
      %p67 = scmp.ne.s32.totalorder %s59, %s61
      %p68 = scmp.eq.s32.totalorder %s30, 1
      %p69 = por %p67, %p68
      %p70 = scmp.ne.s32.totalorder %s61, %s62
      %p71 = scmp.eq.s32.totalorder %s30, 0
      %p72 = por %p70, %p71
      %p73 = scmp.ne.s32.totalorder %s61, %s62
      %p74 = scmp.eq.s32.totalorder %s31, 1
      %p75 = por %p73, %p74
      %p77 = scmp.ne.s32.totalorder %s62, %s76
      %p78 = scmp.eq.s32.totalorder %s31, 0
      %p79 = por %p77, %p78
      %s81 = sadd.s32 %s80, 1
      %p84 = scmp.eq.s32.totalorder %s25, 1
      %p85 = scmp.ne.s32.totalorder %s80, %s82
      %p86 = scmp.eq.s32.totalorder %s25, 0
      %p87 = por %p85, %p86
      %p88 = scmp.ne.s32.totalorder %s80, %s82
      %p89 = scmp.eq.s32.totalorder %s30, 1
      %p90 = por %p88, %p89
      %p91 = scmp.ne.s32.totalorder %s82, %s83
      %p92 = scmp.eq.s32.totalorder %s30, 0
      %p93 = por %p91, %p92
      %p94 = scmp.ne.s32.totalorder %s82, %s83
      %p95 = scmp.eq.s32.totalorder %s31, 1
      %p96 = por %p94, %p95
      %p98 = scmp.ne.s32.totalorder %s83, %s97
      %p99 = scmp.eq.s32.totalorder %s31, 0
      %p100 = por %p98, %p99
      %s102 = sadd.s32 %s101, 1
      %p105 = scmp.eq.s32.totalorder %s25, 1
      %p106 = scmp.ne.s32.totalorder %s101, %s103
      %p107 = scmp.eq.s32.totalorder %s25, 0
      %p108 = por %p106, %p107
      %p109 = scmp.ne.s32.totalorder %s101, %s103
      %p110 = scmp.eq.s32.totalorder %s30, 1
      %p111 = por %p109, %p110
      %p112 = scmp.ne.s32.totalorder %s103, %s104
      %p113 = scmp.eq.s32.totalorder %s30, 0
      %p114 = por %p112, %p113
      %p115 = scmp.ne.s32.totalorder %s103, %s104
      %p116 = scmp.eq.s32.totalorder %s31, 1
      %p117 = por %p115, %p116
      %p119 = scmp.ne.s32.totalorder %s104, %s118
      %p120 = scmp.eq.s32.totalorder %s31, 0
      %p121 = por %p119, %p120
      %s123 = sadd.s32 %s122, 1
      %p126 = scmp.eq.s32.totalorder %s25, 1
      %p127 = scmp.ne.s32.totalorder %s122, %s124
      %p128 = scmp.eq.s32.totalorder %s25, 0
      %p129 = por %p127, %p128
      %p130 = scmp.ne.s32.totalorder %s122, %s124
      %p131 = scmp.eq.s32.totalorder %s30, 1
      %p132 = por %p130, %p131
      %p133 = scmp.ne.s32.totalorder %s124, %s125
      %p134 = scmp.eq.s32.totalorder %s30, 0
      %p135 = por %p133, %p134
      %p136 = scmp.ne.s32.totalorder %s124, %s125
      %p137 = scmp.eq.s32.totalorder %s31, 1
      %p138 = por %p136, %p137
      %p140 = scmp.ne.s32.totalorder %s125, %s139
      %p141 = scmp.eq.s32.totalorder %s31, 0
      %p142 = por %p140, %p141
      %s144 = sadd.s32 %s143, 1
      %p147 = scmp.eq.s32.totalorder %s25, 1
      %p148 = scmp.ne.s32.totalorder %s143, %s145
      %p149 = scmp.eq.s32.totalorder %s25, 0
      %p150 = por %p148, %p149
      %p151 = scmp.ne.s32.totalorder %s143, %s145
      %p152 = scmp.eq.s32.totalorder %s30, 1
      %p153 = por %p151, %p152
      %p154 = scmp.ne.s32.totalorder %s145, %s146
      %p155 = scmp.eq.s32.totalorder %s30, 0
      %p156 = por %p154, %p155
      %p157 = scmp.ne.s32.totalorder %s145, %s146
      %p158 = scmp.eq.s32.totalorder %s31, 1
      %p159 = por %p157, %p158
      %p161 = scmp.ne.s32.totalorder %s146, %s160
      %p162 = scmp.eq.s32.totalorder %s31, 0
      %p163 = por %p161, %p162
      %s165 = sadd.s32 %s164, 1
      %p168 = scmp.eq.s32.totalorder %s25, 1
      %p169 = scmp.ne.s32.totalorder %s164, %s166
      %p170 = scmp.eq.s32.totalorder %s25, 0
      %p171 = por %p169, %p170
      %p172 = scmp.ne.s32.totalorder %s164, %s166
      %p173 = scmp.eq.s32.totalorder %s30, 1
      %p174 = por %p172, %p173
      %p175 = scmp.ne.s32.totalorder %s166, %s167
      %p176 = scmp.eq.s32.totalorder %s30, 0
      %p177 = por %p175, %p176
      %p178 = scmp.ne.s32.totalorder %s166, %s167
      %p179 = scmp.eq.s32.totalorder %s31, 1
      %p180 = por %p178, %p179
      %p182 = scmp.ne.s32.totalorder %s167, %s181
      %p183 = scmp.eq.s32.totalorder %s31, 0
      %p184 = por %p182, %p183
      %s186 = sadd.s32 %s185, 1
      %p189 = scmp.eq.s32.totalorder %s25, 1
      %p190 = scmp.ne.s32.totalorder %s185, %s187
      %p191 = scmp.eq.s32.totalorder %s25, 0
      %p192 = por %p190, %p191
      %p193 = scmp.ne.s32.totalorder %s185, %s187
      %p194 = scmp.eq.s32.totalorder %s30, 1
      %p195 = por %p193, %p194
      %p196 = scmp.ne.s32.totalorder %s187, %s188
      %p197 = scmp.eq.s32.totalorder %s30, 0
      %p198 = por %p196, %p197
      %p199 = scmp.ne.s32.totalorder %s187, %s188
      %p200 = scmp.eq.s32.totalorder %s31, 1
      %p201 = por %p199, %p200
      %p203 = scmp.ne.s32.totalorder %s188, %s202
      %p204 = scmp.eq.s32.totalorder %s31, 0
      %p205 = por %p203, %p204
      %s207 = sadd.s32 %s206, 1
      %p210 = scmp.eq.s32.totalorder %s25, 1
      %p211 = scmp.ne.s32.totalorder %s206, %s208
      %p212 = scmp.eq.s32.totalorder %s25, 0
      %p213 = por %p211, %p212
      %p214 = scmp.ne.s32.totalorder %s206, %s208
      %p215 = scmp.eq.s32.totalorder %s30, 1
      %p216 = por %p214, %p215
      %p217 = scmp.ne.s32.totalorder %s208, %s209
      %p218 = scmp.eq.s32.totalorder %s30, 0
      %p219 = por %p217, %p218
      %p220 = scmp.ne.s32.totalorder %s208, %s209
      %p221 = scmp.eq.s32.totalorder %s31, 1
      %p222 = por %p220, %p221
      %p224 = scmp.ne.s32.totalorder %s209, %s223
      %p225 = scmp.eq.s32.totalorder %s31, 0
      %p226 = por %p224, %p225
      %s227 = ssub.s32 %s25, %s32
      %p228 = scmp.eq.s32.totalorder %s227, 0
      %s230 = sadd.s32 %s229, 1
      %s231 = scalar_select %p228, %s229, %s230
      %p234 = pneg %p228
      %p235 = scmp.eq.s32.totalorder %s25, 1
      %p236 = por %p234, %p235
      %p237 = scmp.ne.s32.totalorder %s229, %s232
      %p238 = scmp.eq.s32.totalorder %s25, 0
      %p239 = por %p237, %p238
      %p240 = scmp.ne.s32.totalorder %s229, %s232
      %p241 = scmp.eq.s32.totalorder %s30, 1
      %p242 = por %p240, %p241
      %p243 = scmp.ne.s32.totalorder %s232, %s233
      %p244 = scmp.eq.s32.totalorder %s30, 0
      %p245 = por %p243, %p244
      %p246 = scmp.ne.s32.totalorder %s232, %s233
      %p247 = scmp.eq.s32.totalorder %s31, 1
      %p248 = por %p246, %p247
      %p250 = scmp.ne.s32.totalorder %s233, %s249
      %p251 = scmp.eq.s32.totalorder %s31, 0
      %p252 = por %p250, %p251
      %p253 = scmp.le.s32.totalorder 1, %s25
      %p254 = scmp.lt.s32.totalorder %s25, 3
      %p255 = pnand %p253, %p254
      %p256 = pneg %p255
      // Predicated region
      $region9: #{tpu_custom_call.1} parent=5 // pred_check
        _
      $region10: #{tpu_custom_call.1} parent=5 // pred_check_branch
        %258 = sbr.rel (%p255) target = $region12
      $region11: #{tpu_custom_call.1} parent=5 // pred_region
        %s259 = ssub.s32 %s25, 1
        // Predicated region
        $region13: #{tpu_custom_call.1} parent=11 // pred_check
          %p260 = pneg %p72
        $region14: #{tpu_custom_call.1} parent=11 // pred_check_branch
          %262 = sbr.rel (%p260) target = $region16
        $region15: #{tpu_custom_call.1} parent=11 // pred_region
          %s264 = ssub.s32 128, 128
          %265 = vsyncadd [#allocation6], %s264
          %s266 = sshll.u32 [#allocation5], 4
          %s267 = int_to_ptr.vmem [resolvable:$true] %s266
          %272 = dma.hbm_to_vmem [thread:$0]  %s1, 128, %s267, [#allocation6], 64, 64, 4
        $region16: #{tpu_custom_call.1} parent=11 // pred_fallthru
          _
        // Predicated region
        $region17: #{tpu_custom_call.1} parent=11 // pred_check
          %p273 = pneg %p93
        $region18: #{tpu_custom_call.1} parent=11 // pred_check_branch
          %275 = sbr.rel (%p273) target = $region20
        $region19: #{tpu_custom_call.1} parent=11 // pred_region
          %s277 = ssub.s32 128, 128
          %278 = vsyncadd [#allocation6], %s277
          %s279 = sshll.u32 [#allocation7], 4
          %s280 = int_to_ptr.vmem [resolvable:$true] %s279
          %285 = dma.hbm_to_vmem [thread:$0]  %s2, 128, %s280, [#allocation6], 64, 64, 4
        $region20: #{tpu_custom_call.1} parent=11 // pred_fallthru
          _
        // Predicated region
        $region21: #{tpu_custom_call.1} parent=11 // pred_check
          %p286 = pneg %p114
        $region22: #{tpu_custom_call.1} parent=11 // pred_check_branch
          %288 = sbr.rel (%p286) target = $region24
        $region23: #{tpu_custom_call.1} parent=11 // pred_region
          %s290 = ssub.s32 512, 512
          %291 = vsyncadd [#allocation9], %s290
          %s292 = sshll.u32 [#allocation8], 4
          %s293 = int_to_ptr.vmem [resolvable:$true] %s292
          %298 = dma.hbm_to_vmem [thread:$0]  %s3, 512, %s293, [#allocation9], 256, 256, 16
        $region24: #{tpu_custom_call.1} parent=11 // pred_fallthru
          _
        // Predicated region
        $region25: #{tpu_custom_call.1} parent=11 // pred_check
          %p299 = pneg %p135
        $region26: #{tpu_custom_call.1} parent=11 // pred_check_branch
          %301 = sbr.rel (%p299) target = $region28
        $region27: #{tpu_custom_call.1} parent=11 // pred_region
          %s303 = ssub.s32 2048, 2048
          %304 = vsyncadd [#allocation9], %s303
          %s305 = sshll.u32 [#allocation10], 4
          %s306 = int_to_ptr.vmem [resolvable:$true] %s305
          %311 = dma.hbm_to_vmem [thread:$0]  %s4, 2048, %s306, [#allocation9], 128, 128, 8
        $region28: #{tpu_custom_call.1} parent=11 // pred_fallthru
          _
        // Predicated region
        $region29: #{tpu_custom_call.1} parent=11 // pred_check
          %p312 = pneg %p156
        $region30: #{tpu_custom_call.1} parent=11 // pred_check_branch
          %314 = sbr.rel (%p312) target = $region32
        $region31: #{tpu_custom_call.1} parent=11 // pred_region
          %s316 = ssub.s32 512, 512
          %317 = vsyncadd [#allocation12], %s316
          %s319 = sshll.u32 [#allocation11], 4
          %s320 = int_to_ptr.vmem [resolvable:$true] %s319
          %322 = dma.hbm_to_vmem [thread:$0]  %s5, 512, %s320, [#allocation12]
        $region32: #{tpu_custom_call.1} parent=11 // pred_fallthru
          _
        // Predicated region
        $region33: #{tpu_custom_call.1} parent=11 // pred_check
          %p323 = pneg %p177
        $region34: #{tpu_custom_call.1} parent=11 // pred_check_branch
          %325 = sbr.rel (%p323) target = $region36
        $region35: #{tpu_custom_call.1} parent=11 // pred_region
          %s327 = ssub.s32 4096, 4096
          %328 = vsyncadd [#allocation12], %s327
          %s329 = sshll.u32 [#allocation13], 4
          %s330 = int_to_ptr.vmem [resolvable:$true] %s329
          %335 = dma.hbm_to_vmem [thread:$0]  %s6, 4096, %s330, [#allocation12], 64, 64, 4
        $region36: #{tpu_custom_call.1} parent=11 // pred_fallthru
          _
        // Predicated region
        $region37: #{tpu_custom_call.1} parent=11 // pred_check
          %p336 = pneg %p198
        $region38: #{tpu_custom_call.1} parent=11 // pred_check_branch
          %338 = sbr.rel (%p336) target = $region40
        $region39: #{tpu_custom_call.1} parent=11 // pred_region
          %s340 = ssub.s32 4096, 4096
          %341 = vsyncadd [#allocation15], %s340
          %s342 = sshll.u32 [#allocation14], 4
          %s343 = int_to_ptr.vmem [resolvable:$true] %s342
          %348 = dma.hbm_to_vmem [thread:$0]  %s7, 4096, %s343, [#allocation15], 256, 256, 16
        $region40: #{tpu_custom_call.1} parent=11 // pred_fallthru
          _
        // Predicated region
        $region41: #{tpu_custom_call.1} parent=11 // pred_check
          %p349 = pneg %p219
        $region42: #{tpu_custom_call.1} parent=11 // pred_check_branch
          %351 = sbr.rel (%p349) target = $region44
        $region43: #{tpu_custom_call.1} parent=11 // pred_region
          %s353 = ssub.s32 4096, 4096
          %354 = vsyncadd [#allocation15], %s353
          %s355 = sshll.u32 [#allocation16], 4
          %s356 = int_to_ptr.vmem [resolvable:$true] %s355
          %361 = dma.hbm_to_vmem [thread:$0]  %s8, 4096, %s356, [#allocation15], 64, 64, 4
        $region44: #{tpu_custom_call.1} parent=11 // pred_fallthru
          _
      $region12: #{tpu_custom_call.1} parent=5 // pred_fallthru
        _
      %p362 = scmp.lt.s32.totalorder %s25, 2
      // Predicated region
      $region45: #{tpu_custom_call.1} parent=5 // pred_check
        %p363 = pneg %p362
      $region46: #{tpu_custom_call.1} parent=5 // pred_check_branch
        %365 = sbr.rel (%p363) target = $region48
      $region47: #{tpu_custom_call.1} parent=5 // pred_region
        // Predicated region
        $region49: #{tpu_custom_call.1} parent=47 // pred_check
          %p366 = pneg %p45
        $region50: #{tpu_custom_call.1} parent=47 // pred_check_branch
          %368 = sbr.rel (%p366) target = $region52
        $region51: #{tpu_custom_call.1} parent=47 // pred_region
          %s369 = sand.u32 %s35, 1
          %s370 = scalar_lea.sflag [#allocation3], %s369
          %s371 = sand.u32 %s35, 1
          %s372 = smul.addr %s371, 16
          %s373 = scalar_lea.vmem [#allocation2], %s372
          %s375 = ssub.s32 256, 256
          %376 = vsyncadd %s370, %s375
          %s377 = smul.addr %s25, 2
          %s378 = smul.addr %s377, 128
          %s379 = scalar_lea.hbm %s0, %s378
          %s380 = sshll.u32 %s373, 4
          %s381 = int_to_ptr.vmem [resolvable:$true] %s380
          %386 = dma.hbm_to_vmem [thread:$0]  %s379, 256, %s381, %s370, 128, 128, 8
        $region52: #{tpu_custom_call.1} parent=47 // pred_fallthru
          _
      $region48: #{tpu_custom_call.1} parent=5 // pred_fallthru
        _
      %p387 = scmp.le.s32.totalorder 1, %s25
      %p388 = scmp.lt.s32.totalorder %s25, 3
      %p389 = pnand %p387, %p388
      %p390 = pneg %p389
      // Predicated region
      $region53: #{tpu_custom_call.1} parent=5 // pred_check
        _
      $region54: #{tpu_custom_call.1} parent=5 // pred_check_branch
        %392 = sbr.rel (%p389) target = $region56
      $region55: #{tpu_custom_call.1} parent=5 // pred_region
        %s393 = ssub.s32 %s25, 1
        %s394 = sand.u32 %s38, 1
        %s395 = scalar_lea.sflag [#allocation3], %s394
        %s396 = sand.u32 %s38, 1
        %s397 = smul.addr %s396, 16
        %s398 = scalar_lea.vmem [#allocation2], %s397
        // Predicated region
        $region57: #{tpu_custom_call.1} parent=55 // pred_check
          %p399 = pneg %p51
        $region58: #{tpu_custom_call.1} parent=55 // pred_check_branch
          %401 = sbr.rel (%p399) target = $region60
        $region59: #{tpu_custom_call.1} parent=55 // pred_region
          %402 = dma.done %s395, 256
        $region60: #{tpu_custom_call.1} parent=55 // pred_fallthru
          _
        // Predicated region
        $region61: #{tpu_custom_call.1} parent=55 // pred_check
          %p403 = pneg %p72
        $region62: #{tpu_custom_call.1} parent=55 // pred_check_branch
          %405 = sbr.rel (%p403) target = $region64
        $region63: #{tpu_custom_call.1} parent=55 // pred_region
          %406 = dma.done [#allocation6], 128
        $region64: #{tpu_custom_call.1} parent=55 // pred_fallthru
          _
        // Predicated region
        $region65: #{tpu_custom_call.1} parent=55 // pred_check
          %p407 = pneg %p93
        $region66: #{tpu_custom_call.1} parent=55 // pred_check_branch
          %409 = sbr.rel (%p407) target = $region68
        $region67: #{tpu_custom_call.1} parent=55 // pred_region
          %410 = dma.done [#allocation6], 128
        $region68: #{tpu_custom_call.1} parent=55 // pred_fallthru
          _
        // Predicated region
        $region69: #{tpu_custom_call.1} parent=55 // pred_check
          %p411 = pneg %p114
        $region70: #{tpu_custom_call.1} parent=55 // pred_check_branch
          %413 = sbr.rel (%p411) target = $region72
        $region71: #{tpu_custom_call.1} parent=55 // pred_region
          %414 = dma.done [#allocation9], 512
        $region72: #{tpu_custom_call.1} parent=55 // pred_fallthru
          _
        // Predicated region
        $region73: #{tpu_custom_call.1} parent=55 // pred_check
          %p415 = pneg %p135
        $region74: #{tpu_custom_call.1} parent=55 // pred_check_branch
          %417 = sbr.rel (%p415) target = $region76
        $region75: #{tpu_custom_call.1} parent=55 // pred_region
          %418 = dma.done [#allocation9], 2048
        $region76: #{tpu_custom_call.1} parent=55 // pred_fallthru
          _
        // Predicated region
        $region77: #{tpu_custom_call.1} parent=55 // pred_check
          %p419 = pneg %p156
        $region78: #{tpu_custom_call.1} parent=55 // pred_check_branch
          %421 = sbr.rel (%p419) target = $region80
        $region79: #{tpu_custom_call.1} parent=55 // pred_region
          %422 = dma.done [#allocation12], 512
        $region80: #{tpu_custom_call.1} parent=55 // pred_fallthru
          _
        // Predicated region
        $region81: #{tpu_custom_call.1} parent=55 // pred_check
          %p423 = pneg %p177
        $region82: #{tpu_custom_call.1} parent=55 // pred_check_branch
          %425 = sbr.rel (%p423) target = $region84
        $region83: #{tpu_custom_call.1} parent=55 // pred_region
          %426 = dma.done [#allocation12], 4096
        $region84: #{tpu_custom_call.1} parent=55 // pred_fallthru
          _
        // Predicated region
        $region85: #{tpu_custom_call.1} parent=55 // pred_check
          %p427 = pneg %p198
        $region86: #{tpu_custom_call.1} parent=55 // pred_check_branch
          %429 = sbr.rel (%p427) target = $region88
        $region87: #{tpu_custom_call.1} parent=55 // pred_region
          %430 = dma.done [#allocation15], 4096
        $region88: #{tpu_custom_call.1} parent=55 // pred_fallthru
          _
        // Predicated region
        $region89: #{tpu_custom_call.1} parent=55 // pred_check
          %p431 = pneg %p219
        $region90: #{tpu_custom_call.1} parent=55 // pred_check_branch
          %433 = sbr.rel (%p431) target = $region92
        $region91: #{tpu_custom_call.1} parent=55 // pred_region
          %434 = dma.done [#allocation15], 4096
        $region92: #{tpu_custom_call.1} parent=55 // pred_fallthru
          _
        %s435 = sand.u32 %s38, 1
        %s436 = scalar_lea.sflag [#allocation3], %s435
        %s437 = sand.u32 %s38, 1
        %s438 = smul.addr %s437, 16
        %s439 = scalar_lea.vmem [#allocation2], %s438
        %p440 = pneg %p51
        %p441 = pneg %p48
        %p442 = pneg %p72
        %p443 = pneg %p69
        %p444 = pneg %p93
        %p445 = pneg %p90
        %p446 = pneg %p114
        %p447 = pneg %p111
        %p448 = pneg %p135
        %p449 = pneg %p132
        %p450 = pneg %p156
        %p451 = pneg %p153
        %p452 = pneg %p177
        %p453 = pneg %p174
        %p454 = pneg %p198
        %p455 = pneg %p195
        %p456 = pneg %p219
        %p457 = pneg %p216
        %p458 = pneg %p245
        %p459 = pneg %p242
        %s460 = sand.u32 %s232, 1
        %s461 = scalar_lea.sflag [#allocation4], %s460
        %s462 = sand.u32 %s232, 1
        %s463 = smul.addr %s462, 16
        %s464 = scalar_lea.vmem [#allocation17], %s463
        %v466 = vld [vmem:[#allocation11] ss:$0 sm:$0xff]
        %v467 = vld [vmem:[#allocation11 + $0x1] ss:$0 sm:$0xff]
        %v468 = vld [vmem:[#allocation11 + $0x2] ss:$0 sm:$0xff]
        %v469 = vld [vmem:[#allocation11 + $0x3] ss:$0 sm:$0xff]
        %s470 = scalar_lea.vmem [#allocation11], 4
        %v471 = vld [vmem:[%s470] ss:$8 sm:$0xf]
        %v472 = vld [vmem:[%s398] sm:$0xff]
        %v473 = vld [vmem:[%s398 + $0x8] sm:$0xff]
        %v474 = vmul.f32 %v472, %v472
        %v475 = vmul.f32 %v473, %v473
        %v476 = vld [vmem:[#allocation10] sm:$0xff]
        %v477 = vld [vmem:[#allocation10 + $0x8] sm:$0xff]
        %v478 = vld [vmem:[#allocation10 + $0x10] sm:$0xff]
        %v479 = vld [vmem:[#allocation10 + $0x18] sm:$0xff]
        %v480 = vld [vmem:[#allocation10 + $0x20] sm:$0xff]
        %v481 = vld [vmem:[#allocation10 + $0x28] sm:$0xff]
        %v482 = vld [vmem:[#allocation10 + $0x30] sm:$0xff]
        %v483 = vld [vmem:[#allocation10 + $0x38] sm:$0xff]
        %v484 = vld [vmem:[#allocation10 + $0x40] sm:$0xff]
        %v485 = vld [vmem:[#allocation10 + $0x48] sm:$0xff]
        %v486 = vld [vmem:[#allocation10 + $0x50] sm:$0xff]
        %v487 = vld [vmem:[#allocation10 + $0x58] sm:$0xff]
        %v488 = vld [vmem:[#allocation10 + $0x60] sm:$0xff]
        %v489 = vld [vmem:[#allocation10 + $0x68] sm:$0xff]
        %v490 = vld [vmem:[#allocation10 + $0x70] sm:$0xff]
        %v491 = vld [vmem:[#allocation10 + $0x78] sm:$0xff]
        %492 = vmatprep.subr.mxu0 0.0
        %493 = vmatpush1.msra.mxu0 %v476
        %494 = vmatprep.subr.mxu0 0.0
        %495 = vmatpush1.msra.mxu0 %v477
        %496 = vmatprep.subr.mxu0 0.0
        %497 = vmatpush1.msra.mxu0 %v478
        %498 = vmatprep.subr.mxu0 0.0
        %499 = vmatpush1.msra.mxu0 %v479
        %500 = vmatprep.subr.mxu0 0.0
        %501 = vmatpush1.msra.mxu0 %v480
        %502 = vmatprep.subr.mxu0 0.0
        %503 = vmatpush1.msra.mxu0 %v481
        %504 = vmatprep.subr.mxu0 0.0
        %505 = vmatpush1.msra.mxu0 %v482
        %506 = vmatprep.subr.mxu0 0.0
        %507 = vmatpush1.msra.mxu0 %v483
        %508 = vmatprep.subr.mxu0 0.0
        %509 = vmatpush1.msra.mxu0 %v484
        %510 = vmatprep.subr.mxu0 0.0
        %511 = vmatpush1.msra.mxu0 %v485
        %512 = vmatprep.subr.mxu0 0.0
        %513 = vmatpush1.msra.mxu0 %v486
        %514 = vmatprep.subr.mxu0 0.0
        %515 = vmatpush1.msra.mxu0 %v487
        %516 = vmatprep.subr.mxu0 0.0
        %517 = vmatpush1.msra.mxu0 %v488
        %518 = vmatprep.subr.mxu0 0.0
        %519 = vmatpush1.msra.mxu0 %v489
        %520 = vmatprep.subr.mxu0 0.0
        %521 = vmatpush1.msra.mxu0 %v490
        %522 = vmatprep.subr.mxu0 0.0
        %523 = vmatpush1.msra.mxu0 %v491
        %524 = vmatprep.subr.mxu0 0.0
        %525 = vmatpush1.msra.mxu0 0.0
        %526 = vmatprep.subr.mxu0 0.0
        %527 = vmatpush1.msra.mxu0 0.0
        %528 = vmatprep.subr.mxu0 0.0
        %529 = vmatpush1.msra.mxu0 0.0
        %530 = vmatprep.subr.mxu0 0.0
        %531 = vmatpush1.msra.mxu0 0.0
        %532 = vmatprep.subr.mxu0 0.0
        %533 = vmatpush1.msra.mxu0 0.0
        %534 = vmatprep.subr.mxu0 0.0
        %535 = vmatpush1.msra.mxu0 0.0
        %536 = vmatprep.subr.mxu0 0.0
        %537 = vmatpush1.msra.mxu0 0.0
        %538 = vmatprep.subr.mxu0 0.0
        %539 = vmatpush1.msra.mxu0 0.0
        %540 = vmatprep.subr.mxu0 0.0
        %541 = vmatpush1.msra.mxu0 0.0
        %542 = vmatprep.subr.mxu0 0.0
        %543 = vmatpush1.msra.mxu0 0.0
        %544 = vmatprep.subr.mxu0 0.0
        %545 = vmatpush1.msra.mxu0 0.0
        %546 = vmatprep.subr.mxu0 0.0
        %547 = vmatpush1.msra.mxu0 0.0
        %548 = vmatprep.subr.mxu0 0.0
        %549 = vmatpush1.msra.mxu0 0.0
        %550 = vmatprep.subr.mxu0 0.0
        %551 = vmatpush1.msra.mxu0 0.0
        %552 = vmatprep.subr.mxu0 0.0
        %553 = vmatpush1.msra.mxu0 0.0
        %554 = vmatprep.subr.mxu0 0.0
        %555 = vmatpush1.msra.mxu0 0.0
        %556 = vmatprep.mubr.f32.mxu0 0.0
        %557 = vmatmul.mubr.f32.gmra.mrb[0].mxu0 %v472
        %v558 = vpop.f32.mrb[0].mxu0
        %v559 = vadd.f32 0.0, %v558
        %v560 = vpop.f32.mrb[0].mxu0
        %561 = vmatprep.mubr.f32.mxu0 0.0
        %562 = vmatmul.mubr.f32.gmra.mrb[0].mxu0 %v473
        %v563 = vpop.f32.mrb[0].mxu0
        %v564 = vadd.f32 0.0, %v563
        %v565 = vpop.f32.mrb[0].mxu0
        %566 = vmatprep.mubr.f32.mxu0 0.0
        %567 = vmatmul.mubr.f32.gmra.mrb[0].mxu0 %v474
        %v568 = vpop.f32.mrb[0].mxu0
        %v569 = vadd.f32 0.0, %v568
        %v570 = vpop.f32.mrb[0].mxu0
        %571 = vmatprep.mubr.f32.mxu0 0.0
        %572 = vmatmul.mubr.f32.gmra.mrb[0].mxu0 %v475
        %v573 = vpop.f32.mrb[0].mxu0
        %v574 = vadd.f32 0.0, %v573
        %v575 = vpop.f32.mrb[0].mxu0
        %576 = vdwg.mxu0
        %v577 = vmul.f32 %v559, %v559
        %v578 = vmul.f32 %v564, %v564
        %v579 = vsub.f32 %v569, %v577
        %v580 = vsub.f32 %v574, %v578
        %v581 = vsub.f32 %v472, %v559
        %v582 = vsub.f32 %v473, %v564
        %v583 = vadd.f32 %v579, 1e-05
        %v584 = vadd.f32 %v580, 1e-05
        %v585 = vrsqrt.pop %v583
        %v586 = vrsqrt.pop %v584
        %v587 = vmul.f32 %v581, %v585
        %v588 = vmul.f32 %v582, %v586
        %v589 = vmul.f32 %v587, %v466
        %v590 = vmul.f32 %v588, %v466
        %v591 = vadd.f32 %v589, %v467
        %v592 = vadd.f32 %v590, %v467
        %v593 = vld [vmem:[#allocation5] sm:$0xf]
        %v594 = vld [vmem:[#allocation5 + $0x4] sm:$0xf]
        %v595 = vpack.c.bf16 %v592, %v591
        %v598 = vunpack.c.l.b16 %v593
        %v599 = vunpack.c.l.b16 %v594
        %v600 = vpack.c.b16 %v599, %v598
        %vm601 = vcmask 130048
        %v603 = vsel %vm601, %v600, 0
        %605 = vmatprep.subr.bf16.mxu0 0
        %606 = vmatpush1.bf16.msra.mxu0 %v595
        %607 = vmatprep.subr.bf16.mxu0 0
        %608 = vmatpush1.bf16.msra.mxu0 0
        %609 = vmatprep.subr.bf16.mxu0 0
        %610 = vmatpush1.bf16.msra.mxu0 0
        %611 = vmatprep.subr.bf16.mxu0 0
        %612 = vmatpush1.bf16.msra.mxu0 0
        %613 = vmatprep.subr.bf16.mxu0 0
        %614 = vmatpush1.bf16.msra.mxu0 0
        %615 = vmatprep.subr.bf16.mxu0 0
        %616 = vmatpush1.bf16.msra.mxu0 0
        %617 = vmatprep.subr.bf16.mxu0 0
        %618 = vmatpush1.bf16.msra.mxu0 0
        %619 = vmatprep.subr.bf16.mxu0 0
        %620 = vmatpush1.bf16.msra.mxu0 0
        %621 = vmatprep.subr.bf16.mxu0 0
        %622 = vmatpush1.bf16.msra.mxu0 0
        %623 = vmatprep.subr.bf16.mxu0 0
        %624 = vmatpush1.bf16.msra.mxu0 0
        %625 = vmatprep.subr.bf16.mxu0 0
        %626 = vmatpush1.bf16.msra.mxu0 0
        %627 = vmatprep.subr.bf16.mxu0 0
        %628 = vmatpush1.bf16.msra.mxu0 0
        %629 = vmatprep.subr.bf16.mxu0 0
        %630 = vmatpush1.bf16.msra.mxu0 0
        %631 = vmatprep.subr.bf16.mxu0 0
        %632 = vmatpush1.bf16.msra.mxu0 0
        %633 = vmatprep.subr.bf16.mxu0 0
        %634 = vmatpush1.bf16.msra.mxu0 0
        %635 = vmatprep.subr.bf16.mxu0 0
        %636 = vmatpush1.bf16.msra.mxu0 0
        %637 = vmatprep.mubr.bf16.mxu0 0
        %638 = vmatmul.mubr.bf16.gmra.mrb[0].mxu0 %v603
        %v639 = vpop.f32.mrb[0].mxu0
        %v640 = vadd.f32 0.0, %v639
        %v641 = vpop.f32.mrb[0].mxu0
        %v642 = vpop.f32.mrb[0].mxu0
        %v643 = vadd.f32 0.0, %v642
        %v644 = vpop.f32.mrb[0].mxu0
        %645 = vdwg.mxu0
        %v646 = vpack.c.bf16 %v643, %v640
        %v647 = vld [vmem:[#allocation8] sm:$0xf]
        %v648 = vld [vmem:[#allocation8 + $0x10] sm:$0xf]
        %v651 = vunpack.c.l.b16 %v647
        %v652 = vunpack.c.l.b16 %v648
        %v653 = vpack.c.b16 %v652, %v651
        %v655 = vmul.bf16 %v646, %v653
        %v656 = vld [vmem:[#allocation8 + $0x4] sm:$0xf]
        %v657 = vld [vmem:[#allocation8 + $0x14] sm:$0xf]
        %v660 = vunpack.c.l.b16 %v656
        %v661 = vunpack.c.l.b16 %v657
        %v662 = vpack.c.b16 %v661, %v660
        %v664 = vmul.bf16 %v646, %v662
        %v665 = vld [vmem:[#allocation8 + $0x8] sm:$0xf]
        %v666 = vld [vmem:[#allocation8 + $0x18] sm:$0xf]
        %v669 = vunpack.c.l.b16 %v665
        %v670 = vunpack.c.l.b16 %v666
        %v671 = vpack.c.b16 %v670, %v669
        %v673 = vmul.bf16 %v646, %v671
        %v674 = vld [vmem:[#allocation8 + $0xc] sm:$0xf]
        %v675 = vld [vmem:[#allocation8 + $0x1c] sm:$0xf]
        %v678 = vunpack.c.l.b16 %v674
        %v679 = vunpack.c.l.b16 %v675
        %v680 = vpack.c.b16 %v679, %v678
        %v682 = vmul.bf16 %v646, %v680
        %v683 = vld [vmem:[#allocation13] sm:$0xf]
        %v684 = vld [vmem:[#allocation13 + $0x4] sm:$0xf]
        %v685 = vld [vmem:[#allocation13 + $0x8] sm:$0xf]
        %v686 = vld [vmem:[#allocation13 + $0xc] sm:$0xf]
        %v687 = vld [vmem:[#allocation13 + $0x10] sm:$0xf]
        %v688 = vld [vmem:[#allocation13 + $0x14] sm:$0xf]
        %v689 = vld [vmem:[#allocation13 + $0x18] sm:$0xf]
        %v690 = vld [vmem:[#allocation13 + $0x1c] sm:$0xf]
        %v691 = vld [vmem:[#allocation13 + $0x20] sm:$0xf]
        %v692 = vld [vmem:[#allocation13 + $0x24] sm:$0xf]
        %v693 = vld [vmem:[#allocation13 + $0x28] sm:$0xf]
        %v694 = vld [vmem:[#allocation13 + $0x2c] sm:$0xf]
        %v695 = vld [vmem:[#allocation13 + $0x30] sm:$0xf]
        %v696 = vld [vmem:[#allocation13 + $0x34] sm:$0xf]
        %v697 = vld [vmem:[#allocation13 + $0x38] sm:$0xf]
        %v698 = vld [vmem:[#allocation13 + $0x3c] sm:$0xf]
        %v699 = vld [vmem:[#allocation13 + $0x40] sm:$0xf]
        %v700 = vld [vmem:[#allocation13 + $0x44] sm:$0xf]
        %v701 = vld [vmem:[#allocation13 + $0x48] sm:$0xf]
        %v702 = vld [vmem:[#allocation13 + $0x4c] sm:$0xf]
        %v703 = vld [vmem:[#allocation13 + $0x50] sm:$0xf]
        %v704 = vld [vmem:[#allocation13 + $0x54] sm:$0xf]
        %v705 = vld [vmem:[#allocation13 + $0x58] sm:$0xf]
        %v706 = vld [vmem:[#allocation13 + $0x5c] sm:$0xf]
        %v707 = vld [vmem:[#allocation13 + $0x60] sm:$0xf]
        %v708 = vld [vmem:[#allocation13 + $0x64] sm:$0xf]
        %v709 = vld [vmem:[#allocation13 + $0x68] sm:$0xf]
        %v710 = vld [vmem:[#allocation13 + $0x6c] sm:$0xf]
        %v711 = vld [vmem:[#allocation13 + $0x70] sm:$0xf]
        %v712 = vld [vmem:[#allocation13 + $0x74] sm:$0xf]
        %v713 = vld [vmem:[#allocation13 + $0x78] sm:$0xf]
        %v714 = vld [vmem:[#allocation13 + $0x7c] sm:$0xf]
        %v715 = vld [vmem:[#allocation13 + $0x80] sm:$0xf]
        %v716 = vld [vmem:[#allocation13 + $0x84] sm:$0xf]
        %v717 = vld [vmem:[#allocation13 + $0x88] sm:$0xf]
        %v718 = vld [vmem:[#allocation13 + $0x8c] sm:$0xf]
        %v719 = vld [vmem:[#allocation13 + $0x90] sm:$0xf]
        %v720 = vld [vmem:[#allocation13 + $0x94] sm:$0xf]
        %v721 = vld [vmem:[#allocation13 + $0x98] sm:$0xf]
        %v722 = vld [vmem:[#allocation13 + $0x9c] sm:$0xf]
        %v723 = vld [vmem:[#allocation13 + $0xa0] sm:$0xf]
        %v724 = vld [vmem:[#allocation13 + $0xa4] sm:$0xf]
        %v725 = vld [vmem:[#allocation13 + $0xa8] sm:$0xf]
        %v726 = vld [vmem:[#allocation13 + $0xac] sm:$0xf]
        %v727 = vld [vmem:[#allocation13 + $0xb0] sm:$0xf]
        %v728 = vld [vmem:[#allocation13 + $0xb4] sm:$0xf]
        %v729 = vld [vmem:[#allocation13 + $0xb8] sm:$0xf]
        %v730 = vld [vmem:[#allocation13 + $0xbc] sm:$0xf]
        %v731 = vld [vmem:[#allocation13 + $0xc0] sm:$0xf]
        %v732 = vld [vmem:[#allocation13 + $0xc4] sm:$0xf]
        %v733 = vld [vmem:[#allocation13 + $0xc8] sm:$0xf]
        %v734 = vld [vmem:[#allocation13 + $0xcc] sm:$0xf]
        %v735 = vld [vmem:[#allocation13 + $0xd0] sm:$0xf]
        %v736 = vld [vmem:[#allocation13 + $0xd4] sm:$0xf]
        %v737 = vld [vmem:[#allocation13 + $0xd8] sm:$0xf]
        %v738 = vld [vmem:[#allocation13 + $0xdc] sm:$0xf]
        %v739 = vld [vmem:[#allocation13 + $0xe0] sm:$0xf]
        %v740 = vld [vmem:[#allocation13 + $0xe4] sm:$0xf]
        %v741 = vld [vmem:[#allocation13 + $0xe8] sm:$0xf]
        %v742 = vld [vmem:[#allocation13 + $0xec] sm:$0xf]
        %v743 = vld [vmem:[#allocation13 + $0xf0] sm:$0xf]
        %v744 = vld [vmem:[#allocation13 + $0xf4] sm:$0xf]
        %v745 = vld [vmem:[#allocation13 + $0xf8] sm:$0xf]
        %v746 = vld [vmem:[#allocation13 + $0xfc] sm:$0xf]
        %v811 = vunpack.c.l.b16 %v683
        %v812 = vunpack.c.l.b16 %v684
        %v813 = vunpack.c.l.b16 %v685
        %v814 = vunpack.c.l.b16 %v686
        %v815 = vunpack.c.l.b16 %v687
        %v816 = vunpack.c.l.b16 %v688
        %v817 = vunpack.c.l.b16 %v689
        %v818 = vunpack.c.l.b16 %v690
        %v819 = vunpack.c.l.b16 %v691
        %v820 = vunpack.c.l.b16 %v692
        %v821 = vunpack.c.l.b16 %v693
        %v822 = vunpack.c.l.b16 %v694
        %v823 = vunpack.c.l.b16 %v695
        %v824 = vunpack.c.l.b16 %v696
        %v825 = vunpack.c.l.b16 %v697
        %v826 = vunpack.c.l.b16 %v698
        %v827 = vunpack.c.l.b16 %v699
        %v828 = vunpack.c.l.b16 %v700
        %v829 = vunpack.c.l.b16 %v701
        %v830 = vunpack.c.l.b16 %v702
        %v831 = vunpack.c.l.b16 %v703
        %v832 = vunpack.c.l.b16 %v704
        %v833 = vunpack.c.l.b16 %v705
        %v834 = vunpack.c.l.b16 %v706
        %v835 = vunpack.c.l.b16 %v707
        %v836 = vunpack.c.l.b16 %v708
        %v837 = vunpack.c.l.b16 %v709
        %v838 = vunpack.c.l.b16 %v710
        %v839 = vunpack.c.l.b16 %v711
        %v840 = vunpack.c.l.b16 %v712
        %v841 = vunpack.c.l.b16 %v713
        %v842 = vunpack.c.l.b16 %v714
        %v843 = vunpack.c.l.b16 %v715
        %v844 = vunpack.c.l.b16 %v716
        %v845 = vunpack.c.l.b16 %v717
        %v846 = vunpack.c.l.b16 %v718
        %v847 = vunpack.c.l.b16 %v719
        %v848 = vunpack.c.l.b16 %v720
        %v849 = vunpack.c.l.b16 %v721
        %v850 = vunpack.c.l.b16 %v722
        %v851 = vunpack.c.l.b16 %v723
        %v852 = vunpack.c.l.b16 %v724
        %v853 = vunpack.c.l.b16 %v725
        %v854 = vunpack.c.l.b16 %v726
        %v855 = vunpack.c.l.b16 %v727
        %v856 = vunpack.c.l.b16 %v728
        %v857 = vunpack.c.l.b16 %v729
        %v858 = vunpack.c.l.b16 %v730
        %v859 = vunpack.c.l.b16 %v731
        %v860 = vunpack.c.l.b16 %v732
        %v861 = vunpack.c.l.b16 %v733
        %v862 = vunpack.c.l.b16 %v734
        %v863 = vunpack.c.l.b16 %v735
        %v864 = vunpack.c.l.b16 %v736
        %v865 = vunpack.c.l.b16 %v737
        %v866 = vunpack.c.l.b16 %v738
        %v867 = vunpack.c.l.b16 %v739
        %v868 = vunpack.c.l.b16 %v740
        %v869 = vunpack.c.l.b16 %v741
        %v870 = vunpack.c.l.b16 %v742
        %v871 = vunpack.c.l.b16 %v743
        %v872 = vunpack.c.l.b16 %v744
        %v873 = vunpack.c.l.b16 %v745
        %v874 = vunpack.c.l.b16 %v746
        %v875 = vpack.c.b16 %v812, %v811
        %v876 = vpack.c.b16 %v814, %v813
        %v877 = vpack.c.b16 %v816, %v815
        %v878 = vpack.c.b16 %v818, %v817
        %v879 = vpack.c.b16 %v820, %v819
        %v880 = vpack.c.b16 %v822, %v821
        %v881 = vpack.c.b16 %v824, %v823
        %v882 = vpack.c.b16 %v826, %v825
        %v883 = vpack.c.b16 %v828, %v827
        %v884 = vpack.c.b16 %v830, %v829
        %v885 = vpack.c.b16 %v832, %v831
        %v886 = vpack.c.b16 %v834, %v833
        %v887 = vpack.c.b16 %v836, %v835
        %v888 = vpack.c.b16 %v838, %v837
        %v889 = vpack.c.b16 %v840, %v839
        %v890 = vpack.c.b16 %v842, %v841
        %v891 = vpack.c.b16 %v844, %v843
        %v892 = vpack.c.b16 %v846, %v845
        %v893 = vpack.c.b16 %v848, %v847
        %v894 = vpack.c.b16 %v850, %v849
        %v895 = vpack.c.b16 %v852, %v851
        %v896 = vpack.c.b16 %v854, %v853
        %v897 = vpack.c.b16 %v856, %v855
        %v898 = vpack.c.b16 %v858, %v857
        %v899 = vpack.c.b16 %v860, %v859
        %v900 = vpack.c.b16 %v862, %v861
        %v901 = vpack.c.b16 %v864, %v863
        %v902 = vpack.c.b16 %v866, %v865
        %v903 = vpack.c.b16 %v868, %v867
        %v904 = vpack.c.b16 %v870, %v869
        %v905 = vpack.c.b16 %v872, %v871
        %v906 = vpack.c.b16 %v874, %v873
        %939 = vmatprep.subr.bf16.mxu0 0
        %940 = vmatpush1.bf16.msra.mxu0 %v875
        %941 = vmatprep.subr.bf16.mxu0 0
        %942 = vmatpush1.bf16.msra.mxu0 %v876
        %943 = vmatprep.subr.bf16.mxu0 0
        %944 = vmatpush1.bf16.msra.mxu0 %v877
        %945 = vmatprep.subr.bf16.mxu0 0
        %946 = vmatpush1.bf16.msra.mxu0 %v878
        %947 = vmatprep.subr.bf16.mxu0 0
        %948 = vmatpush1.bf16.msra.mxu0 %v879
        %949 = vmatprep.subr.bf16.mxu0 0
        %950 = vmatpush1.bf16.msra.mxu0 %v880
        %951 = vmatprep.subr.bf16.mxu0 0
        %952 = vmatpush1.bf16.msra.mxu0 %v881
        %953 = vmatprep.subr.bf16.mxu0 0
        %954 = vmatpush1.bf16.msra.mxu0 %v882
        %955 = vmatprep.subr.bf16.mxu0 0
        %956 = vmatpush1.bf16.msra.mxu0 %v883
        %957 = vmatprep.subr.bf16.mxu0 0
        %958 = vmatpush1.bf16.msra.mxu0 %v884
        %959 = vmatprep.subr.bf16.mxu0 0
        %960 = vmatpush1.bf16.msra.mxu0 %v885
        %961 = vmatprep.subr.bf16.mxu0 0
        %962 = vmatpush1.bf16.msra.mxu0 %v886
        %963 = vmatprep.subr.bf16.mxu0 0
        %964 = vmatpush1.bf16.msra.mxu0 %v887
        %965 = vmatprep.subr.bf16.mxu0 0
        %966 = vmatpush1.bf16.msra.mxu0 %v888
        %967 = vmatprep.subr.bf16.mxu0 0
        %968 = vmatpush1.bf16.msra.mxu0 %v889
        %969 = vmatprep.subr.bf16.mxu0 0
        %970 = vmatpush1.bf16.msra.mxu0 %v890
        %971 = vmatprep.mubr.bf16.mxu0 %v664
        %972 = vmatmul.mubr.bf16.gmra.mrb[0].mxu0 %v655
        %v973 = vpop.f32.mrb[0].mxu0
        %v974 = vadd.f32 %v468, %v973
        %v975 = vpop.f32.mrb[0].mxu0
        %v976 = vpop.f32.mrb[0].mxu0
        %v977 = vadd.f32 %v468, %v976
        %v978 = vpop.f32.mrb[0].mxu0
        %979 = vdwg.mxu0
        %980 = vmatprep.subr.bf16.mxu0 0
        %981 = vmatpush1.bf16.msra.mxu0 %v891
        %982 = vmatprep.subr.bf16.mxu0 0
        %983 = vmatpush1.bf16.msra.mxu0 %v892
        %984 = vmatprep.subr.bf16.mxu0 0
        %985 = vmatpush1.bf16.msra.mxu0 %v893
        %986 = vmatprep.subr.bf16.mxu0 0
        %987 = vmatpush1.bf16.msra.mxu0 %v894
        %988 = vmatprep.subr.bf16.mxu0 0
        %989 = vmatpush1.bf16.msra.mxu0 %v895
        %990 = vmatprep.subr.bf16.mxu0 0
        %991 = vmatpush1.bf16.msra.mxu0 %v896
        %992 = vmatprep.subr.bf16.mxu0 0
        %993 = vmatpush1.bf16.msra.mxu0 %v897
        %994 = vmatprep.subr.bf16.mxu0 0
        %995 = vmatpush1.bf16.msra.mxu0 %v898
        %996 = vmatprep.subr.bf16.mxu0 0
        %997 = vmatpush1.bf16.msra.mxu0 %v899
        %998 = vmatprep.subr.bf16.mxu0 0
        %999 = vmatpush1.bf16.msra.mxu0 %v900
        %1000 = vmatprep.subr.bf16.mxu0 0
        %1001 = vmatpush1.bf16.msra.mxu0 %v901
        %1002 = vmatprep.subr.bf16.mxu0 0
        %1003 = vmatpush1.bf16.msra.mxu0 %v902
        %1004 = vmatprep.subr.bf16.mxu0 0
        %1005 = vmatpush1.bf16.msra.mxu0 %v903
        %1006 = vmatprep.subr.bf16.mxu0 0
        %1007 = vmatpush1.bf16.msra.mxu0 %v904
        %1008 = vmatprep.subr.bf16.mxu0 0
        %1009 = vmatpush1.bf16.msra.mxu0 %v905
        %1010 = vmatprep.subr.bf16.mxu0 0
        %1011 = vmatpush1.bf16.msra.mxu0 %v906
        %1012 = vmatprep.mubr.bf16.mxu0 %v682
        %1013 = vmatmul.mubr.bf16.gmra.mrb[0].mxu0 %v673
        %v1014 = vpop.f32.mrb[0].mxu0
        %v1015 = vadd.f32 %v974, %v1014
        %v1016 = vpop.f32.mrb[0].mxu0
        %v1017 = vpop.f32.mrb[0].mxu0
        %v1018 = vadd.f32 %v977, %v1017
        %v1019 = vpop.f32.mrb[0].mxu0
        %1020 = vdwg.mxu0
        %v1021 = vld [vmem:[#allocation7] sm:$0xf]
        %v1022 = vld [vmem:[#allocation7 + $0x4] sm:$0xf]
        %v1023 = vpack.c.bf16 %v1018, %v1015
        %v1026 = vunpack.c.l.b16 %v1021
        %v1027 = vunpack.c.l.b16 %v1022
        %v1028 = vpack.c.b16 %v1027, %v1026
        %v1030 = vsel %vm601, %v1028, 0
        %1032 = vmatprep.subr.bf16.mxu0 0
        %1033 = vmatpush1.bf16.msra.mxu0 %v1023
        %1034 = vmatprep.subr.bf16.mxu0 0
        %1035 = vmatpush1.bf16.msra.mxu0 0
        %1036 = vmatprep.subr.bf16.mxu0 0
        %1037 = vmatpush1.bf16.msra.mxu0 0
        %1038 = vmatprep.subr.bf16.mxu0 0
        %1039 = vmatpush1.bf16.msra.mxu0 0
        %1040 = vmatprep.subr.bf16.mxu0 0
        %1041 = vmatpush1.bf16.msra.mxu0 0
        %1042 = vmatprep.subr.bf16.mxu0 0
        %1043 = vmatpush1.bf16.msra.mxu0 0
        %1044 = vmatprep.subr.bf16.mxu0 0
        %1045 = vmatpush1.bf16.msra.mxu0 0
        %1046 = vmatprep.subr.bf16.mxu0 0
        %1047 = vmatpush1.bf16.msra.mxu0 0
        %1048 = vmatprep.subr.bf16.mxu0 0
        %1049 = vmatpush1.bf16.msra.mxu0 0
        %1050 = vmatprep.subr.bf16.mxu0 0
        %1051 = vmatpush1.bf16.msra.mxu0 0
        %1052 = vmatprep.subr.bf16.mxu0 0
        %1053 = vmatpush1.bf16.msra.mxu0 0
        %1054 = vmatprep.subr.bf16.mxu0 0
        %1055 = vmatpush1.bf16.msra.mxu0 0
        %1056 = vmatprep.subr.bf16.mxu0 0
        %1057 = vmatpush1.bf16.msra.mxu0 0
        %1058 = vmatprep.subr.bf16.mxu0 0
        %1059 = vmatpush1.bf16.msra.mxu0 0
        %1060 = vmatprep.subr.bf16.mxu0 0
        %1061 = vmatpush1.bf16.msra.mxu0 0
        %1062 = vmatprep.subr.bf16.mxu0 0
        %1063 = vmatpush1.bf16.msra.mxu0 0
        %1064 = vmatprep.mubr.bf16.mxu0 0
        %1065 = vmatmul.mubr.bf16.gmra.mrb[0].mxu0 %v1030
        %v1066 = vpop.f32.mrb[0].mxu0
        %v1067 = vadd.f32 0.0, %v1066
        %v1068 = vpop.f32.mrb[0].mxu0
        %v1069 = vpop.f32.mrb[0].mxu0
        %v1070 = vadd.f32 0.0, %v1069
        %v1071 = vpop.f32.mrb[0].mxu0
        %1072 = vdwg.mxu0
        %v1073 = vmul.f32 %v1067, 0.5
        %v1074 = vmul.f32 %v1070, 0.5
        %v1075 = vmul.f32 %v1067, 0.044715
        %v1076 = vmul.f32 %v1070, 0.044715
        %v1077 = vmul.f32 %v1075, %v1067
        %v1078 = vmul.f32 %v1076, %v1070
        %v1079 = vmul.f32 %v1077, %v1067
        %v1080 = vmul.f32 %v1078, %v1070
        %v1081 = vadd.f32 %v1067, %v1079
        %v1082 = vadd.f32 %v1070, %v1080
        %v1083 = vmul.f32 %v1081, 0.7978846
        %v1084 = vmul.f32 %v1082, 0.7978846
        %v1085 = vtanh.pop %v1083
        %v1086 = vtanh.pop %v1084
        %v1087 = vadd.f32 %v1085, 1.0
        %v1088 = vadd.f32 %v1086, 1.0
        %v1089 = vmul.f32 %v1073, %v1087
        %v1090 = vmul.f32 %v1074, %v1088
        %v1091 = vpack.c.bf16 %v1090, %v1089
        %v1092 = vld [vmem:[#allocation14] sm:$0xff]
        %v1093 = vld [vmem:[#allocation14 + $0x8] sm:$0xff]
        %v1094 = vld [vmem:[#allocation14 + $0x10] sm:$0xff]
        %v1095 = vld [vmem:[#allocation14 + $0x18] sm:$0xff]
        %v1096 = vld [vmem:[#allocation14 + $0x20] sm:$0xff]
        %v1097 = vld [vmem:[#allocation14 + $0x28] sm:$0xff]
        %v1098 = vld [vmem:[#allocation14 + $0x30] sm:$0xff]
        %v1099 = vld [vmem:[#allocation14 + $0x38] sm:$0xff]
        %v1100 = vld [vmem:[#allocation14 + $0x40] sm:$0xff]
        %v1101 = vld [vmem:[#allocation14 + $0x48] sm:$0xff]
        %v1102 = vld [vmem:[#allocation14 + $0x50] sm:$0xff]
        %v1103 = vld [vmem:[#allocation14 + $0x58] sm:$0xff]
        %v1104 = vld [vmem:[#allocation14 + $0x60] sm:$0xff]
        %v1105 = vld [vmem:[#allocation14 + $0x68] sm:$0xff]
        %v1106 = vld [vmem:[#allocation14 + $0x70] sm:$0xff]
        %v1107 = vld [vmem:[#allocation14 + $0x78] sm:$0xff]
        %v1108 = vld [vmem:[#allocation14 + $0x80] sm:$0xff]
        %v1109 = vld [vmem:[#allocation14 + $0x88] sm:$0xff]
        %v1110 = vld [vmem:[#allocation14 + $0x90] sm:$0xff]
        %v1111 = vld [vmem:[#allocation14 + $0x98] sm:$0xff]
        %v1112 = vld [vmem:[#allocation14 + $0xa0] sm:$0xff]
        %v1113 = vld [vmem:[#allocation14 + $0xa8] sm:$0xff]
        %v1114 = vld [vmem:[#allocation14 + $0xb0] sm:$0xff]
        %v1115 = vld [vmem:[#allocation14 + $0xb8] sm:$0xff]
        %v1116 = vld [vmem:[#allocation14 + $0xc0] sm:$0xff]
        %v1117 = vld [vmem:[#allocation14 + $0xc8] sm:$0xff]
        %v1118 = vld [vmem:[#allocation14 + $0xd0] sm:$0xff]
        %v1119 = vld [vmem:[#allocation14 + $0xd8] sm:$0xff]
        %v1120 = vld [vmem:[#allocation14 + $0xe0] sm:$0xff]
        %v1121 = vld [vmem:[#allocation14 + $0xe8] sm:$0xff]
        %v1122 = vld [vmem:[#allocation14 + $0xf0] sm:$0xff]
        %v1123 = vld [vmem:[#allocation14 + $0xf8] sm:$0xff]
        %v1125 = vlaneseq
        %v1126 = vshrl.u32 %v1125, 7
        %v1127 = vsub.s32 0, %v1126
        %v1128 = vrot.slane %v471, %v1127
        %v1129 = vlaneseq
        %v1130 = vshrl.u32 %v1129, 7
        %v1131 = vsub.s32 1, %v1130
        %v1132 = vrot.slane %v471, %v1131
        %v1133 = vlaneseq
        %v1134 = vshrl.u32 %v1133, 7
        %v1135 = vsub.s32 2, %v1134
        %v1136 = vrot.slane %v471, %v1135
        %v1137 = vlaneseq
        %v1138 = vshrl.u32 %v1137, 7
        %v1139 = vsub.s32 3, %v1138
        %v1140 = vrot.slane %v471, %v1139
        %v1177 = vunpack.c.l.b16 %v1092
        %v1178 = vunpack.c.h.b16 %v1092
        %v1179 = vunpack.c.l.b16 %v1093
        %v1180 = vunpack.c.h.b16 %v1093
        %v1181 = vunpack.c.l.b16 %v1094
        %v1182 = vunpack.c.h.b16 %v1094
        %v1183 = vunpack.c.l.b16 %v1095
        %v1184 = vunpack.c.h.b16 %v1095
        %v1185 = vunpack.c.l.b16 %v1096
        %v1186 = vunpack.c.h.b16 %v1096
        %v1187 = vunpack.c.l.b16 %v1097
        %v1188 = vunpack.c.h.b16 %v1097
        %v1189 = vunpack.c.l.b16 %v1098
        %v1190 = vunpack.c.h.b16 %v1098
        %v1191 = vunpack.c.l.b16 %v1099
        %v1192 = vunpack.c.h.b16 %v1099
        %v1193 = vunpack.c.l.b16 %v1100
        %v1194 = vunpack.c.h.b16 %v1100
        %v1195 = vunpack.c.l.b16 %v1101
        %v1196 = vunpack.c.h.b16 %v1101
        %v1197 = vunpack.c.l.b16 %v1102
        %v1198 = vunpack.c.h.b16 %v1102
        %v1199 = vunpack.c.l.b16 %v1103
        %v1200 = vunpack.c.h.b16 %v1103
        %v1201 = vunpack.c.l.b16 %v1104
        %v1202 = vunpack.c.h.b16 %v1104
        %v1203 = vunpack.c.l.b16 %v1105
        %v1204 = vunpack.c.h.b16 %v1105
        %v1205 = vunpack.c.l.b16 %v1106
        %v1206 = vunpack.c.h.b16 %v1106
        %v1207 = vunpack.c.l.b16 %v1107
        %v1208 = vunpack.c.h.b16 %v1107
        %v1209 = vunpack.c.l.b16 %v1108
        %v1210 = vunpack.c.h.b16 %v1108
        %v1211 = vunpack.c.l.b16 %v1109
        %v1212 = vunpack.c.h.b16 %v1109
        %v1213 = vunpack.c.l.b16 %v1110
        %v1214 = vunpack.c.h.b16 %v1110
        %v1215 = vunpack.c.l.b16 %v1111
        %v1216 = vunpack.c.h.b16 %v1111
        %v1217 = vunpack.c.l.b16 %v1112
        %v1218 = vunpack.c.h.b16 %v1112
        %v1219 = vunpack.c.l.b16 %v1113
        %v1220 = vunpack.c.h.b16 %v1113
        %v1221 = vunpack.c.l.b16 %v1114
        %v1222 = vunpack.c.h.b16 %v1114
        %v1223 = vunpack.c.l.b16 %v1115
        %v1224 = vunpack.c.h.b16 %v1115
        %v1225 = vunpack.c.l.b16 %v1116
        %v1226 = vunpack.c.h.b16 %v1116
        %v1227 = vunpack.c.l.b16 %v1117
        %v1228 = vunpack.c.h.b16 %v1117
        %v1229 = vunpack.c.l.b16 %v1118
        %v1230 = vunpack.c.h.b16 %v1118
        %v1231 = vunpack.c.l.b16 %v1119
        %v1232 = vunpack.c.h.b16 %v1119
        %v1233 = vunpack.c.l.b16 %v1120
        %v1234 = vunpack.c.h.b16 %v1120
        %v1235 = vunpack.c.l.b16 %v1121
        %v1236 = vunpack.c.h.b16 %v1121
        %v1237 = vunpack.c.l.b16 %v1122
        %v1238 = vunpack.c.h.b16 %v1122
        %v1239 = vunpack.c.l.b16 %v1123
        %v1240 = vunpack.c.h.b16 %v1123
        %v1241 = vpack.c.b16 %v1181, %v1177
        %v1242 = vpack.c.b16 %v1182, %v1178
        %v1243 = vpack.c.b16 %v1183, %v1179
        %v1244 = vpack.c.b16 %v1184, %v1180
        %v1245 = vpack.c.b16 %v1189, %v1185
        %v1246 = vpack.c.b16 %v1190, %v1186
        %v1247 = vpack.c.b16 %v1191, %v1187
        %v1248 = vpack.c.b16 %v1192, %v1188
        %v1249 = vpack.c.b16 %v1197, %v1193
        %v1250 = vpack.c.b16 %v1198, %v1194
        %v1251 = vpack.c.b16 %v1199, %v1195
        %v1252 = vpack.c.b16 %v1200, %v1196
        %v1253 = vpack.c.b16 %v1205, %v1201
        %v1254 = vpack.c.b16 %v1206, %v1202
        %v1255 = vpack.c.b16 %v1207, %v1203
        %v1256 = vpack.c.b16 %v1208, %v1204
        %v1257 = vpack.c.b16 %v1213, %v1209
        %v1258 = vpack.c.b16 %v1214, %v1210
        %v1259 = vpack.c.b16 %v1215, %v1211
        %v1260 = vpack.c.b16 %v1216, %v1212
        %v1261 = vpack.c.b16 %v1221, %v1217
        %v1262 = vpack.c.b16 %v1222, %v1218
        %v1263 = vpack.c.b16 %v1223, %v1219
        %v1264 = vpack.c.b16 %v1224, %v1220
        %v1265 = vpack.c.b16 %v1229, %v1225
        %v1266 = vpack.c.b16 %v1230, %v1226
        %v1267 = vpack.c.b16 %v1231, %v1227
        %v1268 = vpack.c.b16 %v1232, %v1228
        %v1269 = vpack.c.b16 %v1237, %v1233
        %v1270 = vpack.c.b16 %v1238, %v1234
        %v1271 = vpack.c.b16 %v1239, %v1235
        %v1272 = vpack.c.b16 %v1240, %v1236
        %1305 = vmatprep.subr.bf16.mxu0 %v1242
        %1306 = vmatpush1.bf16.msra.mxu0 %v1241
        %1307 = vmatprep.subr.bf16.mxu0 %v1246
        %1308 = vmatpush1.bf16.msra.mxu0 %v1245
        %1309 = vmatprep.subr.bf16.mxu0 %v1250
        %1310 = vmatpush1.bf16.msra.mxu0 %v1249
        %1311 = vmatprep.subr.bf16.mxu0 %v1254
        %1312 = vmatpush1.bf16.msra.mxu0 %v1253
        %1313 = vmatprep.subr.bf16.mxu0 %v1258
        %1314 = vmatpush1.bf16.msra.mxu0 %v1257
        %1315 = vmatprep.subr.bf16.mxu0 %v1262
        %1316 = vmatpush1.bf16.msra.mxu0 %v1261
        %1317 = vmatprep.subr.bf16.mxu0 %v1266
        %1318 = vmatpush1.bf16.msra.mxu0 %v1265
        %1319 = vmatprep.subr.bf16.mxu0 %v1270
        %1320 = vmatpush1.bf16.msra.mxu0 %v1269
        %1321 = vmatprep.subr.bf16.mxu0 0
        %1322 = vmatpush1.bf16.msra.mxu0 0
        %1323 = vmatprep.subr.bf16.mxu0 0
        %1324 = vmatpush1.bf16.msra.mxu0 0
        %1325 = vmatprep.subr.bf16.mxu0 0
        %1326 = vmatpush1.bf16.msra.mxu0 0
        %1327 = vmatprep.subr.bf16.mxu0 0
        %1328 = vmatpush1.bf16.msra.mxu0 0
        %1329 = vmatprep.subr.bf16.mxu0 0
        %1330 = vmatpush1.bf16.msra.mxu0 0
        %1331 = vmatprep.subr.bf16.mxu0 0
        %1332 = vmatpush1.bf16.msra.mxu0 0
        %1333 = vmatprep.subr.bf16.mxu0 0
        %1334 = vmatpush1.bf16.msra.mxu0 0
        %1335 = vmatprep.subr.bf16.mxu0 0
        %1336 = vmatpush1.bf16.msra.mxu0 0
        %1337 = vmatprep.mubr.bf16.mxu0 0
        %1338 = vmatmul.mubr.bf16.gmra.mrb[0].mxu0 %v1091
        %v1339 = vpop.f32.mrb[0].mxu0
        %v1340 = vadd.f32 %v1128, %v1339
        %v1341 = vpop.f32.mrb[0].mxu0
        %v1342 = vadd.f32 %v1132, %v1341
        %v1343 = vpop.f32.mrb[0].mxu0
        %v1344 = vadd.f32 %v1128, %v1343
        %v1345 = vpop.f32.mrb[0].mxu0
        %v1346 = vadd.f32 %v1132, %v1345
        %1347 = vdwg.mxu0
        %1348 = vmatprep.subr.bf16.mxu0 %v1244
        %1349 = vmatpush1.bf16.msra.mxu0 %v1243
        %1350 = vmatprep.subr.bf16.mxu0 %v1248
        %1351 = vmatpush1.bf16.msra.mxu0 %v1247
        %1352 = vmatprep.subr.bf16.mxu0 %v1252
        %1353 = vmatpush1.bf16.msra.mxu0 %v1251
        %1354 = vmatprep.subr.bf16.mxu0 %v1256
        %1355 = vmatpush1.bf16.msra.mxu0 %v1255
        %1356 = vmatprep.subr.bf16.mxu0 %v1260
        %1357 = vmatpush1.bf16.msra.mxu0 %v1259
        %1358 = vmatprep.subr.bf16.mxu0 %v1264
        %1359 = vmatpush1.bf16.msra.mxu0 %v1263
        %1360 = vmatprep.subr.bf16.mxu0 %v1268
        %1361 = vmatpush1.bf16.msra.mxu0 %v1267
        %1362 = vmatprep.subr.bf16.mxu0 %v1272
        %1363 = vmatpush1.bf16.msra.mxu0 %v1271
        %1364 = vmatprep.subr.bf16.mxu0 0
        %1365 = vmatpush1.bf16.msra.mxu0 0
        %1366 = vmatprep.subr.bf16.mxu0 0
        %1367 = vmatpush1.bf16.msra.mxu0 0
        %1368 = vmatprep.subr.bf16.mxu0 0
        %1369 = vmatpush1.bf16.msra.mxu0 0
        %1370 = vmatprep.subr.bf16.mxu0 0
        %1371 = vmatpush1.bf16.msra.mxu0 0
        %1372 = vmatprep.subr.bf16.mxu0 0
        %1373 = vmatpush1.bf16.msra.mxu0 0
        %1374 = vmatprep.subr.bf16.mxu0 0
        %1375 = vmatpush1.bf16.msra.mxu0 0
        %1376 = vmatprep.subr.bf16.mxu0 0
        %1377 = vmatpush1.bf16.msra.mxu0 0
        %1378 = vmatprep.subr.bf16.mxu0 0
        %1379 = vmatpush1.bf16.msra.mxu0 0
        %1380 = vmatprep.mubr.bf16.mxu0 0
        %1381 = vmatmul.mubr.bf16.gmra.mrb[0].mxu0 %v1091
        %v1382 = vpop.f32.mrb[0].mxu0
        %v1383 = vadd.f32 %v1136, %v1382
        %v1384 = vpop.f32.mrb[0].mxu0
        %v1385 = vadd.f32 %v1140, %v1384
        %v1386 = vpop.f32.mrb[0].mxu0
        %v1387 = vadd.f32 %v1136, %v1386
        %v1388 = vpop.f32.mrb[0].mxu0
        %v1389 = vadd.f32 %v1140, %v1388
        %1390 = vdwg.mxu0
        %v1391 = vmul.f32 %v1340, 0.5
        %v1392 = vmul.f32 %v1342, 0.5
        %v1393 = vmul.f32 %v1383, 0.5
        %v1394 = vmul.f32 %v1385, 0.5
        %v1395 = vmul.f32 %v1344, 0.5
        %v1396 = vmul.f32 %v1346, 0.5
        %v1397 = vmul.f32 %v1387, 0.5
        %v1398 = vmul.f32 %v1389, 0.5
        %v1399 = vmul.f32 %v1340, 0.044715
        %v1400 = vmul.f32 %v1342, 0.044715
        %v1401 = vmul.f32 %v1383, 0.044715
        %v1402 = vmul.f32 %v1385, 0.044715
        %v1403 = vmul.f32 %v1344, 0.044715
        %v1404 = vmul.f32 %v1346, 0.044715
        %v1405 = vmul.f32 %v1387, 0.044715
        %v1406 = vmul.f32 %v1389, 0.044715
        %v1407 = vmul.f32 %v1399, %v1340
        %v1408 = vmul.f32 %v1400, %v1342
        %v1409 = vmul.f32 %v1401, %v1383
        %v1410 = vmul.f32 %v1402, %v1385
        %v1411 = vmul.f32 %v1403, %v1344
        %v1412 = vmul.f32 %v1404, %v1346
        %v1413 = vmul.f32 %v1405, %v1387
        %v1414 = vmul.f32 %v1406, %v1389
        %v1415 = vmul.f32 %v1407, %v1340
        %v1416 = vmul.f32 %v1408, %v1342
        %v1417 = vmul.f32 %v1409, %v1383
        %v1418 = vmul.f32 %v1410, %v1385
        %v1419 = vmul.f32 %v1411, %v1344
        %v1420 = vmul.f32 %v1412, %v1346
        %v1421 = vmul.f32 %v1413, %v1387
        %v1422 = vmul.f32 %v1414, %v1389
        %v1423 = vadd.f32 %v1340, %v1415
        %v1424 = vadd.f32 %v1342, %v1416
        %v1425 = vadd.f32 %v1383, %v1417
        %v1426 = vadd.f32 %v1385, %v1418
        %v1427 = vadd.f32 %v1344, %v1419
        %v1428 = vadd.f32 %v1346, %v1420
        %v1429 = vadd.f32 %v1387, %v1421
        %v1430 = vadd.f32 %v1389, %v1422
        %v1431 = vmul.f32 %v1423, 0.7978846
        %v1432 = vmul.f32 %v1424, 0.7978846
        %v1433 = vmul.f32 %v1425, 0.7978846
        %v1434 = vmul.f32 %v1426, 0.7978846
        %v1435 = vmul.f32 %v1427, 0.7978846
        %v1436 = vmul.f32 %v1428, 0.7978846
        %v1437 = vmul.f32 %v1429, 0.7978846
        %v1438 = vmul.f32 %v1430, 0.7978846
        %v1439 = vtanh.pop %v1431
        %v1440 = vtanh.pop %v1432
        %v1441 = vtanh.pop %v1433
        %v1442 = vtanh.pop %v1434
        %v1443 = vtanh.pop %v1435
        %v1444 = vtanh.pop %v1436
        %v1445 = vtanh.pop %v1437
        %v1446 = vtanh.pop %v1438
        %v1447 = vadd.f32 %v1439, 1.0
        %v1448 = vadd.f32 %v1440, 1.0
        %v1449 = vadd.f32 %v1441, 1.0
        %v1450 = vadd.f32 %v1442, 1.0
        %v1451 = vadd.f32 %v1443, 1.0
        %v1452 = vadd.f32 %v1444, 1.0
        %v1453 = vadd.f32 %v1445, 1.0
        %v1454 = vadd.f32 %v1446, 1.0
        %v1455 = vmul.f32 %v1391, %v1447
        %v1456 = vmul.f32 %v1392, %v1448
        %v1457 = vmul.f32 %v1393, %v1449
        %v1458 = vmul.f32 %v1394, %v1450
        %v1459 = vmul.f32 %v1395, %v1451
        %v1460 = vmul.f32 %v1396, %v1452
        %v1461 = vmul.f32 %v1397, %v1453
        %v1462 = vmul.f32 %v1398, %v1454
        %v1463 = vpack.c.bf16 %v1459, %v1455
        %v1464 = vpack.c.bf16 %v1460, %v1456
        %v1465 = vpack.c.bf16 %v1461, %v1457
        %v1466 = vpack.c.bf16 %v1462, %v1458
        %v1467 = vld [vmem:[#allocation16] sm:$0xf]
        %v1468 = vld [vmem:[#allocation16 + $0x4] sm:$0xf]
        %v1469 = vld [vmem:[#allocation16 + $0x8] sm:$0xf]
        %v1470 = vld [vmem:[#allocation16 + $0xc] sm:$0xf]
        %v1471 = vld [vmem:[#allocation16 + $0x10] sm:$0xf]
        %v1472 = vld [vmem:[#allocation16 + $0x14] sm:$0xf]
        %v1473 = vld [vmem:[#allocation16 + $0x18] sm:$0xf]
        %v1474 = vld [vmem:[#allocation16 + $0x1c] sm:$0xf]
        %v1475 = vld [vmem:[#allocation16 + $0x20] sm:$0xf]
        %v1476 = vld [vmem:[#allocation16 + $0x24] sm:$0xf]
        %v1477 = vld [vmem:[#allocation16 + $0x28] sm:$0xf]
        %v1478 = vld [vmem:[#allocation16 + $0x2c] sm:$0xf]
        %v1479 = vld [vmem:[#allocation16 + $0x30] sm:$0xf]
        %v1480 = vld [vmem:[#allocation16 + $0x34] sm:$0xf]
        %v1481 = vld [vmem:[#allocation16 + $0x38] sm:$0xf]
        %v1482 = vld [vmem:[#allocation16 + $0x3c] sm:$0xf]
        %v1483 = vld [vmem:[#allocation16 + $0x40] sm:$0xf]
        %v1484 = vld [vmem:[#allocation16 + $0x44] sm:$0xf]
        %v1485 = vld [vmem:[#allocation16 + $0x48] sm:$0xf]
        %v1486 = vld [vmem:[#allocation16 + $0x4c] sm:$0xf]
        %v1487 = vld [vmem:[#allocation16 + $0x50] sm:$0xf]
        %v1488 = vld [vmem:[#allocation16 + $0x54] sm:$0xf]
        %v1489 = vld [vmem:[#allocation16 + $0x58] sm:$0xf]
        %v1490 = vld [vmem:[#allocation16 + $0x5c] sm:$0xf]
        %v1491 = vld [vmem:[#allocation16 + $0x60] sm:$0xf]
        %v1492 = vld [vmem:[#allocation16 + $0x64] sm:$0xf]
        %v1493 = vld [vmem:[#allocation16 + $0x68] sm:$0xf]
        %v1494 = vld [vmem:[#allocation16 + $0x6c] sm:$0xf]
        %v1495 = vld [vmem:[#allocation16 + $0x70] sm:$0xf]
        %v1496 = vld [vmem:[#allocation16 + $0x74] sm:$0xf]
        %v1497 = vld [vmem:[#allocation16 + $0x78] sm:$0xf]
        %v1498 = vld [vmem:[#allocation16 + $0x7c] sm:$0xf]
        %v1499 = vld [vmem:[#allocation16 + $0x80] sm:$0xf]
        %v1500 = vld [vmem:[#allocation16 + $0x84] sm:$0xf]
        %v1501 = vld [vmem:[#allocation16 + $0x88] sm:$0xf]
        %v1502 = vld [vmem:[#allocation16 + $0x8c] sm:$0xf]
        %v1503 = vld [vmem:[#allocation16 + $0x90] sm:$0xf]
        %v1504 = vld [vmem:[#allocation16 + $0x94] sm:$0xf]
        %v1505 = vld [vmem:[#allocation16 + $0x98] sm:$0xf]
        %v1506 = vld [vmem:[#allocation16 + $0x9c] sm:$0xf]
        %v1507 = vld [vmem:[#allocation16 + $0xa0] sm:$0xf]
        %v1508 = vld [vmem:[#allocation16 + $0xa4] sm:$0xf]
        %v1509 = vld [vmem:[#allocation16 + $0xa8] sm:$0xf]
        %v1510 = vld [vmem:[#allocation16 + $0xac] sm:$0xf]
        %v1511 = vld [vmem:[#allocation16 + $0xb0] sm:$0xf]
        %v1512 = vld [vmem:[#allocation16 + $0xb4] sm:$0xf]
        %v1513 = vld [vmem:[#allocation16 + $0xb8] sm:$0xf]
        %v1514 = vld [vmem:[#allocation16 + $0xbc] sm:$0xf]
        %v1515 = vld [vmem:[#allocation16 + $0xc0] sm:$0xf]
        %v1516 = vld [vmem:[#allocation16 + $0xc4] sm:$0xf]
        %v1517 = vld [vmem:[#allocation16 + $0xc8] sm:$0xf]
        %v1518 = vld [vmem:[#allocation16 + $0xcc] sm:$0xf]
        %v1519 = vld [vmem:[#allocation16 + $0xd0] sm:$0xf]
        %v1520 = vld [vmem:[#allocation16 + $0xd4] sm:$0xf]
        %v1521 = vld [vmem:[#allocation16 + $0xd8] sm:$0xf]
        %v1522 = vld [vmem:[#allocation16 + $0xdc] sm:$0xf]
        %v1523 = vld [vmem:[#allocation16 + $0xe0] sm:$0xf]
        %v1524 = vld [vmem:[#allocation16 + $0xe4] sm:$0xf]
        %v1525 = vld [vmem:[#allocation16 + $0xe8] sm:$0xf]
        %v1526 = vld [vmem:[#allocation16 + $0xec] sm:$0xf]
        %v1527 = vld [vmem:[#allocation16 + $0xf0] sm:$0xf]
        %v1528 = vld [vmem:[#allocation16 + $0xf4] sm:$0xf]
        %v1529 = vld [vmem:[#allocation16 + $0xf8] sm:$0xf]
        %v1530 = vld [vmem:[#allocation16 + $0xfc] sm:$0xf]
        %v1595 = vunpack.c.l.b16 %v1467
        %v1596 = vunpack.c.l.b16 %v1468
        %v1597 = vunpack.c.l.b16 %v1469
        %v1598 = vunpack.c.l.b16 %v1470
        %v1599 = vunpack.c.l.b16 %v1471
        %v1600 = vunpack.c.l.b16 %v1472
        %v1601 = vunpack.c.l.b16 %v1473
        %v1602 = vunpack.c.l.b16 %v1474
        %v1603 = vunpack.c.l.b16 %v1475
        %v1604 = vunpack.c.l.b16 %v1476
        %v1605 = vunpack.c.l.b16 %v1477
        %v1606 = vunpack.c.l.b16 %v1478
        %v1607 = vunpack.c.l.b16 %v1479
        %v1608 = vunpack.c.l.b16 %v1480
        %v1609 = vunpack.c.l.b16 %v1481
        %v1610 = vunpack.c.l.b16 %v1482
        %v1611 = vunpack.c.l.b16 %v1483
        %v1612 = vunpack.c.l.b16 %v1484
        %v1613 = vunpack.c.l.b16 %v1485
        %v1614 = vunpack.c.l.b16 %v1486
        %v1615 = vunpack.c.l.b16 %v1487
        %v1616 = vunpack.c.l.b16 %v1488
        %v1617 = vunpack.c.l.b16 %v1489
        %v1618 = vunpack.c.l.b16 %v1490
        %v1619 = vunpack.c.l.b16 %v1491
        %v1620 = vunpack.c.l.b16 %v1492
        %v1621 = vunpack.c.l.b16 %v1493
        %v1622 = vunpack.c.l.b16 %v1494
        %v1623 = vunpack.c.l.b16 %v1495
        %v1624 = vunpack.c.l.b16 %v1496
        %v1625 = vunpack.c.l.b16 %v1497
        %v1626 = vunpack.c.l.b16 %v1498
        %v1627 = vunpack.c.l.b16 %v1499
        %v1628 = vunpack.c.l.b16 %v1500
        %v1629 = vunpack.c.l.b16 %v1501
        %v1630 = vunpack.c.l.b16 %v1502
        %v1631 = vunpack.c.l.b16 %v1503
        %v1632 = vunpack.c.l.b16 %v1504
        %v1633 = vunpack.c.l.b16 %v1505
        %v1634 = vunpack.c.l.b16 %v1506
        %v1635 = vunpack.c.l.b16 %v1507
        %v1636 = vunpack.c.l.b16 %v1508
        %v1637 = vunpack.c.l.b16 %v1509
        %v1638 = vunpack.c.l.b16 %v1510
        %v1639 = vunpack.c.l.b16 %v1511
        %v1640 = vunpack.c.l.b16 %v1512
        %v1641 = vunpack.c.l.b16 %v1513
        %v1642 = vunpack.c.l.b16 %v1514
        %v1643 = vunpack.c.l.b16 %v1515
        %v1644 = vunpack.c.l.b16 %v1516
        %v1645 = vunpack.c.l.b16 %v1517
        %v1646 = vunpack.c.l.b16 %v1518
        %v1647 = vunpack.c.l.b16 %v1519
        %v1648 = vunpack.c.l.b16 %v1520
        %v1649 = vunpack.c.l.b16 %v1521
        %v1650 = vunpack.c.l.b16 %v1522
        %v1651 = vunpack.c.l.b16 %v1523
        %v1652 = vunpack.c.l.b16 %v1524
        %v1653 = vunpack.c.l.b16 %v1525
        %v1654 = vunpack.c.l.b16 %v1526
        %v1655 = vunpack.c.l.b16 %v1527
        %v1656 = vunpack.c.l.b16 %v1528
        %v1657 = vunpack.c.l.b16 %v1529
        %v1658 = vunpack.c.l.b16 %v1530
        %v1659 = vpack.c.b16 %v1596, %v1595
        %v1660 = vpack.c.b16 %v1598, %v1597
        %v1661 = vpack.c.b16 %v1600, %v1599
        %v1662 = vpack.c.b16 %v1602, %v1601
        %v1663 = vpack.c.b16 %v1604, %v1603
        %v1664 = vpack.c.b16 %v1606, %v1605
        %v1665 = vpack.c.b16 %v1608, %v1607
        %v1666 = vpack.c.b16 %v1610, %v1609
        %v1667 = vpack.c.b16 %v1612, %v1611
        %v1668 = vpack.c.b16 %v1614, %v1613
        %v1669 = vpack.c.b16 %v1616, %v1615
        %v1670 = vpack.c.b16 %v1618, %v1617
        %v1671 = vpack.c.b16 %v1620, %v1619
        %v1672 = vpack.c.b16 %v1622, %v1621
        %v1673 = vpack.c.b16 %v1624, %v1623
        %v1674 = vpack.c.b16 %v1626, %v1625
        %v1675 = vpack.c.b16 %v1628, %v1627
        %v1676 = vpack.c.b16 %v1630, %v1629
        %v1677 = vpack.c.b16 %v1632, %v1631
        %v1678 = vpack.c.b16 %v1634, %v1633
        %v1679 = vpack.c.b16 %v1636, %v1635
        %v1680 = vpack.c.b16 %v1638, %v1637
        %v1681 = vpack.c.b16 %v1640, %v1639
        %v1682 = vpack.c.b16 %v1642, %v1641
        %v1683 = vpack.c.b16 %v1644, %v1643
        %v1684 = vpack.c.b16 %v1646, %v1645
        %v1685 = vpack.c.b16 %v1648, %v1647
        %v1686 = vpack.c.b16 %v1650, %v1649
        %v1687 = vpack.c.b16 %v1652, %v1651
        %v1688 = vpack.c.b16 %v1654, %v1653
        %v1689 = vpack.c.b16 %v1656, %v1655
        %v1690 = vpack.c.b16 %v1658, %v1657
        %1723 = vmatprep.subr.bf16.mxu0 0
        %1724 = vmatpush1.bf16.msra.mxu0 %v1659
        %1725 = vmatprep.subr.bf16.mxu0 0
        %1726 = vmatpush1.bf16.msra.mxu0 %v1660
        %1727 = vmatprep.subr.bf16.mxu0 0
        %1728 = vmatpush1.bf16.msra.mxu0 %v1661
        %1729 = vmatprep.subr.bf16.mxu0 0
        %1730 = vmatpush1.bf16.msra.mxu0 %v1662
        %1731 = vmatprep.subr.bf16.mxu0 0
        %1732 = vmatpush1.bf16.msra.mxu0 %v1663
        %1733 = vmatprep.subr.bf16.mxu0 0
        %1734 = vmatpush1.bf16.msra.mxu0 %v1664
        %1735 = vmatprep.subr.bf16.mxu0 0
        %1736 = vmatpush1.bf16.msra.mxu0 %v1665
        %1737 = vmatprep.subr.bf16.mxu0 0
        %1738 = vmatpush1.bf16.msra.mxu0 %v1666
        %1739 = vmatprep.subr.bf16.mxu0 0
        %1740 = vmatpush1.bf16.msra.mxu0 %v1667
        %1741 = vmatprep.subr.bf16.mxu0 0
        %1742 = vmatpush1.bf16.msra.mxu0 %v1668
        %1743 = vmatprep.subr.bf16.mxu0 0
        %1744 = vmatpush1.bf16.msra.mxu0 %v1669
        %1745 = vmatprep.subr.bf16.mxu0 0
        %1746 = vmatpush1.bf16.msra.mxu0 %v1670
        %1747 = vmatprep.subr.bf16.mxu0 0
        %1748 = vmatpush1.bf16.msra.mxu0 %v1671
        %1749 = vmatprep.subr.bf16.mxu0 0
        %1750 = vmatpush1.bf16.msra.mxu0 %v1672
        %1751 = vmatprep.subr.bf16.mxu0 0
        %1752 = vmatpush1.bf16.msra.mxu0 %v1673
        %1753 = vmatprep.subr.bf16.mxu0 0
        %1754 = vmatpush1.bf16.msra.mxu0 %v1674
        %1755 = vmatprep.mubr.bf16.mxu0 %v1464
        %1756 = vmatmul.mubr.bf16.gmra.mrb[0].mxu0 %v1463
        %v1757 = vpop.f32.mrb[0].mxu0
        %v1758 = vadd.f32 %v469, %v1757
        %v1759 = vpop.f32.mrb[0].mxu0
        %v1760 = vpop.f32.mrb[0].mxu0
        %v1761 = vadd.f32 %v469, %v1760
        %v1762 = vpop.f32.mrb[0].mxu0
        %1763 = vdwg.mxu0
        %1764 = vmatprep.subr.bf16.mxu0 0
        %1765 = vmatpush1.bf16.msra.mxu0 %v1675
        %1766 = vmatprep.subr.bf16.mxu0 0
        %1767 = vmatpush1.bf16.msra.mxu0 %v1676
        %1768 = vmatprep.subr.bf16.mxu0 0
        %1769 = vmatpush1.bf16.msra.mxu0 %v1677
        %1770 = vmatprep.subr.bf16.mxu0 0
        %1771 = vmatpush1.bf16.msra.mxu0 %v1678
        %1772 = vmatprep.subr.bf16.mxu0 0
        %1773 = vmatpush1.bf16.msra.mxu0 %v1679
        %1774 = vmatprep.subr.bf16.mxu0 0
        %1775 = vmatpush1.bf16.msra.mxu0 %v1680
        %1776 = vmatprep.subr.bf16.mxu0 0
        %1777 = vmatpush1.bf16.msra.mxu0 %v1681
        %1778 = vmatprep.subr.bf16.mxu0 0
        %1779 = vmatpush1.bf16.msra.mxu0 %v1682
        %1780 = vmatprep.subr.bf16.mxu0 0
        %1781 = vmatpush1.bf16.msra.mxu0 %v1683
        %1782 = vmatprep.subr.bf16.mxu0 0
        %1783 = vmatpush1.bf16.msra.mxu0 %v1684
        %1784 = vmatprep.subr.bf16.mxu0 0
        %1785 = vmatpush1.bf16.msra.mxu0 %v1685
        %1786 = vmatprep.subr.bf16.mxu0 0
        %1787 = vmatpush1.bf16.msra.mxu0 %v1686
        %1788 = vmatprep.subr.bf16.mxu0 0
        %1789 = vmatpush1.bf16.msra.mxu0 %v1687
        %1790 = vmatprep.subr.bf16.mxu0 0
        %1791 = vmatpush1.bf16.msra.mxu0 %v1688
        %1792 = vmatprep.subr.bf16.mxu0 0
        %1793 = vmatpush1.bf16.msra.mxu0 %v1689
        %1794 = vmatprep.subr.bf16.mxu0 0
        %1795 = vmatpush1.bf16.msra.mxu0 %v1690
        %1796 = vmatprep.mubr.bf16.mxu0 %v1466
        %1797 = vmatmul.mubr.bf16.gmra.mrb[0].mxu0 %v1465
        %v1798 = vpop.f32.mrb[0].mxu0
        %v1799 = vadd.f32 %v1758, %v1798
        %v1800 = vpop.f32.mrb[0].mxu0
        %v1801 = vpop.f32.mrb[0].mxu0
        %v1802 = vadd.f32 %v1761, %v1801
        %v1803 = vpop.f32.mrb[0].mxu0
        %1804 = vdwg.mxu0
        %v1805 = vadd.f32 %v1089, %v1799
        %v1806 = vadd.f32 %v1090, %v1802
        %1807 = vst [vmem:[%s464] sm:$0xff] %v1805
        %1808 = vst [vmem:[%s464 + $0x8] sm:$0xff] %v1806
        %s1809 = sand.u32 %s232, 1
        %s1810 = scalar_lea.sflag [#allocation4], %s1809
        %s1811 = sand.u32 %s232, 1
        %s1812 = smul.addr %s1811, 16
        %s1813 = scalar_lea.vmem [#allocation17], %s1812
        // Predicated region
        $region93: #{tpu_custom_call.1} parent=55 // pred_check
          %p1814 = pneg %p242
        $region94: #{tpu_custom_call.1} parent=55 // pred_check_branch
          %1816 = sbr.rel (%p1814) target = $region96
        $region95: #{tpu_custom_call.1} parent=55 // pred_region
          %s1818 = ssub.s32 256, 256
          %1819 = vsyncadd %s1810, %s1818
          %s1820 = smul.addr %s30, 2
          %s1821 = smul.addr %s1820, 128
          %s1822 = scalar_lea.hbm %s9, %s1821
          %s1823 = sshll.u32 %s1813, 4
          %s1824 = int_to_ptr.vmem [resolvable:$true] %s1823
          %1829 = dma.vmem_to_hbm [thread:$0]  %s1824, 256, %s1822, %s1810, 128, 128, 8
        $region96: #{tpu_custom_call.1} parent=55 // pred_fallthru
          _
      $region56: #{tpu_custom_call.1} parent=5 // pred_fallthru
        _
      %p1830 = scmp.le.s32.totalorder 2, %s25
      // Predicated region
      $region97: #{tpu_custom_call.1} parent=5 // pred_check
        %p1831 = pneg %p1830
      $region98: #{tpu_custom_call.1} parent=5 // pred_check_branch
        %1833 = sbr.rel (%p1831) target = $region100
      $region99: #{tpu_custom_call.1} parent=5 // pred_region
        %s1834 = ssub.s32 %s25, 2
        // Predicated region
        $region101: #{tpu_custom_call.1} parent=99 // pred_check
          %p1835 = pneg %p248
        $region102: #{tpu_custom_call.1} parent=99 // pred_check_branch
          %1837 = sbr.rel (%p1835) target = $region104
        $region103: #{tpu_custom_call.1} parent=99 // pred_region
          %s1838 = sand.u32 %s233, 1
          %s1839 = scalar_lea.sflag [#allocation4], %s1838
          %s1840 = sand.u32 %s233, 1
          %s1841 = smul.addr %s1840, 16
          %s1842 = scalar_lea.vmem [#allocation17], %s1841
          %1843 = dma.done %s1839, 256
        $region104: #{tpu_custom_call.1} parent=99 // pred_fallthru
          _
      $region100: #{tpu_custom_call.1} parent=5 // pred_fallthru
        _
    $region6: #{tpu_custom_call.1} parent=1 // loop_footer
      %s29 = sadd.s32 1, %s25
    $region7: #{tpu_custom_call.1} parent=1 // loop_footer_branch
      %24 = sbr.rel target = $region3
    $region8: #{tpu_custom_call.1} parent=1 // loop_exit
      _
    %1844 = vsyncpa [#allocation3], 1
    %s1845 = scalar_lea.sflag [#allocation3], 1
    %1846 = vsyncpa %s1845, 1
    %1847 = vsyncpa [#allocation6], 1
    %1848 = vsyncpa [#allocation9], 1
    %1849 = vsyncpa [#allocation12], 1
    %1850 = vsyncpa [#allocation15], 1
    %1851 = vsyncpa [#allocation4], 1
    %s1852 = scalar_lea.sflag [#allocation4], 1
    %1853 = vsyncpa %s1852, 1

// kernel: tpu_custom_call.1
$region0: #{tpu_custom_call.1}
  #allocation0 [shape = 'u32[]', space=smem, size = 0x4, offset = 0x4, fixed_abs, tag = 'smem constant byte address 0x4 - core index']
  #allocation1 [shape = 'u32[144,128]{1,0:T(1,128)}', space=vmem, size = 0x12000, scoped, tag = 'internal scratch']
  %s0 = inlined_call_operand.hbm [shape: f32[2,16,128], index: 0, kind: input, shape index: {}]
  %s1 = inlined_call_operand.hbm [shape: bf16[16,16], index: 1, kind: input, shape index: {}]
  %s2 = inlined_call_operand.hbm [shape: bf16[16,16], index: 2, kind: input, shape index: {}]
  %s3 = inlined_call_operand.hbm [shape: bf16[16,512], index: 3, kind: input, shape index: {}]
  %s4 = inlined_call_operand.hbm [shape: f32[128,128], index: 4, kind: input, shape index: {}]
  %s5 = inlined_call_operand.hbm [shape: f32[8,512], index: 5, kind: input, shape index: {}]
  %s6 = inlined_call_operand.hbm [shape: bf16[512,128], index: 6, kind: input, shape index: {}]
  %s7 = inlined_call_operand.hbm [shape: bf16[128,512], index: 7, kind: input, shape index: {}]
  %s8 = inlined_call_operand.hbm [shape: bf16[512,128], index: 8, kind: input, shape index: {}]
  %s9 = inlined_call_operand.hbm [shape: f32[2,16,128], index: 9, kind: output, shape index: {}]
  %s10 = sld [smem:[#allocation0]]
  $region105: #{tpu_custom_call.1} parent=0
    _
  %s12 = ssub.s32 1, %s10
  %s13 = scalar_select 0, %s12, %s10
  $region1: #{tpu_custom_call.1} parent=0
    #allocation2 [shape = 'u8[16384]{0}', space=vmem, size = 0x4000, scoped, tag = 'input window, operand 0']
    #allocation3 [shape = 's32[2]{0}', space=sflag, size = 0x8, scoped, tag = 'scoped memory for tpu_custom_call.1']
    #allocation4 [shape = 's32[2]{0}', space=sflag, size = 0x8, scoped, tag = 'scoped memory for tpu_custom_call.1']
    #allocation5 [shape = 'u8[4096]{0}', space=vmem, size = 0x1000, scoped, tag = 'input window, operand 1, single buffered']
    #allocation6 [shape = 's32[1]{0}', space=sflag, size = 0x4, scoped, tag = 'scoped memory for tpu_custom_call.1']
    #allocation7 [shape = 'u8[4096]{0}', space=vmem, size = 0x1000, scoped, tag = 'input window, operand 2, single buffered']
    #allocation8 [shape = 'u8[16384]{0}', space=vmem, size = 0x4000, scoped, tag = 'input window, operand 3, single buffered']
    #allocation9 [shape = 's32[1]{0}', space=sflag, size = 0x4, scoped, tag = 'scoped memory for tpu_custom_call.1']
    #allocation10 [shape = 'u8[65536]{0}', space=vmem, size = 0x10000, scoped, tag = 'input window, operand 4, single buffered']
    #allocation11 [shape = 'u8[16384]{0}', space=vmem, size = 0x4000, scoped, tag = 'input window, operand 5, single buffered']
    #allocation12 [shape = 's32[1]{0}', space=sflag, size = 0x4, scoped, tag = 'scoped memory for tpu_custom_call.1']
    #allocation13 [shape = 'u8[131072]{0}', space=vmem, size = 0x20000, scoped, tag = 'input window, operand 6, single buffered']
    #allocation14 [shape = 'u8[131072]{0}', space=vmem, size = 0x20000, scoped, tag = 'input window, operand 7, single buffered']
    #allocation15 [shape = 's32[1]{0}', space=sflag, size = 0x4, scoped, tag = 'scoped memory for tpu_custom_call.1']
    #allocation16 [shape = 'u8[131072]{0}', space=vmem, size = 0x20000, scoped, tag = 'input window, operand 8, single buffered']
    #allocation17 [shape = 'u8[16384]{0}', space=vmem, size = 0x4000, scoped, tag = 'output window, operand 0']
    %14 = vsyncpa [#allocation3], 0
    %s15 = scalar_lea.sflag [#allocation3], 1
    %16 = vsyncpa %s15, 0
    %17 = vsyncpa [#allocation6], 0
    %18 = vsyncpa [#allocation9], 0
    %19 = vsyncpa [#allocation12], 0
    %20 = vsyncpa [#allocation15], 0
    %21 = vsyncpa [#allocation4], 0
    %s22 = scalar_lea.sflag [#allocation4], 1
    %23 = vsyncpa %s22, 0
    loop: start=0, step=1, limit=4
    $region2: #{tpu_custom_call.1} parent=1 // loop_pre_header
      _
    $region3: #{tpu_custom_call.1} parent=1 // loop_header
      %s25 = sphi 0, %s29
      %p26 = scmp.ge.s32.totalorder %s25, 4
      %s35 = sphi 0, %s37
      %s38 = sphi 0, %s35
      %s39 = sphi 0, %s38
      %s55 = sphi 0, %s39
      %s59 = sphi 0, %s59
      %s61 = sphi 0, %s59
      %s62 = sphi 0, %s61
      %s76 = sphi 0, %s62
      %s80 = sphi 0, %s80
      %s82 = sphi 0, %s80
      %s83 = sphi 0, %s82
      %s97 = sphi 0, %s83
      %s101 = sphi 0, %s101
      %s103 = sphi 0, %s101
      %s104 = sphi 0, %s103
      %s118 = sphi 0, %s104
      %s122 = sphi 0, %s122
      %s124 = sphi 0, %s122
      %s125 = sphi 0, %s124
      %s139 = sphi 0, %s125
      %s143 = sphi 0, %s143
      %s145 = sphi 0, %s143
      %s146 = sphi 0, %s145
      %s160 = sphi 0, %s146
      %s164 = sphi 0, %s164
      %s166 = sphi 0, %s164
      %s167 = sphi 0, %s166
      %s181 = sphi 0, %s167
      %s185 = sphi 0, %s185
      %s187 = sphi 0, %s185
      %s188 = sphi 0, %s187
      %s202 = sphi 0, %s188
      %s206 = sphi 0, %s206
      %s208 = sphi 0, %s206
      %s209 = sphi 0, %s208
      %s223 = sphi 0, %s209
      %s229 = sphi 0, %s231
      %s232 = sphi 0, %s229
      %s233 = sphi 0, %s232
      %s249 = sphi 0, %s233
    $region4: #{tpu_custom_call.1} parent=1 // loop_header_branch
      %28 = sbr.rel (%p26) target = $region8
    $region5: #{tpu_custom_call.1} parent=1 // loop_body
      %s30 = ssub.s32 %s25, 1
      %s31 = ssub.s32 %s25, 2
      %s32 = sadd.s32 %s25, 1
      %s33 = ssub.s32 %s25, %s32
      %p34 = scmp.eq.s32.totalorder %s33, 0
      %s36 = sadd.s32 %s35, 1
      %s37 = scalar_select %p34, %s35, %s36
      %p40 = pneg %p34
      %p41 = scmp.eq.s32.totalorder %s25, 1
      %p42 = por %p40, %p41
      %p43 = scmp.ne.s32.totalorder %s35, %s38
      %p44 = scmp.eq.s32.totalorder %s25, 0
      %p45 = por %p43, %p44
      %p46 = scmp.ne.s32.totalorder %s35, %s38
      %p47 = scmp.eq.s32.totalorder %s30, 1
      %p48 = por %p46, %p47
      %p49 = scmp.ne.s32.totalorder %s38, %s39
      %p50 = scmp.eq.s32.totalorder %s30, 0
      %p51 = por %p49, %p50
      %p52 = scmp.ne.s32.totalorder %s38, %s39
      %p53 = scmp.eq.s32.totalorder %s31, 1
      %p54 = por %p52, %p53
      %p56 = scmp.ne.s32.totalorder %s39, %s55
      %p57 = scmp.eq.s32.totalorder %s31, 0
      %p58 = por %p56, %p57
      %s60 = sadd.s32 %s59, 1
      %p63 = scmp.eq.s32.totalorder %s25, 1
      %p64 = scmp.ne.s32.totalorder %s59, %s61
      %p65 = scmp.eq.s32.totalorder %s25, 0
      %p66 = por %p64, %p65
      %p67 = scmp.ne.s32.totalorder %s59, %s61
      %p68 = scmp.eq.s32.totalorder %s30, 1
      %p69 = por %p67, %p68
      %p70 = scmp.ne.s32.totalorder %s61, %s62
      %p71 = scmp.eq.s32.totalorder %s30, 0
      %p72 = por %p70, %p71
      %p73 = scmp.ne.s32.totalorder %s61, %s62
      %p74 = scmp.eq.s32.totalorder %s31, 1
      %p75 = por %p73, %p74
      %p77 = scmp.ne.s32.totalorder %s62, %s76
      %p78 = scmp.eq.s32.totalorder %s31, 0
      %p79 = por %p77, %p78
      %s81 = sadd.s32 %s80, 1
      %p84 = scmp.eq.s32.totalorder %s25, 1
      %p85 = scmp.ne.s32.totalorder %s80, %s82
      %p86 = scmp.eq.s32.totalorder %s25, 0
      %p87 = por %p85, %p86
      %p88 = scmp.ne.s32.totalorder %s80, %s82
      %p89 = scmp.eq.s32.totalorder %s30, 1
      %p90 = por %p88, %p89
      %p91 = scmp.ne.s32.totalorder %s82, %s83
      %p92 = scmp.eq.s32.totalorder %s30, 0
      %p93 = por %p91, %p92
      %p94 = scmp.ne.s32.totalorder %s82, %s83
      %p95 = scmp.eq.s32.totalorder %s31, 1
      %p96 = por %p94, %p95
      %p98 = scmp.ne.s32.totalorder %s83, %s97
      %p99 = scmp.eq.s32.totalorder %s31, 0
      %p100 = por %p98, %p99
      %s102 = sadd.s32 %s101, 1
      %p105 = scmp.eq.s32.totalorder %s25, 1
      %p106 = scmp.ne.s32.totalorder %s101, %s103
      %p107 = scmp.eq.s32.totalorder %s25, 0
      %p108 = por %p106, %p107
      %p109 = scmp.ne.s32.totalorder %s101, %s103
      %p110 = scmp.eq.s32.totalorder %s30, 1
      %p111 = por %p109, %p110
      %p112 = scmp.ne.s32.totalorder %s103, %s104
      %p113 = scmp.eq.s32.totalorder %s30, 0
      %p114 = por %p112, %p113
      %p115 = scmp.ne.s32.totalorder %s103, %s104
      %p116 = scmp.eq.s32.totalorder %s31, 1
      %p117 = por %p115, %p116
      %p119 = scmp.ne.s32.totalorder %s104, %s118
      %p120 = scmp.eq.s32.totalorder %s31, 0
      %p121 = por %p119, %p120
      %s123 = sadd.s32 %s122, 1
      %p126 = scmp.eq.s32.totalorder %s25, 1
      %p127 = scmp.ne.s32.totalorder %s122, %s124
      %p128 = scmp.eq.s32.totalorder %s25, 0
      %p129 = por %p127, %p128
      %p130 = scmp.ne.s32.totalorder %s122, %s124
      %p131 = scmp.eq.s32.totalorder %s30, 1
      %p132 = por %p130, %p131
      %p133 = scmp.ne.s32.totalorder %s124, %s125
      %p134 = scmp.eq.s32.totalorder %s30, 0
      %p135 = por %p133, %p134
      %p136 = scmp.ne.s32.totalorder %s124, %s125
      %p137 = scmp.eq.s32.totalorder %s31, 1
      %p138 = por %p136, %p137
      %p140 = scmp.ne.s32.totalorder %s125, %s139
      %p141 = scmp.eq.s32.totalorder %s31, 0
      %p142 = por %p140, %p141
      %s144 = sadd.s32 %s143, 1
      %p147 = scmp.eq.s32.totalorder %s25, 1
      %p148 = scmp.ne.s32.totalorder %s143, %s145
      %p149 = scmp.eq.s32.totalorder %s25, 0
      %p150 = por %p148, %p149
      %p151 = scmp.ne.s32.totalorder %s143, %s145
      %p152 = scmp.eq.s32.totalorder %s30, 1
      %p153 = por %p151, %p152
      %p154 = scmp.ne.s32.totalorder %s145, %s146
      %p155 = scmp.eq.s32.totalorder %s30, 0
      %p156 = por %p154, %p155
      %p157 = scmp.ne.s32.totalorder %s145, %s146
      %p158 = scmp.eq.s32.totalorder %s31, 1
      %p159 = por %p157, %p158
      %p161 = scmp.ne.s32.totalorder %s146, %s160
      %p162 = scmp.eq.s32.totalorder %s31, 0
      %p163 = por %p161, %p162
      %s165 = sadd.s32 %s164, 1
      %p168 = scmp.eq.s32.totalorder %s25, 1
      %p169 = scmp.ne.s32.totalorder %s164, %s166
      %p170 = scmp.eq.s32.totalorder %s25, 0
      %p171 = por %p169, %p170
      %p172 = scmp.ne.s32.totalorder %s164, %s166
      %p173 = scmp.eq.s32.totalorder %s30, 1
      %p174 = por %p172, %p173
      %p175 = scmp.ne.s32.totalorder %s166, %s167
      %p176 = scmp.eq.s32.totalorder %s30, 0
      %p177 = por %p175, %p176
      %p178 = scmp.ne.s32.totalorder %s166, %s167
      %p179 = scmp.eq.s32.totalorder %s31, 1
      %p180 = por %p178, %p179
      %p182 = scmp.ne.s32.totalorder %s167, %s181
      %p183 = scmp.eq.s32.totalorder %s31, 0
      %p184 = por %p182, %p183
      %s186 = sadd.s32 %s185, 1
      %p189 = scmp.eq.s32.totalorder %s25, 1
      %p190 = scmp.ne.s32.totalorder %s185, %s187
      %p191 = scmp.eq.s32.totalorder %s25, 0
      %p192 = por %p190, %p191
      %p193 = scmp.ne.s32.totalorder %s185, %s187
      %p194 = scmp.eq.s32.totalorder %s30, 1
      %p195 = por %p193, %p194
      %p196 = scmp.ne.s32.totalorder %s187, %s188
      %p197 = scmp.eq.s32.totalorder %s30, 0
      %p198 = por %p196, %p197
      %p199 = scmp.ne.s32.totalorder %s187, %s188
      %p200 = scmp.eq.s32.totalorder %s31, 1
      %p201 = por %p199, %p200
      %p203 = scmp.ne.s32.totalorder %s188, %s202
      %p204 = scmp.eq.s32.totalorder %s31, 0
      %p205 = por %p203, %p204
      %s207 = sadd.s32 %s206, 1
      %p210 = scmp.eq.s32.totalorder %s25, 1
      %p211 = scmp.ne.s32.totalorder %s206, %s208
      %p212 = scmp.eq.s32.totalorder %s25, 0
      %p213 = por %p211, %p212
      %p214 = scmp.ne.s32.totalorder %s206, %s208
      %p215 = scmp.eq.s32.totalorder %s30, 1
      %p216 = por %p214, %p215
      %p217 = scmp.ne.s32.totalorder %s208, %s209
      %p218 = scmp.eq.s32.totalorder %s30, 0
      %p219 = por %p217, %p218
      %p220 = scmp.ne.s32.totalorder %s208, %s209
      %p221 = scmp.eq.s32.totalorder %s31, 1
      %p222 = por %p220, %p221
      %p224 = scmp.ne.s32.totalorder %s209, %s223
      %p225 = scmp.eq.s32.totalorder %s31, 0
      %p226 = por %p224, %p225
      %s227 = ssub.s32 %s25, %s32
      %p228 = scmp.eq.s32.totalorder %s227, 0
      %s230 = sadd.s32 %s229, 1
      %s231 = scalar_select %p228, %s229, %s230
      %p234 = pneg %p228
      %p235 = scmp.eq.s32.totalorder %s25, 1
      %p236 = por %p234, %p235
      %p237 = scmp.ne.s32.totalorder %s229, %s232
      %p238 = scmp.eq.s32.totalorder %s25, 0
      %p239 = por %p237, %p238
      %p240 = scmp.ne.s32.totalorder %s229, %s232
      %p241 = scmp.eq.s32.totalorder %s30, 1
      %p242 = por %p240, %p241
      %p243 = scmp.ne.s32.totalorder %s232, %s233
      %p244 = scmp.eq.s32.totalorder %s30, 0
      %p245 = por %p243, %p244
      %p246 = scmp.ne.s32.totalorder %s232, %s233
      %p247 = scmp.eq.s32.totalorder %s31, 1
      %p248 = por %p246, %p247
      %p250 = scmp.ne.s32.totalorder %s233, %s249
      %p251 = scmp.eq.s32.totalorder %s31, 0
      %p252 = por %p250, %p251
      %p253 = scmp.le.s32.totalorder 1, %s25
      %p254 = scmp.lt.s32.totalorder %s25, 3
      %p255 = pnand %p253, %p254
      %p256 = pneg %p255
      // Predicated region
      $region9: #{tpu_custom_call.1} parent=5 // pred_check
        _
      $region10: #{tpu_custom_call.1} parent=5 // pred_check_branch
        %258 = sbr.rel (%p255) target = $region12
      $region11: #{tpu_custom_call.1} parent=5 // pred_region
        %s259 = ssub.s32 %s25, 1
        // Predicated region
        $region13: #{tpu_custom_call.1} parent=11 // pred_check
          %p260 = pneg %p72
        $region14: #{tpu_custom_call.1} parent=11 // pred_check_branch
          %262 = sbr.rel (%p260) target = $region16
        $region15: #{tpu_custom_call.1} parent=11 // pred_region
          %s264 = ssub.s32 128, 128
          %265 = vsyncadd [#allocation6], %s264
          %s266 = sshll.u32 [#allocation5], 4
          %s267 = int_to_ptr.vmem [resolvable:$true] %s266
          %272 = dma.hbm_to_vmem [thread:$0]  %s1, 128, %s267, [#allocation6], 64, 64, 4
        $region16: #{tpu_custom_call.1} parent=11 // pred_fallthru
          _
        // Predicated region
        $region17: #{tpu_custom_call.1} parent=11 // pred_check
          %p273 = pneg %p93
        $region18: #{tpu_custom_call.1} parent=11 // pred_check_branch
          %275 = sbr.rel (%p273) target = $region20
        $region19: #{tpu_custom_call.1} parent=11 // pred_region
          %s277 = ssub.s32 128, 128
          %278 = vsyncadd [#allocation6], %s277
          %s279 = sshll.u32 [#allocation7], 4
          %s280 = int_to_ptr.vmem [resolvable:$true] %s279
          %285 = dma.hbm_to_vmem [thread:$0]  %s2, 128, %s280, [#allocation6], 64, 64, 4
        $region20: #{tpu_custom_call.1} parent=11 // pred_fallthru
          _
        // Predicated region
        $region21: #{tpu_custom_call.1} parent=11 // pred_check
          %p286 = pneg %p114
        $region22: #{tpu_custom_call.1} parent=11 // pred_check_branch
          %288 = sbr.rel (%p286) target = $region24
        $region23: #{tpu_custom_call.1} parent=11 // pred_region
          %s290 = ssub.s32 512, 512
          %291 = vsyncadd [#allocation9], %s290
          %s292 = sshll.u32 [#allocation8], 4
          %s293 = int_to_ptr.vmem [resolvable:$true] %s292
          %298 = dma.hbm_to_vmem [thread:$0]  %s3, 512, %s293, [#allocation9], 256, 256, 16
        $region24: #{tpu_custom_call.1} parent=11 // pred_fallthru
          _
        // Predicated region
        $region25: #{tpu_custom_call.1} parent=11 // pred_check
          %p299 = pneg %p135
        $region26: #{tpu_custom_call.1} parent=11 // pred_check_branch
          %301 = sbr.rel (%p299) target = $region28
        $region27: #{tpu_custom_call.1} parent=11 // pred_region
          %s303 = ssub.s32 2048, 2048
          %304 = vsyncadd [#allocation9], %s303
          %s305 = sshll.u32 [#allocation10], 4
          %s306 = int_to_ptr.vmem [resolvable:$true] %s305
          %311 = dma.hbm_to_vmem [thread:$0]  %s4, 2048, %s306, [#allocation9], 128, 128, 8
        $region28: #{tpu_custom_call.1} parent=11 // pred_fallthru
          _
        // Predicated region
        $region29: #{tpu_custom_call.1} parent=11 // pred_check
          %p312 = pneg %p156
        $region30: #{tpu_custom_call.1} parent=11 // pred_check_branch
          %314 = sbr.rel (%p312) target = $region32
        $region31: #{tpu_custom_call.1} parent=11 // pred_region
          %s316 = ssub.s32 512, 512
          %317 = vsyncadd [#allocation12], %s316
          %s319 = sshll.u32 [#allocation11], 4
          %s320 = int_to_ptr.vmem [resolvable:$true] %s319
          %322 = dma.hbm_to_vmem [thread:$0]  %s5, 512, %s320, [#allocation12]
        $region32: #{tpu_custom_call.1} parent=11 // pred_fallthru
          _
        // Predicated region
        $region33: #{tpu_custom_call.1} parent=11 // pred_check
          %p323 = pneg %p177
        $region34: #{tpu_custom_call.1} parent=11 // pred_check_branch
          %325 = sbr.rel (%p323) target = $region36
        $region35: #{tpu_custom_call.1} parent=11 // pred_region
          %s327 = ssub.s32 4096, 4096
          %328 = vsyncadd [#allocation12], %s327
          %s329 = sshll.u32 [#allocation13], 4
          %s330 = int_to_ptr.vmem [resolvable:$true] %s329
          %335 = dma.hbm_to_vmem [thread:$0]  %s6, 4096, %s330, [#allocation12], 64, 64, 4
        $region36: #{tpu_custom_call.1} parent=11 // pred_fallthru
          _
        // Predicated region
        $region37: #{tpu_custom_call.1} parent=11 // pred_check
          %p336 = pneg %p198
        $region38: #{tpu_custom_call.1} parent=11 // pred_check_branch
          %338 = sbr.rel (%p336) target = $region40
        $region39: #{tpu_custom_call.1} parent=11 // pred_region
          %s340 = ssub.s32 4096, 4096
          %341 = vsyncadd [#allocation15], %s340
          %s342 = sshll.u32 [#allocation14], 4
          %s343 = int_to_ptr.vmem [resolvable:$true] %s342
          %348 = dma.hbm_to_vmem [thread:$0]  %s7, 4096, %s343, [#allocation15], 256, 256, 16
        $region40: #{tpu_custom_call.1} parent=11 // pred_fallthru
          _
        // Predicated region
        $region41: #{tpu_custom_call.1} parent=11 // pred_check
          %p349 = pneg %p219
        $region42: #{tpu_custom_call.1} parent=11 // pred_check_branch
          %351 = sbr.rel (%p349) target = $region44
        $region43: #{tpu_custom_call.1} parent=11 // pred_region
          %s353 = ssub.s32 4096, 4096
          %354 = vsyncadd [#allocation15], %s353
          %s355 = sshll.u32 [#allocation16], 4
          %s356 = int_to_ptr.vmem [resolvable:$true] %s355
          %361 = dma.hbm_to_vmem [thread:$0]  %s8, 4096, %s356, [#allocation15], 64, 64, 4
        $region44: #{tpu_custom_call.1} parent=11 // pred_fallthru
          _
      $region12: #{tpu_custom_call.1} parent=5 // pred_fallthru
        _
      %p362 = scmp.lt.s32.totalorder %s25, 2
      // Predicated region
      $region45: #{tpu_custom_call.1} parent=5 // pred_check
        %p363 = pneg %p362
      $region46: #{tpu_custom_call.1} parent=5 // pred_check_branch
        %365 = sbr.rel (%p363) target = $region48
      $region47: #{tpu_custom_call.1} parent=5 // pred_region
        // Predicated region
        $region49: #{tpu_custom_call.1} parent=47 // pred_check
          %p366 = pneg %p45
        $region50: #{tpu_custom_call.1} parent=47 // pred_check_branch
          %368 = sbr.rel (%p366) target = $region52
        $region51: #{tpu_custom_call.1} parent=47 // pred_region
          %s369 = sand.u32 %s35, 1
          %s370 = scalar_lea.sflag [#allocation3], %s369
          %s371 = sand.u32 %s35, 1
          %s372 = smul.addr %s371, 16
          %s373 = scalar_lea.vmem [#allocation2], %s372
          %s375 = ssub.s32 256, 256
          %376 = vsyncadd %s370, %s375
          %s377 = smul.addr %s25, 2
          %s378 = smul.addr %s377, 128
          %s379 = scalar_lea.hbm %s0, %s378
          %s380 = sshll.u32 %s373, 4
          %s381 = int_to_ptr.vmem [resolvable:$true] %s380
          %386 = dma.hbm_to_vmem [thread:$0]  %s379, 256, %s381, %s370, 128, 128, 8
        $region52: #{tpu_custom_call.1} parent=47 // pred_fallthru
          _
      $region48: #{tpu_custom_call.1} parent=5 // pred_fallthru
        _
      %p387 = scmp.le.s32.totalorder 1, %s25
      %p388 = scmp.lt.s32.totalorder %s25, 3
      %p389 = pnand %p387, %p388
      %p390 = pneg %p389
      // Predicated region
      $region53: #{tpu_custom_call.1} parent=5 // pred_check
        _
      $region54: #{tpu_custom_call.1} parent=5 // pred_check_branch
        %392 = sbr.rel (%p389) target = $region56
      $region55: #{tpu_custom_call.1} parent=5 // pred_region
        %s393 = ssub.s32 %s25, 1
        %s394 = sand.u32 %s38, 1
        %s395 = scalar_lea.sflag [#allocation3], %s394
        %s396 = sand.u32 %s38, 1
        %s397 = smul.addr %s396, 16
        %s398 = scalar_lea.vmem [#allocation2], %s397
        // Predicated region
        $region57: #{tpu_custom_call.1} parent=55 // pred_check
          %p399 = pneg %p51
        $region58: #{tpu_custom_call.1} parent=55 // pred_check_branch
          %401 = sbr.rel (%p399) target = $region60
        $region59: #{tpu_custom_call.1} parent=55 // pred_region
          %402 = dma.done %s395, 256
        $region60: #{tpu_custom_call.1} parent=55 // pred_fallthru
          _
        // Predicated region
        $region61: #{tpu_custom_call.1} parent=55 // pred_check
          %p403 = pneg %p72
        $region62: #{tpu_custom_call.1} parent=55 // pred_check_branch
          %405 = sbr.rel (%p403) target = $region64
        $region63: #{tpu_custom_call.1} parent=55 // pred_region
          %406 = dma.done [#allocation6], 128
        $region64: #{tpu_custom_call.1} parent=55 // pred_fallthru
          _
        // Predicated region
        $region65: #{tpu_custom_call.1} parent=55 // pred_check
          %p407 = pneg %p93
        $region66: #{tpu_custom_call.1} parent=55 // pred_check_branch
          %409 = sbr.rel (%p407) target = $region68
        $region67: #{tpu_custom_call.1} parent=55 // pred_region
          %410 = dma.done [#allocation6], 128
        $region68: #{tpu_custom_call.1} parent=55 // pred_fallthru
          _
        // Predicated region
        $region69: #{tpu_custom_call.1} parent=55 // pred_check
          %p411 = pneg %p114
        $region70: #{tpu_custom_call.1} parent=55 // pred_check_branch
          %413 = sbr.rel (%p411) target = $region72
        $region71: #{tpu_custom_call.1} parent=55 // pred_region
          %414 = dma.done [#allocation9], 512
        $region72: #{tpu_custom_call.1} parent=55 // pred_fallthru
          _
        // Predicated region
        $region73: #{tpu_custom_call.1} parent=55 // pred_check
          %p415 = pneg %p135
        $region74: #{tpu_custom_call.1} parent=55 // pred_check_branch
          %417 = sbr.rel (%p415) target = $region76
        $region75: #{tpu_custom_call.1} parent=55 // pred_region
          %418 = dma.done [#allocation9], 2048
        $region76: #{tpu_custom_call.1} parent=55 // pred_fallthru
          _
        // Predicated region
        $region77: #{tpu_custom_call.1} parent=55 // pred_check
          %p419 = pneg %p156
        $region78: #{tpu_custom_call.1} parent=55 // pred_check_branch
          %421 = sbr.rel (%p419) target = $region80
        $region79: #{tpu_custom_call.1} parent=55 // pred_region
          %422 = dma.done [#allocation12], 512
        $region80: #{tpu_custom_call.1} parent=55 // pred_fallthru
          _
        // Predicated region
        $region81: #{tpu_custom_call.1} parent=55 // pred_check
          %p423 = pneg %p177
        $region82: #{tpu_custom_call.1} parent=55 // pred_check_branch
          %425 = sbr.rel (%p423) target = $region84
        $region83: #{tpu_custom_call.1} parent=55 // pred_region
          %426 = dma.done [#allocation12], 4096
        $region84: #{tpu_custom_call.1} parent=55 // pred_fallthru
          _
        // Predicated region
        $region85: #{tpu_custom_call.1} parent=55 // pred_check
          %p427 = pneg %p198
        $region86: #{tpu_custom_call.1} parent=55 // pred_check_branch
          %429 = sbr.rel (%p427) target = $region88
        $region87: #{tpu_custom_call.1} parent=55 // pred_region
          %430 = dma.done [#allocation15], 4096
        $region88: #{tpu_custom_call.1} parent=55 // pred_fallthru
          _
        // Predicated region
        $region89: #{tpu_custom_call.1} parent=55 // pred_check
          %p431 = pneg %p219
        $region90: #{tpu_custom_call.1} parent=55 // pred_check_branch
          %433 = sbr.rel (%p431) target = $region92
        $region91: #{tpu_custom_call.1} parent=55 // pred_region
          %434 = dma.done [#allocation15], 4096
        $region92: #{tpu_custom_call.1} parent=55 // pred_fallthru
          _
        %s435 = sand.u32 %s38, 1
        %s436 = scalar_lea.sflag [#allocation3], %s435
        %s437 = sand.u32 %s38, 1
        %s438 = smul.addr %s437, 16
        %s439 = scalar_lea.vmem [#allocation2], %s438
        %p440 = pneg %p51
        %p441 = pneg %p48
        %p442 = pneg %p72
        %p443 = pneg %p69
        %p444 = pneg %p93
        %p445 = pneg %p90
        %p446 = pneg %p114
        %p447 = pneg %p111
        %p448 = pneg %p135
        %p449 = pneg %p132
        %p450 = pneg %p156
        %p451 = pneg %p153
        %p452 = pneg %p177
        %p453 = pneg %p174
        %p454 = pneg %p198
        %p455 = pneg %p195
        %p456 = pneg %p219
        %p457 = pneg %p216
        %p458 = pneg %p245
        %p459 = pneg %p242
        %s460 = sand.u32 %s232, 1
        %s461 = scalar_lea.sflag [#allocation4], %s460
        %s462 = sand.u32 %s232, 1
        %s463 = smul.addr %s462, 16
        %s464 = scalar_lea.vmem [#allocation17], %s463
        %v466 = vld [vmem:[#allocation11] ss:$0 sm:$0xff]
        %v467 = vld [vmem:[#allocation11 + $0x1] ss:$0 sm:$0xff]
        %v468 = vld [vmem:[#allocation11 + $0x2] ss:$0 sm:$0xff]
        %v469 = vld [vmem:[#allocation11 + $0x3] ss:$0 sm:$0xff]
        %s470 = scalar_lea.vmem [#allocation11], 4
        %v471 = vld [vmem:[%s470] ss:$8 sm:$0xf]
        %v472 = vld [vmem:[%s398] sm:$0xff]
        %v473 = vld [vmem:[%s398 + $0x8] sm:$0xff]
        %v474 = vmul.f32 %v472, %v472
        %v475 = vmul.f32 %v473, %v473
        %v476 = vld [vmem:[#allocation10] sm:$0xff]
        %v477 = vld [vmem:[#allocation10 + $0x8] sm:$0xff]
        %v478 = vld [vmem:[#allocation10 + $0x10] sm:$0xff]
        %v479 = vld [vmem:[#allocation10 + $0x18] sm:$0xff]
        %v480 = vld [vmem:[#allocation10 + $0x20] sm:$0xff]
        %v481 = vld [vmem:[#allocation10 + $0x28] sm:$0xff]
        %v482 = vld [vmem:[#allocation10 + $0x30] sm:$0xff]
        %v483 = vld [vmem:[#allocation10 + $0x38] sm:$0xff]
        %v484 = vld [vmem:[#allocation10 + $0x40] sm:$0xff]
        %v485 = vld [vmem:[#allocation10 + $0x48] sm:$0xff]
        %v486 = vld [vmem:[#allocation10 + $0x50] sm:$0xff]
        %v487 = vld [vmem:[#allocation10 + $0x58] sm:$0xff]
        %v488 = vld [vmem:[#allocation10 + $0x60] sm:$0xff]
        %v489 = vld [vmem:[#allocation10 + $0x68] sm:$0xff]
        %v490 = vld [vmem:[#allocation10 + $0x70] sm:$0xff]
        %v491 = vld [vmem:[#allocation10 + $0x78] sm:$0xff]
        %492 = vmatprep.subr.mxu0 0.0
        %493 = vmatpush1.msra.mxu0 %v476
        %494 = vmatprep.subr.mxu0 0.0
        %495 = vmatpush1.msra.mxu0 %v477
        %496 = vmatprep.subr.mxu0 0.0
        %497 = vmatpush1.msra.mxu0 %v478
        %498 = vmatprep.subr.mxu0 0.0
        %499 = vmatpush1.msra.mxu0 %v479
        %500 = vmatprep.subr.mxu0 0.0
        %501 = vmatpush1.msra.mxu0 %v480
        %502 = vmatprep.subr.mxu0 0.0
        %503 = vmatpush1.msra.mxu0 %v481
        %504 = vmatprep.subr.mxu0 0.0
        %505 = vmatpush1.msra.mxu0 %v482
        %506 = vmatprep.subr.mxu0 0.0
        %507 = vmatpush1.msra.mxu0 %v483
        %508 = vmatprep.subr.mxu0 0.0
        %509 = vmatpush1.msra.mxu0 %v484
        %510 = vmatprep.subr.mxu0 0.0
        %511 = vmatpush1.msra.mxu0 %v485
        %512 = vmatprep.subr.mxu0 0.0
        %513 = vmatpush1.msra.mxu0 %v486
        %514 = vmatprep.subr.mxu0 0.0
        %515 = vmatpush1.msra.mxu0 %v487
        %516 = vmatprep.subr.mxu0 0.0
        %517 = vmatpush1.msra.mxu0 %v488
        %518 = vmatprep.subr.mxu0 0.0
        %519 = vmatpush1.msra.mxu0 %v489
        %520 = vmatprep.subr.mxu0 0.0
        %521 = vmatpush1.msra.mxu0 %v490
        %522 = vmatprep.subr.mxu0 0.0
        %523 = vmatpush1.msra.mxu0 %v491
        %524 = vmatprep.subr.mxu0 0.0
        %525 = vmatpush1.msra.mxu0 0.0
        %526 = vmatprep.subr.mxu0 0.0
        %527 = vmatpush1.msra.mxu0 0.0
        %528 = vmatprep.subr.mxu0 0.0
        %529 = vmatpush1.msra.mxu0 0.0
        %530 = vmatprep.subr.mxu0 0.0
        %531 = vmatpush1.msra.mxu0 0.0
        %532 = vmatprep.subr.mxu0 0.0
        %533 = vmatpush1.msra.mxu0 0.0
        %534 = vmatprep.subr.mxu0 0.0
        %535 = vmatpush1.msra.mxu0 0.0
        %536 = vmatprep.subr.mxu0 0.0
        %537 = vmatpush1.msra.mxu0 0.0
        %538 = vmatprep.subr.mxu0 0.0
        %539 = vmatpush1.msra.mxu0 0.0
        %540 = vmatprep.subr.mxu0 0.0
        %541 = vmatpush1.msra.mxu0 0.0
        %542 = vmatprep.subr.mxu0 0.0
        %543 = vmatpush1.msra.mxu0 0.0
        %544 = vmatprep.subr.mxu0 0.0
        %545 = vmatpush1.msra.mxu0 0.0
        %546 = vmatprep.subr.mxu0 0.0
        %547 = vmatpush1.msra.mxu0 0.0
        %548 = vmatprep.subr.mxu0 0.0
        %549 = vmatpush1.msra.mxu0 0.0
        %550 = vmatprep.subr.mxu0 0.0
        %551 = vmatpush1.msra.mxu0 0.0
        %552 = vmatprep.subr.mxu0 0.0
        %553 = vmatpush1.msra.mxu0 0.0
        %554 = vmatprep.subr.mxu0 0.0
        %555 = vmatpush1.msra.mxu0 0.0
        %556 = vmatprep.mubr.f32.mxu0 0.0
        %557 = vmatmul.mubr.f32.gmra.mrb[0].mxu0 %v472
        %v558 = vpop.f32.mrb[0].mxu0
        %v559 = vadd.f32 0.0, %v558
        %v560 = vpop.f32.mrb[0].mxu0
        %561 = vmatprep.mubr.f32.mxu0 0.0
        %562 = vmatmul.mubr.f32.gmra.mrb[0].mxu0 %v473
        %v563 = vpop.f32.mrb[0].mxu0
        %v564 = vadd.f32 0.0, %v563
        %v565 = vpop.f32.mrb[0].mxu0
        %566 = vmatprep.mubr.f32.mxu0 0.0
        %567 = vmatmul.mubr.f32.gmra.mrb[0].mxu0 %v474
        %v568 = vpop.f32.mrb[0].mxu0
        %v569 = vadd.f32 0.0, %v568
        %v570 = vpop.f32.mrb[0].mxu0
        %571 = vmatprep.mubr.f32.mxu0 0.0
        %572 = vmatmul.mubr.f32.gmra.mrb[0].mxu0 %v475
        %v573 = vpop.f32.mrb[0].mxu0
        %v574 = vadd.f32 0.0, %v573
        %v575 = vpop.f32.mrb[0].mxu0
        %576 = vdwg.mxu0
        %v577 = vmul.f32 %v559, %v559
        %v578 = vmul.f32 %v564, %v564
        %v579 = vsub.f32 %v569, %v577
        %v580 = vsub.f32 %v574, %v578
        %v581 = vsub.f32 %v472, %v559
        %v582 = vsub.f32 %v473, %v564
        %v583 = vadd.f32 %v579, 1e-05
        %v584 = vadd.f32 %v580, 1e-05
        %v585 = vrsqrt.pop %v583
        %v586 = vrsqrt.pop %v584
        %v587 = vmul.f32 %v581, %v585
        %v588 = vmul.f32 %v582, %v586
        %v589 = vmul.f32 %v587, %v466
        %v590 = vmul.f32 %v588, %v466
        %v591 = vadd.f32 %v589, %v467
        %v592 = vadd.f32 %v590, %v467
        %v593 = vld [vmem:[#allocation5] sm:$0xf]
        %v594 = vld [vmem:[#allocation5 + $0x4] sm:$0xf]
        %v595 = vpack.c.bf16 %v592, %v591
        %v598 = vunpack.c.l.b16 %v593
        %v599 = vunpack.c.l.b16 %v594
        %v600 = vpack.c.b16 %v599, %v598
        %vm601 = vcmask 130048
        %v603 = vsel %vm601, %v600, 0
        %605 = vmatprep.subr.bf16.mxu0 0
        %606 = vmatpush1.bf16.msra.mxu0 %v595
        %607 = vmatprep.subr.bf16.mxu0 0
        %608 = vmatpush1.bf16.msra.mxu0 0
        %609 = vmatprep.subr.bf16.mxu0 0
        %610 = vmatpush1.bf16.msra.mxu0 0
        %611 = vmatprep.subr.bf16.mxu0 0
        %612 = vmatpush1.bf16.msra.mxu0 0
        %613 = vmatprep.subr.bf16.mxu0 0
        %614 = vmatpush1.bf16.msra.mxu0 0
        %615 = vmatprep.subr.bf16.mxu0 0
        %616 = vmatpush1.bf16.msra.mxu0 0
        %617 = vmatprep.subr.bf16.mxu0 0
        %618 = vmatpush1.bf16.msra.mxu0 0
        %619 = vmatprep.subr.bf16.mxu0 0
        %620 = vmatpush1.bf16.msra.mxu0 0
        %621 = vmatprep.subr.bf16.mxu0 0
        %622 = vmatpush1.bf16.msra.mxu0 0
        %623 = vmatprep.subr.bf16.mxu0 0
        %624 = vmatpush1.bf16.msra.mxu0 0
        %625 = vmatprep.subr.bf16.mxu0 0
        %626 = vmatpush1.bf16.msra.mxu0 0
        %627 = vmatprep.subr.bf16.mxu0 0
        %628 = vmatpush1.bf16.msra.mxu0 0
        %629 = vmatprep.subr.bf16.mxu0 0
        %630 = vmatpush1.bf16.msra.mxu0 0
        %631 = vmatprep.subr.bf16.mxu0 0
        %632 = vmatpush1.bf16.msra.mxu0 0
        %633 = vmatprep.subr.bf16.mxu0 0
        %634 = vmatpush1.bf16.msra.mxu0 0
        %635 = vmatprep.subr.bf16.mxu0 0
        %636 = vmatpush1.bf16.msra.mxu0 0
        %637 = vmatprep.mubr.bf16.mxu0 0
        %638 = vmatmul.mubr.bf16.gmra.mrb[0].mxu0 %v603
        %v639 = vpop.f32.mrb[0].mxu0
        %v640 = vadd.f32 0.0, %v639
        %v641 = vpop.f32.mrb[0].mxu0
        %v642 = vpop.f32.mrb[0].mxu0
        %v643 = vadd.f32 0.0, %v642
        %v644 = vpop.f32.mrb[0].mxu0
        %645 = vdwg.mxu0
        %v646 = vpack.c.bf16 %v643, %v640
        %v647 = vld [vmem:[#allocation8] sm:$0xf]
        %v648 = vld [vmem:[#allocation8 + $0x10] sm:$0xf]
        %v651 = vunpack.c.l.b16 %v647
        %v652 = vunpack.c.l.b16 %v648
        %v653 = vpack.c.b16 %v652, %v651
        %v655 = vmul.bf16 %v646, %v653
        %v656 = vld [vmem:[#allocation8 + $0x4] sm:$0xf]
        %v657 = vld [vmem:[#allocation8 + $0x14] sm:$0xf]
        %v660 = vunpack.c.l.b16 %v656
        %v661 = vunpack.c.l.b16 %v657
        %v662 = vpack.c.b16 %v661, %v660
        %v664 = vmul.bf16 %v646, %v662
        %v665 = vld [vmem:[#allocation8 + $0x8] sm:$0xf]
        %v666 = vld [vmem:[#allocation8 + $0x18] sm:$0xf]
        %v669 = vunpack.c.l.b16 %v665
        %v670 = vunpack.c.l.b16 %v666
        %v671 = vpack.c.b16 %v670, %v669
        %v673 = vmul.bf16 %v646, %v671
        %v674 = vld [vmem:[#allocation8 + $0xc] sm:$0xf]
        %v675 = vld [vmem:[#allocation8 + $0x1c] sm:$0xf]
        %v678 = vunpack.c.l.b16 %v674
        %v679 = vunpack.c.l.b16 %v675
        %v680 = vpack.c.b16 %v679, %v678
        %v682 = vmul.bf16 %v646, %v680
        %v683 = vld [vmem:[#allocation13] sm:$0xf]
        %v684 = vld [vmem:[#allocation13 + $0x4] sm:$0xf]
        %v685 = vld [vmem:[#allocation13 + $0x8] sm:$0xf]
        %v686 = vld [vmem:[#allocation13 + $0xc] sm:$0xf]
        %v687 = vld [vmem:[#allocation13 + $0x10] sm:$0xf]
        %v688 = vld [vmem:[#allocation13 + $0x14] sm:$0xf]
        %v689 = vld [vmem:[#allocation13 + $0x18] sm:$0xf]
        %v690 = vld [vmem:[#allocation13 + $0x1c] sm:$0xf]
        %v691 = vld [vmem:[#allocation13 + $0x20] sm:$0xf]
        %v692 = vld [vmem:[#allocation13 + $0x24] sm:$0xf]
        %v693 = vld [vmem:[#allocation13 + $0x28] sm:$0xf]
        %v694 = vld [vmem:[#allocation13 + $0x2c] sm:$0xf]
        %v695 = vld [vmem:[#allocation13 + $0x30] sm:$0xf]
        %v696 = vld [vmem:[#allocation13 + $0x34] sm:$0xf]
        %v697 = vld [vmem:[#allocation13 + $0x38] sm:$0xf]
        %v698 = vld [vmem:[#allocation13 + $0x3c] sm:$0xf]
        %v699 = vld [vmem:[#allocation13 + $0x40] sm:$0xf]
        %v700 = vld [vmem:[#allocation13 + $0x44] sm:$0xf]
        %v701 = vld [vmem:[#allocation13 + $0x48] sm:$0xf]
        %v702 = vld [vmem:[#allocation13 + $0x4c] sm:$0xf]
        %v703 = vld [vmem:[#allocation13 + $0x50] sm:$0xf]
        %v704 = vld [vmem:[#allocation13 + $0x54] sm:$0xf]
        %v705 = vld [vmem:[#allocation13 + $0x58] sm:$0xf]
        %v706 = vld [vmem:[#allocation13 + $0x5c] sm:$0xf]
        %v707 = vld [vmem:[#allocation13 + $0x60] sm:$0xf]
        %v708 = vld [vmem:[#allocation13 + $0x64] sm:$0xf]
        %v709 = vld [vmem:[#allocation13 + $0x68] sm:$0xf]
        %v710 = vld [vmem:[#allocation13 + $0x6c] sm:$0xf]
        %v711 = vld [vmem:[#allocation13 + $0x70] sm:$0xf]
        %v712 = vld [vmem:[#allocation13 + $0x74] sm:$0xf]
        %v713 = vld [vmem:[#allocation13 + $0x78] sm:$0xf]
        %v714 = vld [vmem:[#allocation13 + $0x7c] sm:$0xf]
        %v715 = vld [vmem:[#allocation13 + $0x80] sm:$0xf]
        %v716 = vld [vmem:[#allocation13 + $0x84] sm:$0xf]
        %v717 = vld [vmem:[#allocation13 + $0x88] sm:$0xf]
        %v718 = vld [vmem:[#allocation13 + $0x8c] sm:$0xf]
        %v719 = vld [vmem:[#allocation13 + $0x90] sm:$0xf]
        %v720 = vld [vmem:[#allocation13 + $0x94] sm:$0xf]
        %v721 = vld [vmem:[#allocation13 + $0x98] sm:$0xf]
        %v722 = vld [vmem:[#allocation13 + $0x9c] sm:$0xf]
        %v723 = vld [vmem:[#allocation13 + $0xa0] sm:$0xf]
        %v724 = vld [vmem:[#allocation13 + $0xa4] sm:$0xf]
        %v725 = vld [vmem:[#allocation13 + $0xa8] sm:$0xf]
        %v726 = vld [vmem:[#allocation13 + $0xac] sm:$0xf]
        %v727 = vld [vmem:[#allocation13 + $0xb0] sm:$0xf]
        %v728 = vld [vmem:[#allocation13 + $0xb4] sm:$0xf]
        %v729 = vld [vmem:[#allocation13 + $0xb8] sm:$0xf]
        %v730 = vld [vmem:[#allocation13 + $0xbc] sm:$0xf]
        %v731 = vld [vmem:[#allocation13 + $0xc0] sm:$0xf]
        %v732 = vld [vmem:[#allocation13 + $0xc4] sm:$0xf]
        %v733 = vld [vmem:[#allocation13 + $0xc8] sm:$0xf]
        %v734 = vld [vmem:[#allocation13 + $0xcc] sm:$0xf]
        %v735 = vld [vmem:[#allocation13 + $0xd0] sm:$0xf]
        %v736 = vld [vmem:[#allocation13 + $0xd4] sm:$0xf]
        %v737 = vld [vmem:[#allocation13 + $0xd8] sm:$0xf]
        %v738 = vld [vmem:[#allocation13 + $0xdc] sm:$0xf]
        %v739 = vld [vmem:[#allocation13 + $0xe0] sm:$0xf]
        %v740 = vld [vmem:[#allocation13 + $0xe4] sm:$0xf]
        %v741 = vld [vmem:[#allocation13 + $0xe8] sm:$0xf]
        %v742 = vld [vmem:[#allocation13 + $0xec] sm:$0xf]
        %v743 = vld [vmem:[#allocation13 + $0xf0] sm:$0xf]
        %v744 = vld [vmem:[#allocation13 + $0xf4] sm:$0xf]
        %v745 = vld [vmem:[#allocation13 + $0xf8] sm:$0xf]
        %v746 = vld [vmem:[#allocation13 + $0xfc] sm:$0xf]
        %v811 = vunpack.c.l.b16 %v683
        %v812 = vunpack.c.l.b16 %v684
        %v813 = vunpack.c.l.b16 %v685
        %v814 = vunpack.c.l.b16 %v686
        %v815 = vunpack.c.l.b16 %v687
        %v816 = vunpack.c.l.b16 %v688
        %v817 = vunpack.c.l.b16 %v689
        %v818 = vunpack.c.l.b16 %v690
        %v819 = vunpack.c.l.b16 %v691
        %v820 = vunpack.c.l.b16 %v692
        %v821 = vunpack.c.l.b16 %v693
        %v822 = vunpack.c.l.b16 %v694
        %v823 = vunpack.c.l.b16 %v695
        %v824 = vunpack.c.l.b16 %v696
        %v825 = vunpack.c.l.b16 %v697
        %v826 = vunpack.c.l.b16 %v698
        %v827 = vunpack.c.l.b16 %v699
        %v828 = vunpack.c.l.b16 %v700
        %v829 = vunpack.c.l.b16 %v701
        %v830 = vunpack.c.l.b16 %v702
        %v831 = vunpack.c.l.b16 %v703
        %v832 = vunpack.c.l.b16 %v704
        %v833 = vunpack.c.l.b16 %v705
        %v834 = vunpack.c.l.b16 %v706
        %v835 = vunpack.c.l.b16 %v707
        %v836 = vunpack.c.l.b16 %v708
        %v837 = vunpack.c.l.b16 %v709
        %v838 = vunpack.c.l.b16 %v710
        %v839 = vunpack.c.l.b16 %v711
        %v840 = vunpack.c.l.b16 %v712
        %v841 = vunpack.c.l.b16 %v713
        %v842 = vunpack.c.l.b16 %v714
        %v843 = vunpack.c.l.b16 %v715
        %v844 = vunpack.c.l.b16 %v716
        %v845 = vunpack.c.l.b16 %v717
        %v846 = vunpack.c.l.b16 %v718
        %v847 = vunpack.c.l.b16 %v719
        %v848 = vunpack.c.l.b16 %v720
        %v849 = vunpack.c.l.b16 %v721
        %v850 = vunpack.c.l.b16 %v722
        %v851 = vunpack.c.l.b16 %v723
        %v852 = vunpack.c.l.b16 %v724
        %v853 = vunpack.c.l.b16 %v725
        %v854 = vunpack.c.l.b16 %v726
        %v855 = vunpack.c.l.b16 %v727
        %v856 = vunpack.c.l.b16 %v728
        %v857 = vunpack.c.l.b16 %v729
        %v858 = vunpack.c.l.b16 %v730
        %v859 = vunpack.c.l.b16 %v731
        %v860 = vunpack.c.l.b16 %v732
        %v861 = vunpack.c.l.b16 %v733
        %v862 = vunpack.c.l.b16 %v734
        %v863 = vunpack.c.l.b16 %v735
        %v864 = vunpack.c.l.b16 %v736
        %v865 = vunpack.c.l.b16 %v737
        %v866 = vunpack.c.l.b16 %v738
        %v867 = vunpack.c.l.b16 %v739
        %v868 = vunpack.c.l.b16 %v740
        %v869 = vunpack.c.l.b16 %v741
        %v870 = vunpack.c.l.b16 %v742
        %v871 = vunpack.c.l.b16 %v743
        %v872 = vunpack.c.l.b16 %v744
        %v873 = vunpack.c.l.b16 %v745
        %v874 = vunpack.c.l.b16 %v746
        %v875 = vpack.c.b16 %v812, %v811
        %v876 = vpack.c.b16 %v814, %v813
        %v877 = vpack.c.b16 %v816, %v815
        %v878 = vpack.c.b16 %v818, %v817
        %v879 = vpack.c.b16 %v820, %v819
        %v880 = vpack.c.b16 %v822, %v821
        %v881 = vpack.c.b16 %v824, %v823
        %v882 = vpack.c.b16 %v826, %v825
        %v883 = vpack.c.b16 %v828, %v827
        %v884 = vpack.c.b16 %v830, %v829
        %v885 = vpack.c.b16 %v832, %v831
        %v886 = vpack.c.b16 %v834, %v833
        %v887 = vpack.c.b16 %v836, %v835
        %v888 = vpack.c.b16 %v838, %v837
        %v889 = vpack.c.b16 %v840, %v839
        %v890 = vpack.c.b16 %v842, %v841
        %v891 = vpack.c.b16 %v844, %v843
        %v892 = vpack.c.b16 %v846, %v845
        %v893 = vpack.c.b16 %v848, %v847
        %v894 = vpack.c.b16 %v850, %v849
        %v895 = vpack.c.b16 %v852, %v851
        %v896 = vpack.c.b16 %v854, %v853
        %v897 = vpack.c.b16 %v856, %v855
        %v898 = vpack.c.b16 %v858, %v857
        %v899 = vpack.c.b16 %v860, %v859
        %v900 = vpack.c.b16 %v862, %v861
        %v901 = vpack.c.b16 %v864, %v863
        %v902 = vpack.c.b16 %v866, %v865
        %v903 = vpack.c.b16 %v868, %v867
        %v904 = vpack.c.b16 %v870, %v869
        %v905 = vpack.c.b16 %v872, %v871
        %v906 = vpack.c.b16 %v874, %v873
        %939 = vmatprep.subr.bf16.mxu0 0
        %940 = vmatpush1.bf16.msra.mxu0 %v875
        %941 = vmatprep.subr.bf16.mxu0 0
        %942 = vmatpush1.bf16.msra.mxu0 %v876
        %943 = vmatprep.subr.bf16.mxu0 0
        %944 = vmatpush1.bf16.msra.mxu0 %v877
        %945 = vmatprep.subr.bf16.mxu0 0
        %946 = vmatpush1.bf16.msra.mxu0 %v878
        %947 = vmatprep.subr.bf16.mxu0 0
        %948 = vmatpush1.bf16.msra.mxu0 %v879
        %949 = vmatprep.subr.bf16.mxu0 0
        %950 = vmatpush1.bf16.msra.mxu0 %v880
        %951 = vmatprep.subr.bf16.mxu0 0
        %952 = vmatpush1.bf16.msra.mxu0 %v881
        %953 = vmatprep.subr.bf16.mxu0 0
        %954 = vmatpush1.bf16.msra.mxu0 %v882
        %955 = vmatprep.subr.bf16.mxu0 0
        %956 = vmatpush1.bf16.msra.mxu0 %v883
        %957 = vmatprep.subr.bf16.mxu0 0
        %958 = vmatpush1.bf16.msra.mxu0 %v884
        %959 = vmatprep.subr.bf16.mxu0 0
        %960 = vmatpush1.bf16.msra.mxu0 %v885
        %961 = vmatprep.subr.bf16.mxu0 0
        %962 = vmatpush1.bf16.msra.mxu0 %v886
        %963 = vmatprep.subr.bf16.mxu0 0
        %964 = vmatpush1.bf16.msra.mxu0 %v887
        %965 = vmatprep.subr.bf16.mxu0 0
        %966 = vmatpush1.bf16.msra.mxu0 %v888
        %967 = vmatprep.subr.bf16.mxu0 0
        %968 = vmatpush1.bf16.msra.mxu0 %v889
        %969 = vmatprep.subr.bf16.mxu0 0
        %970 = vmatpush1.bf16.msra.mxu0 %v890
        %971 = vmatprep.mubr.bf16.mxu0 %v664
        %972 = vmatmul.mubr.bf16.gmra.mrb[0].mxu0 %v655
        %v973 = vpop.f32.mrb[0].mxu0
        %v974 = vadd.f32 %v468, %v973
        %v975 = vpop.f32.mrb[0].mxu0
        %v976 = vpop.f32.mrb[0].mxu0
        %v977 = vadd.f32 %v468, %v976
        %v978 = vpop.f32.mrb[0].mxu0
        %979 = vdwg.mxu0
        %980 = vmatprep.subr.bf16.mxu0 0
        %981 = vmatpush1.bf16.msra.mxu0 %v891
        %982 = vmatprep.subr.bf16.mxu0 0
        %983 = vmatpush1.bf16.msra.mxu0 %v892
        %984 = vmatprep.subr.bf16.mxu0 0
        %985 = vmatpush1.bf16.msra.mxu0 %v893
        %986 = vmatprep.subr.bf16.mxu0 0
        %987 = vmatpush1.bf16.msra.mxu0 %v894
        %988 = vmatprep.subr.bf16.mxu0 0
        %989 = vmatpush1.bf16.msra.mxu0 %v895
        %990 = vmatprep.subr.bf16.mxu0 0
        %991 = vmatpush1.bf16.msra.mxu0 %v896
        %992 = vmatprep.subr.bf16.mxu0 0
        %993 = vmatpush1.bf16.msra.mxu0 %v897
        %994 = vmatprep.subr.bf16.mxu0 0
        %995 = vmatpush1.bf16.msra.mxu0 %v898
        %996 = vmatprep.subr.bf16.mxu0 0
        %997 = vmatpush1.bf16.msra.mxu0 %v899
        %998 = vmatprep.subr.bf16.mxu0 0
        %999 = vmatpush1.bf16.msra.mxu0 %v900
        %1000 = vmatprep.subr.bf16.mxu0 0
        %1001 = vmatpush1.bf16.msra.mxu0 %v901
        %1002 = vmatprep.subr.bf16.mxu0 0
        %1003 = vmatpush1.bf16.msra.mxu0 %v902
        %1004 = vmatprep.subr.bf16.mxu0 0
        %1005 = vmatpush1.bf16.msra.mxu0 %v903
        %1006 = vmatprep.subr.bf16.mxu0 0
        %1007 = vmatpush1.bf16.msra.mxu0 %v904
        %1008 = vmatprep.subr.bf16.mxu0 0
        %1009 = vmatpush1.bf16.msra.mxu0 %v905
        %1010 = vmatprep.subr.bf16.mxu0 0
        %1011 = vmatpush1.bf16.msra.mxu0 %v906
        %1012 = vmatprep.mubr.bf16.mxu0 %v682
        %1013 = vmatmul.mubr.bf16.gmra.mrb[0].mxu0 %v673
        %v1014 = vpop.f32.mrb[0].mxu0
        %v1015 = vadd.f32 %v974, %v1014
        %v1016 = vpop.f32.mrb[0].mxu0
        %v1017 = vpop.f32.mrb[0].mxu0
        %v1018 = vadd.f32 %v977, %v1017
        %v1019 = vpop.f32.mrb[0].mxu0
        %1020 = vdwg.mxu0
        %v1021 = vld [vmem:[#allocation7] sm:$0xf]
        %v1022 = vld [vmem:[#allocation7 + $0x4] sm:$0xf]
        %v1023 = vpack.c.bf16 %v1018, %v1015
        %v1026 = vunpack.c.l.b16 %v1021
        %v1027 = vunpack.c.l.b16 %v1022
        %v1028 = vpack.c.b16 %v1027, %v1026
        %v1030 = vsel %vm601, %v1028, 0
        %1032 = vmatprep.subr.bf16.mxu0 0
        %1033 = vmatpush1.bf16.msra.mxu0 %v1023
        %1034 = vmatprep.subr.bf16.mxu0 0
        %1035 = vmatpush1.bf16.msra.mxu0 0
        %1036 = vmatprep.subr.bf16.mxu0 0
        %1037 = vmatpush1.bf16.msra.mxu0 0
        %1038 = vmatprep.subr.bf16.mxu0 0
        %1039 = vmatpush1.bf16.msra.mxu0 0
        %1040 = vmatprep.subr.bf16.mxu0 0
        %1041 = vmatpush1.bf16.msra.mxu0 0
        %1042 = vmatprep.subr.bf16.mxu0 0
        %1043 = vmatpush1.bf16.msra.mxu0 0
        %1044 = vmatprep.subr.bf16.mxu0 0
        %1045 = vmatpush1.bf16.msra.mxu0 0
        %1046 = vmatprep.subr.bf16.mxu0 0
        %1047 = vmatpush1.bf16.msra.mxu0 0
        %1048 = vmatprep.subr.bf16.mxu0 0
        %1049 = vmatpush1.bf16.msra.mxu0 0
        %1050 = vmatprep.subr.bf16.mxu0 0
        %1051 = vmatpush1.bf16.msra.mxu0 0
        %1052 = vmatprep.subr.bf16.mxu0 0
        %1053 = vmatpush1.bf16.msra.mxu0 0
        %1054 = vmatprep.subr.bf16.mxu0 0
        %1055 = vmatpush1.bf16.msra.mxu0 0
        %1056 = vmatprep.subr.bf16.mxu0 0
        %1057 = vmatpush1.bf16.msra.mxu0 0
        %1058 = vmatprep.subr.bf16.mxu0 0
        %1059 = vmatpush1.bf16.msra.mxu0 0
        %1060 = vmatprep.subr.bf16.mxu0 0
        %1061 = vmatpush1.bf16.msra.mxu0 0
        %1062 = vmatprep.subr.bf16.mxu0 0
        %1063 = vmatpush1.bf16.msra.mxu0 0
        %1064 = vmatprep.mubr.bf16.mxu0 0
        %1065 = vmatmul.mubr.bf16.gmra.mrb[0].mxu0 %v1030
        %v1066 = vpop.f32.mrb[0].mxu0
        %v1067 = vadd.f32 0.0, %v1066
        %v1068 = vpop.f32.mrb[0].mxu0
        %v1069 = vpop.f32.mrb[0].mxu0
        %v1070 = vadd.f32 0.0, %v1069
        %v1071 = vpop.f32.mrb[0].mxu0
        %1072 = vdwg.mxu0
        %v1073 = vmul.f32 %v1067, 0.5
        %v1074 = vmul.f32 %v1070, 0.5
        %v1075 = vmul.f32 %v1067, 0.044715
        %v1076 = vmul.f32 %v1070, 0.044715
        %v1077 = vmul.f32 %v1075, %v1067
        %v1078 = vmul.f32 %v1076, %v1070
        %v1079 = vmul.f32 %v1077, %v1067
        %v1080 = vmul.f32 %v1078, %v1070
        %v1081 = vadd.f32 %v1067, %v1079
        %v1082 = vadd.f32 %v1070, %v1080
        %v1083 = vmul.f32 %v1081, 0.7978846
        %v1084 = vmul.f32 %v1082, 0.7978846
        %v1085 = vtanh.pop %v1083
        %v1086 = vtanh.pop %v1084
        %v1087 = vadd.f32 %v1085, 1.0
        %v1088 = vadd.f32 %v1086, 1.0
        %v1089 = vmul.f32 %v1073, %v1087
        %v1090 = vmul.f32 %v1074, %v1088
        %v1091 = vpack.c.bf16 %v1090, %v1089
        %v1092 = vld [vmem:[#allocation14] sm:$0xff]
        %v1093 = vld [vmem:[#allocation14 + $0x8] sm:$0xff]
        %v1094 = vld [vmem:[#allocation14 + $0x10] sm:$0xff]
        %v1095 = vld [vmem:[#allocation14 + $0x18] sm:$0xff]
        %v1096 = vld [vmem:[#allocation14 + $0x20] sm:$0xff]
        %v1097 = vld [vmem:[#allocation14 + $0x28] sm:$0xff]
        %v1098 = vld [vmem:[#allocation14 + $0x30] sm:$0xff]
        %v1099 = vld [vmem:[#allocation14 + $0x38] sm:$0xff]
        %v1100 = vld [vmem:[#allocation14 + $0x40] sm:$0xff]
        %v1101 = vld [vmem:[#allocation14 + $0x48] sm:$0xff]
        %v1102 = vld [vmem:[#allocation14 + $0x50] sm:$0xff]
        %v1103 = vld [vmem:[#allocation14 + $0x58] sm:$0xff]
        %v1104 = vld [vmem:[#allocation14 + $0x60] sm:$0xff]
        %v1105 = vld [vmem:[#allocation14 + $0x68] sm:$0xff]
        %v1106 = vld [vmem:[#allocation14 + $0x70] sm:$0xff]
        %v1107 = vld [vmem:[#allocation14 + $0x78] sm:$0xff]
        %v1108 = vld [vmem:[#allocation14 + $0x80] sm:$0xff]
        %v1109 = vld [vmem:[#allocation14 + $0x88] sm:$0xff]
        %v1110 = vld [vmem:[#allocation14 + $0x90] sm:$0xff]
        %v1111 = vld [vmem:[#allocation14 + $0x98] sm:$0xff]
        %v1112 = vld [vmem:[#allocation14 + $0xa0] sm:$0xff]
        %v1113 = vld [vmem:[#allocation14 + $0xa8] sm:$0xff]
        %v1114 = vld [vmem:[#allocation14 + $0xb0] sm:$0xff]
        %v1115 = vld [vmem:[#allocation14 + $0xb8] sm:$0xff]
        %v1116 = vld [vmem:[#allocation14 + $0xc0] sm:$0xff]
        %v1117 = vld [vmem:[#allocation14 + $0xc8] sm:$0xff]
        %v1118 = vld [vmem:[#allocation14 + $0xd0] sm:$0xff]
        %v1119 = vld [vmem:[#allocation14 + $0xd8] sm:$0xff]
        %v1120 = vld [vmem:[#allocation14 + $0xe0] sm:$0xff]
        %v1121 = vld [vmem:[#allocation14 + $0xe8] sm:$0xff]
        %v1122 = vld [vmem:[#allocation14 + $0xf0] sm:$0xff]
        %v1123 = vld [vmem:[#allocation14 + $0xf8] sm:$0xff]
        %v1125 = vlaneseq
        %v1126 = vshrl.u32 %v1125, 7
        %v1127 = vsub.s32 0, %v1126
        %v1128 = vrot.slane %v471, %v1127
        %v1129 = vlaneseq
        %v1130 = vshrl.u32 %v1129, 7
        %v1131 = vsub.s32 1, %v1130
        %v1132 = vrot.slane %v471, %v1131
        %v1133 = vlaneseq
        %v1134 = vshrl.u32 %v1133, 7
        %v1135 = vsub.s32 2, %v1134
        %v1136 = vrot.slane %v471, %v1135
        %v1137 = vlaneseq
        %v1138 = vshrl.u32 %v1137, 7
        %v1139 = vsub.s32 3, %v1138
        %v1140 = vrot.slane %v471, %v1139
        %v1177 = vunpack.c.l.b16 %v1092
        %v1178 = vunpack.c.h.b16 %v1092
        %v1179 = vunpack.c.l.b16 %v1093
        %v1180 = vunpack.c.h.b16 %v1093
        %v1181 = vunpack.c.l.b16 %v1094
        %v1182 = vunpack.c.h.b16 %v1094
        %v1183 = vunpack.c.l.b16 %v1095
        %v1184 = vunpack.c.h.b16 %v1095
        %v1185 = vunpack.c.l.b16 %v1096
        %v1186 = vunpack.c.h.b16 %v1096
        %v1187 = vunpack.c.l.b16 %v1097
        %v1188 = vunpack.c.h.b16 %v1097
        %v1189 = vunpack.c.l.b16 %v1098
        %v1190 = vunpack.c.h.b16 %v1098
        %v1191 = vunpack.c.l.b16 %v1099
        %v1192 = vunpack.c.h.b16 %v1099
        %v1193 = vunpack.c.l.b16 %v1100
        %v1194 = vunpack.c.h.b16 %v1100
        %v1195 = vunpack.c.l.b16 %v1101
        %v1196 = vunpack.c.h.b16 %v1101
        %v1197 = vunpack.c.l.b16 %v1102
        %v1198 = vunpack.c.h.b16 %v1102
        %v1199 = vunpack.c.l.b16 %v1103
        %v1200 = vunpack.c.h.b16 %v1103
        %v1201 = vunpack.c.l.b16 %v1104
        %v1202 = vunpack.c.h.b16 %v1104
        %v1203 = vunpack.c.l.b16 %v1105
        %v1204 = vunpack.c.h.b16 %v1105
        %v1205 = vunpack.c.l.b16 %v1106
        %v1206 = vunpack.c.h.b16 %v1106
        %v1207 = vunpack.c.l.b16 %v1107
        %v1208 = vunpack.c.h.b16 %v1107
        %v1209 = vunpack.c.l.b16 %v1108
        %v1210 = vunpack.c.h.b16 %v1108
        %v1211 = vunpack.c.l.b16 %v1109
        %v1212 = vunpack.c.h.b16 %v1109
        %v1213 = vunpack.c.l.b16 %v1110
        %v1214 = vunpack.c.h.b16 %v1110
        %v1215 = vunpack.c.l.b16 %v1111
        %v1216 = vunpack.c.h.b16 %v1111
        %v1217 = vunpack.c.l.b16 %v1112
        %v1218 = vunpack.c.h.b16 %v1112
        %v1219 = vunpack.c.l.b16 %v1113
        %v1220 = vunpack.c.h.b16 %v1113
        %v1221 = vunpack.c.l.b16 %v1114
        %v1222 = vunpack.c.h.b16 %v1114
        %v1223 = vunpack.c.l.b16 %v1115
        %v1224 = vunpack.c.h.b16 %v1115
        %v1225 = vunpack.c.l.b16 %v1116
        %v1226 = vunpack.c.h.b16 %v1116
        %v1227 = vunpack.c.l.b16 %v1117
        %v1228 = vunpack.c.h.b16 %v1117
        %v1229 = vunpack.c.l.b16 %v1118
        %v1230 = vunpack.c.h.b16 %v1118
        %v1231 = vunpack.c.l.b16 %v1119
        %v1232 = vunpack.c.h.b16 %v1119
        %v1233 = vunpack.c.l.b16 %v1120
        %v1234 = vunpack.c.h.b16 %v1120
        %v1235 = vunpack.c.l.b16 %v1121
        %v1236 = vunpack.c.h.b16 %v1121
        %v1237 = vunpack.c.l.b16 %v1122
        %v1238 = vunpack.c.h.b16 %v1122
        %v1239 = vunpack.c.l.b16 %v1123
        %v1240 = vunpack.c.h.b16 %v1123
        %v1241 = vpack.c.b16 %v1181, %v1177
        %v1242 = vpack.c.b16 %v1182, %v1178
        %v1243 = vpack.c.b16 %v1183, %v1179
        %v1244 = vpack.c.b16 %v1184, %v1180
        %v1245 = vpack.c.b16 %v1189, %v1185
        %v1246 = vpack.c.b16 %v1190, %v1186
        %v1247 = vpack.c.b16 %v1191, %v1187
        %v1248 = vpack.c.b16 %v1192, %v1188
        %v1249 = vpack.c.b16 %v1197, %v1193
        %v1250 = vpack.c.b16 %v1198, %v1194
        %v1251 = vpack.c.b16 %v1199, %v1195
        %v1252 = vpack.c.b16 %v1200, %v1196
        %v1253 = vpack.c.b16 %v1205, %v1201
        %v1254 = vpack.c.b16 %v1206, %v1202
        %v1255 = vpack.c.b16 %v1207, %v1203
        %v1256 = vpack.c.b16 %v1208, %v1204
        %v1257 = vpack.c.b16 %v1213, %v1209
        %v1258 = vpack.c.b16 %v1214, %v1210
        %v1259 = vpack.c.b16 %v1215, %v1211
        %v1260 = vpack.c.b16 %v1216, %v1212
        %v1261 = vpack.c.b16 %v1221, %v1217
        %v1262 = vpack.c.b16 %v1222, %v1218
        %v1263 = vpack.c.b16 %v1223, %v1219
        %v1264 = vpack.c.b16 %v1224, %v1220
        %v1265 = vpack.c.b16 %v1229, %v1225
        %v1266 = vpack.c.b16 %v1230, %v1226
        %v1267 = vpack.c.b16 %v1231, %v1227
        %v1268 = vpack.c.b16 %v1232, %v1228
        %v1269 = vpack.c.b16 %v1237, %v1233
        %v1270 = vpack.c.b16 %v1238, %v1234
        %v1271 = vpack.c.b16 %v1239, %v1235
        %v1272 = vpack.c.b16 %v1240, %v1236
        %1305 = vmatprep.subr.bf16.mxu0 %v1242
        %1306 = vmatpush1.bf16.msra.mxu0 %v1241
        %1307 = vmatprep.subr.bf16.mxu0 %v1246
        %1308 = vmatpush1.bf16.msra.mxu0 %v1245
        %1309 = vmatprep.subr.bf16.mxu0 %v1250
        %1310 = vmatpush1.bf16.msra.mxu0 %v1249
        %1311 = vmatprep.subr.bf16.mxu0 %v1254
        %1312 = vmatpush1.bf16.msra.mxu0 %v1253
        %1313 = vmatprep.subr.bf16.mxu0 %v1258
        %1314 = vmatpush1.bf16.msra.mxu0 %v1257
        %1315 = vmatprep.subr.bf16.mxu0 %v1262
        %1316 = vmatpush1.bf16.msra.mxu0 %v1261
        %1317 = vmatprep.subr.bf16.mxu0 %v1266
        %1318 = vmatpush1.bf16.msra.mxu0 %v1265
        %1319 = vmatprep.subr.bf16.mxu0 %v1270
        %1320 = vmatpush1.bf16.msra.mxu0 %v1269
        %1321 = vmatprep.subr.bf16.mxu0 0
        %1322 = vmatpush1.bf16.msra.mxu0 0
        %1323 = vmatprep.subr.bf16.mxu0 0
        %1324 = vmatpush1.bf16.msra.mxu0 0
        %1325 = vmatprep.subr.bf16.mxu0 0
        %1326 = vmatpush1.bf16.msra.mxu0 0
        %1327 = vmatprep.subr.bf16.mxu0 0
        %1328 = vmatpush1.bf16.msra.mxu0 0
        %1329 = vmatprep.subr.bf16.mxu0 0
        %1330 = vmatpush1.bf16.msra.mxu0 0
        %1331 = vmatprep.subr.bf16.mxu0 0
        %1332 = vmatpush1.bf16.msra.mxu0 0
        %1333 = vmatprep.subr.bf16.mxu0 0
        %1334 = vmatpush1.bf16.msra.mxu0 0
        %1335 = vmatprep.subr.bf16.mxu0 0
        %1336 = vmatpush1.bf16.msra.mxu0 0
        %1337 = vmatprep.mubr.bf16.mxu0 0
        %1338 = vmatmul.mubr.bf16.gmra.mrb[0].mxu0 %v1091
        %v1339 = vpop.f32.mrb[0].mxu0
        %v1340 = vadd.f32 %v1128, %v1339
        %v1341 = vpop.f32.mrb[0].mxu0
        %v1342 = vadd.f32 %v1132, %v1341
        %v1343 = vpop.f32.mrb[0].mxu0
        %v1344 = vadd.f32 %v1128, %v1343
        %v1345 = vpop.f32.mrb[0].mxu0
        %v1346 = vadd.f32 %v1132, %v1345
        %1347 = vdwg.mxu0
        %1348 = vmatprep.subr.bf16.mxu0 %v1244
        %1349 = vmatpush1.bf16.msra.mxu0 %v1243
        %1350 = vmatprep.subr.bf16.mxu0 %v1248
        %1351 = vmatpush1.bf16.msra.mxu0 %v1247
        %1352 = vmatprep.subr.bf16.mxu0 %v1252
        %1353 = vmatpush1.bf16.msra.mxu0 %v1251
        %1354 = vmatprep.subr.bf16.mxu0 %v1256
        %1355 = vmatpush1.bf16.msra.mxu0 %v1255
        %1356 = vmatprep.subr.bf16.mxu0 %v1260
        %1357 = vmatpush1.bf16.msra.mxu0 %v1259
        %1358 = vmatprep.subr.bf16.mxu0 %v1264
        %1359 = vmatpush1.bf16.msra.mxu0 %v1263
        %1360 = vmatprep.subr.bf16.mxu0 %v1268
        %1361 = vmatpush1.bf16.msra.mxu0 %v1267
        %1362 = vmatprep.subr.bf16.mxu0 %v1272
        %1363 = vmatpush1.bf16.msra.mxu0 %v1271
        %1364 = vmatprep.subr.bf16.mxu0 0
        %1365 = vmatpush1.bf16.msra.mxu0 0
        %1366 = vmatprep.subr.bf16.mxu0 0
        %1367 = vmatpush1.bf16.msra.mxu0 0
        %1368 = vmatprep.subr.bf16.mxu0 0
        %1369 = vmatpush1.bf16.msra.mxu0 0
        %1370 = vmatprep.subr.bf16.mxu0 0
        %1371 = vmatpush1.bf16.msra.mxu0 0
        %1372 = vmatprep.subr.bf16.mxu0 0
        %1373 = vmatpush1.bf16.msra.mxu0 0
        %1374 = vmatprep.subr.bf16.mxu0 0
        %1375 = vmatpush1.bf16.msra.mxu0 0
        %1376 = vmatprep.subr.bf16.mxu0 0
        %1377 = vmatpush1.bf16.msra.mxu0 0
        %1378 = vmatprep.subr.bf16.mxu0 0
        %1379 = vmatpush1.bf16.msra.mxu0 0
        %1380 = vmatprep.mubr.bf16.mxu0 0
        %1381 = vmatmul.mubr.bf16.gmra.mrb[0].mxu0 %v1091
        %v1382 = vpop.f32.mrb[0].mxu0
        %v1383 = vadd.f32 %v1136, %v1382
        %v1384 = vpop.f32.mrb[0].mxu0
        %v1385 = vadd.f32 %v1140, %v1384
        %v1386 = vpop.f32.mrb[0].mxu0
        %v1387 = vadd.f32 %v1136, %v1386
        %v1388 = vpop.f32.mrb[0].mxu0
        %v1389 = vadd.f32 %v1140, %v1388
        %1390 = vdwg.mxu0
        %v1391 = vmul.f32 %v1340, 0.5
        %v1392 = vmul.f32 %v1342, 0.5
        %v1393 = vmul.f32 %v1383, 0.5
        %v1394 = vmul.f32 %v1385, 0.5
        %v1395 = vmul.f32 %v1344, 0.5
        %v1396 = vmul.f32 %v1346, 0.5
        %v1397 = vmul.f32 %v1387, 0.5
        %v1398 = vmul.f32 %v1389, 0.5
        %v1399 = vmul.f32 %v1340, 0.044715
        %v1400 = vmul.f32 %v1342, 0.044715
        %v1401 = vmul.f32 %v1383, 0.044715
        %v1402 = vmul.f32 %v1385, 0.044715
        %v1403 = vmul.f32 %v1344, 0.044715
        %v1404 = vmul.f32 %v1346, 0.044715
        %v1405 = vmul.f32 %v1387, 0.044715
        %v1406 = vmul.f32 %v1389, 0.044715
        %v1407 = vmul.f32 %v1399, %v1340
        %v1408 = vmul.f32 %v1400, %v1342
        %v1409 = vmul.f32 %v1401, %v1383
        %v1410 = vmul.f32 %v1402, %v1385
        %v1411 = vmul.f32 %v1403, %v1344
        %v1412 = vmul.f32 %v1404, %v1346
        %v1413 = vmul.f32 %v1405, %v1387
        %v1414 = vmul.f32 %v1406, %v1389
        %v1415 = vmul.f32 %v1407, %v1340
        %v1416 = vmul.f32 %v1408, %v1342
        %v1417 = vmul.f32 %v1409, %v1383
        %v1418 = vmul.f32 %v1410, %v1385
        %v1419 = vmul.f32 %v1411, %v1344
        %v1420 = vmul.f32 %v1412, %v1346
        %v1421 = vmul.f32 %v1413, %v1387
        %v1422 = vmul.f32 %v1414, %v1389
        %v1423 = vadd.f32 %v1340, %v1415
        %v1424 = vadd.f32 %v1342, %v1416
        %v1425 = vadd.f32 %v1383, %v1417
        %v1426 = vadd.f32 %v1385, %v1418
        %v1427 = vadd.f32 %v1344, %v1419
        %v1428 = vadd.f32 %v1346, %v1420
        %v1429 = vadd.f32 %v1387, %v1421
        %v1430 = vadd.f32 %v1389, %v1422
        %v1431 = vmul.f32 %v1423, 0.7978846
        %v1432 = vmul.f32 %v1424, 0.7978846
        %v1433 = vmul.f32 %v1425, 0.7978846
        %v1434 = vmul.f32 %v1426, 0.7978846
        %v1435 = vmul.f32 %v1427, 0.7978846
        %v1436 = vmul.f32 %v1428, 0.7978846
        %v1437 = vmul.f32 %v1429, 0.7978846
        %v1438 = vmul.f32 %v1430, 0.7978846
        %v1439 = vtanh.pop %v1431
        %v1440 = vtanh.pop %v1432
        %v1441 = vtanh.pop %v1433
        %v1442 = vtanh.pop %v1434
        %v1443 = vtanh.pop %v1435
        %v1444 = vtanh.pop %v1436
        %v1445 = vtanh.pop %v1437
        %v1446 = vtanh.pop %v1438
        %v1447 = vadd.f32 %v1439, 1.0
        %v1448 = vadd.f32 %v1440, 1.0
        %v1449 = vadd.f32 %v1441, 1.0
        %v1450 = vadd.f32 %v1442, 1.0
        %v1451 = vadd.f32 %v1443, 1.0
        %v1452 = vadd.f32 %v1444, 1.0
        %v1453 = vadd.f32 %v1445, 1.0
        %v1454 = vadd.f32 %v1446, 1.0
        %v1455 = vmul.f32 %v1391, %v1447
        %v1456 = vmul.f32 %v1392, %v1448
        %v1457 = vmul.f32 %v1393, %v1449
        %v1458 = vmul.f32 %v1394, %v1450
        %v1459 = vmul.f32 %v1395, %v1451
        %v1460 = vmul.f32 %v1396, %v1452
        %v1461 = vmul.f32 %v1397, %v1453
        %v1462 = vmul.f32 %v1398, %v1454
        %v1463 = vpack.c.bf16 %v1459, %v1455
        %v1464 = vpack.c.bf16 %v1460, %v1456
        %v1465 = vpack.c.bf16 %v1461, %v1457
        %v1466 = vpack.c.bf16 %v1462, %v1458
        %v1467 = vld [vmem:[#allocation16] sm:$0xf]
        %v1468 = vld [vmem:[#allocation16 + $0x4] sm:$0xf]
        %v1469 = vld [vmem:[#allocation16 + $0x8] sm:$0xf]
        %v1470 = vld [vmem:[#allocation16 + $0xc] sm:$0xf]
        %v1471 = vld [vmem:[#allocation16 + $0x10] sm:$0xf]
        %v1472 = vld [vmem:[#allocation16 + $0x14] sm:$0xf]
        %v1473 = vld [vmem:[#allocation16 + $0x18] sm:$0xf]
        %v1474 = vld [vmem:[#allocation16 + $0x1c] sm:$0xf]
        %v1475 = vld [vmem:[#allocation16 + $0x20] sm:$0xf]
        %v1476 = vld [vmem:[#allocation16 + $0x24] sm:$0xf]
        %v1477 = vld [vmem:[#allocation16 + $0x28] sm:$0xf]
        %v1478 = vld [vmem:[#allocation16 + $0x2c] sm:$0xf]
        %v1479 = vld [vmem:[#allocation16 + $0x30] sm:$0xf]
        %v1480 = vld [vmem:[#allocation16 + $0x34] sm:$0xf]
        %v1481 = vld [vmem:[#allocation16 + $0x38] sm:$0xf]
        %v1482 = vld [vmem:[#allocation16 + $0x3c] sm:$0xf]
        %v1483 = vld [vmem:[#allocation16 + $0x40] sm:$0xf]
        %v1484 = vld [vmem:[#allocation16 + $0x44] sm:$0xf]
        %v1485 = vld [vmem:[#allocation16 + $0x48] sm:$0xf]
        %v1486 = vld [vmem:[#allocation16 + $0x4c] sm:$0xf]
        %v1487 = vld [vmem:[#allocation16 + $0x50] sm:$0xf]
        %v1488 = vld [vmem:[#allocation16 + $0x54] sm:$0xf]
        %v1489 = vld [vmem:[#allocation16 + $0x58] sm:$0xf]
        %v1490 = vld [vmem:[#allocation16 + $0x5c] sm:$0xf]
        %v1491 = vld [vmem:[#allocation16 + $0x60] sm:$0xf]
        %v1492 = vld [vmem:[#allocation16 + $0x64] sm:$0xf]
        %v1493 = vld [vmem:[#allocation16 + $0x68] sm:$0xf]
        %v1494 = vld [vmem:[#allocation16 + $0x6c] sm:$0xf]
        %v1495 = vld [vmem:[#allocation16 + $0x70] sm:$0xf]
        %v1496 = vld [vmem:[#allocation16 + $0x74] sm:$0xf]
        %v1497 = vld [vmem:[#allocation16 + $0x78] sm:$0xf]
        %v1498 = vld [vmem:[#allocation16 + $0x7c] sm:$0xf]
        %v1499 = vld [vmem:[#allocation16 + $0x80] sm:$0xf]
        %v1500 = vld [vmem:[#allocation16 + $0x84] sm:$0xf]
        %v1501 = vld [vmem:[#allocation16 + $0x88] sm:$0xf]
        %v1502 = vld [vmem:[#allocation16 + $0x8c] sm:$0xf]
        %v1503 = vld [vmem:[#allocation16 + $0x90] sm:$0xf]
        %v1504 = vld [vmem:[#allocation16 + $0x94] sm:$0xf]
        %v1505 = vld [vmem:[#allocation16 + $0x98] sm:$0xf]
        %v1506 = vld [vmem:[#allocation16 + $0x9c] sm:$0xf]
        %v1507 = vld [vmem:[#allocation16 + $0xa0] sm:$0xf]
        %v1508 = vld [vmem:[#allocation16 + $0xa4] sm:$0xf]
        %v1509 = vld [vmem:[#allocation16 + $0xa8] sm:$0xf]
        %v1510 = vld [vmem:[#allocation16 + $0xac] sm:$0xf]
        %v1511 = vld [vmem:[#allocation16 + $0xb0] sm:$0xf]
        %v1512 = vld [vmem:[#allocation16 + $0xb4] sm:$0xf]
        %v1513 = vld [vmem:[#allocation16 + $0xb8] sm:$0xf]
        %v1514 = vld [vmem:[#allocation16 + $0xbc] sm:$0xf]
        %v1515 = vld [vmem:[#allocation16 + $0xc0] sm:$0xf]
        %v1516 = vld [vmem:[#allocation16 + $0xc4] sm:$0xf]
        %v1517 = vld [vmem:[#allocation16 + $0xc8] sm:$0xf]
        %v1518 = vld [vmem:[#allocation16 + $0xcc] sm:$0xf]
        %v1519 = vld [vmem:[#allocation16 + $0xd0] sm:$0xf]
        %v1520 = vld [vmem:[#allocation16 + $0xd4] sm:$0xf]
        %v1521 = vld [vmem:[#allocation16 + $0xd8] sm:$0xf]
        %v1522 = vld [vmem:[#allocation16 + $0xdc] sm:$0xf]
        %v1523 = vld [vmem:[#allocation16 + $0xe0] sm:$0xf]
        %v1524 = vld [vmem:[#allocation16 + $0xe4] sm:$0xf]
        %v1525 = vld [vmem:[#allocation16 + $0xe8] sm:$0xf]
        %v1526 = vld [vmem:[#allocation16 + $0xec] sm:$0xf]
        %v1527 = vld [vmem:[#allocation16 + $0xf0] sm:$0xf]
        %v1528 = vld [vmem:[#allocation16 + $0xf4] sm:$0xf]
        %v1529 = vld [vmem:[#allocation16 + $0xf8] sm:$0xf]
        %v1530 = vld [vmem:[#allocation16 + $0xfc] sm:$0xf]
        %v1595 = vunpack.c.l.b16 %v1467
        %v1596 = vunpack.c.l.b16 %v1468
        %v1597 = vunpack.c.l.b16 %v1469
        %v1598 = vunpack.c.l.b16 %v1470
        %v1599 = vunpack.c.l.b16 %v1471
        %v1600 = vunpack.c.l.b16 %v1472
        %v1601 = vunpack.c.l.b16 %v1473
        %v1602 = vunpack.c.l.b16 %v1474
        %v1603 = vunpack.c.l.b16 %v1475
        %v1604 = vunpack.c.l.b16 %v1476
        %v1605 = vunpack.c.l.b16 %v1477
        %v1606 = vunpack.c.l.b16 %v1478
        %v1607 = vunpack.c.l.b16 %v1479
        %v1608 = vunpack.c.l.b16 %v1480
        %v1609 = vunpack.c.l.b16 %v1481
        %v1610 = vunpack.c.l.b16 %v1482
        %v1611 = vunpack.c.l.b16 %v1483
        %v1612 = vunpack.c.l.b16 %v1484
        %v1613 = vunpack.c.l.b16 %v1485
        %v1614 = vunpack.c.l.b16 %v1486
        %v1615 = vunpack.c.l.b16 %v1487
        %v1616 = vunpack.c.l.b16 %v1488
        %v1617 = vunpack.c.l.b16 %v1489
        %v1618 = vunpack.c.l.b16 %v1490
        %v1619 = vunpack.c.l.b16 %v1491
        %v1620 = vunpack.c.l.b16 %v1492
        %v1621 = vunpack.c.l.b16 %v1493
        %v1622 = vunpack.c.l.b16 %v1494
        %v1623 = vunpack.c.l.b16 %v1495
        %v1624 = vunpack.c.l.b16 %v1496
        %v1625 = vunpack.c.l.b16 %v1497
        %v1626 = vunpack.c.l.b16 %v1498
        %v1627 = vunpack.c.l.b16 %v1499
        %v1628 = vunpack.c.l.b16 %v1500
        %v1629 = vunpack.c.l.b16 %v1501
        %v1630 = vunpack.c.l.b16 %v1502
        %v1631 = vunpack.c.l.b16 %v1503
        %v1632 = vunpack.c.l.b16 %v1504
        %v1633 = vunpack.c.l.b16 %v1505
        %v1634 = vunpack.c.l.b16 %v1506
        %v1635 = vunpack.c.l.b16 %v1507
        %v1636 = vunpack.c.l.b16 %v1508
        %v1637 = vunpack.c.l.b16 %v1509
        %v1638 = vunpack.c.l.b16 %v1510
        %v1639 = vunpack.c.l.b16 %v1511
        %v1640 = vunpack.c.l.b16 %v1512
        %v1641 = vunpack.c.l.b16 %v1513
        %v1642 = vunpack.c.l.b16 %v1514
        %v1643 = vunpack.c.l.b16 %v1515
        %v1644 = vunpack.c.l.b16 %v1516
        %v1645 = vunpack.c.l.b16 %v1517
        %v1646 = vunpack.c.l.b16 %v1518
        %v1647 = vunpack.c.l.b16 %v1519
        %v1648 = vunpack.c.l.b16 %v1520
        %v1649 = vunpack.c.l.b16 %v1521
        %v1650 = vunpack.c.l.b16 %v1522
        %v1651 = vunpack.c.l.b16 %v1523
        %v1652 = vunpack.c.l.b16 %v1524
        %v1653 = vunpack.c.l.b16 %v1525
        %v1654 = vunpack.c.l.b16 %v1526
        %v1655 = vunpack.c.l.b16 %v1527
        %v1656 = vunpack.c.l.b16 %v1528
        %v1657 = vunpack.c.l.b16 %v1529
        %v1658 = vunpack.c.l.b16 %v1530
        %v1659 = vpack.c.b16 %v1596, %v1595
        %v1660 = vpack.c.b16 %v1598, %v1597
        %v1661 = vpack.c.b16 %v1600, %v1599
        %v1662 = vpack.c.b16 %v1602, %v1601
        %v1663 = vpack.c.b16 %v1604, %v1603
        %v1664 = vpack.c.b16 %v1606, %v1605
        %v1665 = vpack.c.b16 %v1608, %v1607
        %v1666 = vpack.c.b16 %v1610, %v1609
        %v1667 = vpack.c.b16 %v1612, %v1611
        %v1668 = vpack.c.b16 %v1614, %v1613
        %v1669 = vpack.c.b16 %v1616, %v1615
        %v1670 = vpack.c.b16 %v1618, %v1617
        %v1671 = vpack.c.b16 %v1620, %v1619
        %v1672 = vpack.c.b16 %v1622, %v1621
        %v1673 = vpack.c.b16 %v1624, %v1623
        %v1674 = vpack.c.b16 %v1626, %v1625
        %v1675 = vpack.c.b16 %v1628, %v1627
        %v1676 = vpack.c.b16 %v1630, %v1629
        %v1677 = vpack.c.b16 %v1632, %v1631
        %v1678 = vpack.c.b16 %v1634, %v1633
        %v1679 = vpack.c.b16 %v1636, %v1635
        %v1680 = vpack.c.b16 %v1638, %v1637
        %v1681 = vpack.c.b16 %v1640, %v1639
        %v1682 = vpack.c.b16 %v1642, %v1641
        %v1683 = vpack.c.b16 %v1644, %v1643
        %v1684 = vpack.c.b16 %v1646, %v1645
        %v1685 = vpack.c.b16 %v1648, %v1647
        %v1686 = vpack.c.b16 %v1650, %v1649
        %v1687 = vpack.c.b16 %v1652, %v1651
        %v1688 = vpack.c.b16 %v1654, %v1653
        %v1689 = vpack.c.b16 %v1656, %v1655
        %v1690 = vpack.c.b16 %v1658, %v1657
        %1723 = vmatprep.subr.bf16.mxu0 0
        %1724 = vmatpush1.bf16.msra.mxu0 %v1659
        %1725 = vmatprep.subr.bf16.mxu0 0
        %1726 = vmatpush1.bf16.msra.mxu0 %v1660
        %1727 = vmatprep.subr.bf16.mxu0 0
        %1728 = vmatpush1.bf16.msra.mxu0 %v1661
        %1729 = vmatprep.subr.bf16.mxu0 0
        %1730 = vmatpush1.bf16.msra.mxu0 %v1662
        %1731 = vmatprep.subr.bf16.mxu0 0
        %1732 = vmatpush1.bf16.msra.mxu0 %v1663
        %1733 = vmatprep.subr.bf16.mxu0 0
        %1734 = vmatpush1.bf16.msra.mxu0 %v1664
        %1735 = vmatprep.subr.bf16.mxu0 0
        %1736 = vmatpush1.bf16.msra.mxu0 %v1665
        %1737 = vmatprep.subr.bf16.mxu0 0
        %1738 = vmatpush1.bf16.msra.mxu0 %v1666
        %1739 = vmatprep.subr.bf16.mxu0 0
        %1740 = vmatpush1.bf16.msra.mxu0 %v1667
        %1741 = vmatprep.subr.bf16.mxu0 0
        %1742 = vmatpush1.bf16.msra.mxu0 %v1668
        %1743 = vmatprep.subr.bf16.mxu0 0
        %1744 = vmatpush1.bf16.msra.mxu0 %v1669
        %1745 = vmatprep.subr.bf16.mxu0 0
        %1746 = vmatpush1.bf16.msra.mxu0 %v1670
        %1747 = vmatprep.subr.bf16.mxu0 0
        %1748 = vmatpush1.bf16.msra.mxu0 %v1671
        %1749 = vmatprep.subr.bf16.mxu0 0
        %1750 = vmatpush1.bf16.msra.mxu0 %v1672
        %1751 = vmatprep.subr.bf16.mxu0 0
        %1752 = vmatpush1.bf16.msra.mxu0 %v1673
        %1753 = vmatprep.subr.bf16.mxu0 0
        %1754 = vmatpush1.bf16.msra.mxu0 %v1674
        %1755 = vmatprep.mubr.bf16.mxu0 %v1464
        %1756 = vmatmul.mubr.bf16.gmra.mrb[0].mxu0 %v1463
        %v1757 = vpop.f32.mrb[0].mxu0
        %v1758 = vadd.f32 %v469, %v1757
        %v1759 = vpop.f32.mrb[0].mxu0
        %v1760 = vpop.f32.mrb[0].mxu0
        %v1761 = vadd.f32 %v469, %v1760
        %v1762 = vpop.f32.mrb[0].mxu0
        %1763 = vdwg.mxu0
        %1764 = vmatprep.subr.bf16.mxu0 0
        %1765 = vmatpush1.bf16.msra.mxu0 %v1675
        %1766 = vmatprep.subr.bf16.mxu0 0
        %1767 = vmatpush1.bf16.msra.mxu0 %v1676
        %1768 = vmatprep.subr.bf16.mxu0 0
        %1769 = vmatpush1.bf16.msra.mxu0 %v1677
        %1770 = vmatprep.subr.bf16.mxu0 0
        %1771 = vmatpush1.bf16.msra.mxu0 %v1678
        %1772 = vmatprep.subr.bf16.mxu0 0
        %1773 = vmatpush1.bf16.msra.mxu0 %v1679
        %1774 = vmatprep.subr.bf16.mxu0 0
        %1775 = vmatpush1.bf16.msra.mxu0 %v1680
        %1776 = vmatprep.subr.bf16.mxu0 0
        %1777 = vmatpush1.bf16.msra.mxu0 %v1681
        %1778 = vmatprep.subr.bf16.mxu0 0
        %1779 = vmatpush1.bf16.msra.mxu0 %v1682
        %1780 = vmatprep.subr.bf16.mxu0 0
        %1781 = vmatpush1.bf16.msra.mxu0 %v1683
        %1782 = vmatprep.subr.bf16.mxu0 0
        %1783 = vmatpush1.bf16.msra.mxu0 %v1684
        %1784 = vmatprep.subr.bf16.mxu0 0
        %1785 = vmatpush1.bf16.msra.mxu0 %v1685
        %1786 = vmatprep.subr.bf16.mxu0 0
        %1787 = vmatpush1.bf16.msra.mxu0 %v1686
        %1788 = vmatprep.subr.bf16.mxu0 0
        %1789 = vmatpush1.bf16.msra.mxu0 %v1687
        %1790 = vmatprep.subr.bf16.mxu0 0
        %1791 = vmatpush1.bf16.msra.mxu0 %v1688
        %1792 = vmatprep.subr.bf16.mxu0 0
        %1793 = vmatpush1.bf16.msra.mxu0 %v1689
        %1794 = vmatprep.subr.bf16.mxu0 0
        %1795 = vmatpush1.bf16.msra.mxu0 %v1690
        %1796 = vmatprep.mubr.bf16.mxu0 %v1466
        %1797 = vmatmul.mubr.bf16.gmra.mrb[0].mxu0 %v1465
        %v1798 = vpop.f32.mrb[0].mxu0
        %v1799 = vadd.f32 %v1758, %v1798
        %v1800 = vpop.f32.mrb[0].mxu0
        %v1801 = vpop.f32.mrb[0].mxu0
        %v1802 = vadd.f32 %v1761, %v1801
        %v1803 = vpop.f32.mrb[0].mxu0
        %1804 = vdwg.mxu0
        %v1805 = vadd.f32 %v1089, %v1799
        %v1806 = vadd.f32 %v1090, %v1802
        %1807 = vst [vmem:[%s464] sm:$0xff] %v1805
        %1808 = vst [vmem:[%s464 + $0x8] sm:$0xff] %v1806
        %s1809 = sand.u32 %s232, 1
        %s1810 = scalar_lea.sflag [#allocation4], %s1809
        %s1811 = sand.u32 %s232, 1
        %s1812 = smul.addr %s1811, 16
        %s1813 = scalar_lea.vmem [#allocation17], %s1812
        // Predicated region
        $region93: #{tpu_custom_call.1} parent=55 // pred_check
          %p1814 = pneg %p242
        $region94: #{tpu_custom_call.1} parent=55 // pred_check_branch
          %1816 = sbr.rel (%p1814) target = $region96
        $region95: #{tpu_custom_call.1} parent=55 // pred_region
          %s1818 = ssub.s32 256, 256
          %1819 = vsyncadd %s1810, %s1818
          %s1820 = smul.addr %s30, 2
          %s1821 = smul.addr %s1820, 128
          %s1822 = scalar_lea.hbm %s9, %s1821
          %s1823 = sshll.u32 %s1813, 4
          %s1824 = int_to_ptr.vmem [resolvable:$true] %s1823
          %1829 = dma.vmem_to_hbm [thread:$0]  %s1824, 256, %s1822, %s1810, 128, 128, 8
        $region96: #{tpu_custom_call.1} parent=55 // pred_fallthru
          _
      $region56: #{tpu_custom_call.1} parent=5 // pred_fallthru
        _
      %p1830 = scmp.le.s32.totalorder 2, %s25
      // Predicated region
      $region97: #{tpu_custom_call.1} parent=5 // pred_check
        %p1831 = pneg %p1830
      $region98: #{tpu_custom_call.1} parent=5 // pred_check_branch
        %1833 = sbr.rel (%p1831) target = $region100
      $region99: #{tpu_custom_call.1} parent=5 // pred_region
        %s1834 = ssub.s32 %s25, 2
        // Predicated region
        $region101: #{tpu_custom_call.1} parent=99 // pred_check
          %p1835 = pneg %p248
        $region102: #{tpu_custom_call.1} parent=99 // pred_check_branch
          %1837 = sbr.rel (%p1835) target = $region104
        $region103: #{tpu_custom_call.1} parent=99 // pred_region
          %s1838 = sand.u32 %s233, 1
          %s1839 = scalar_lea.sflag [#allocation4], %s1838
          %s1840 = sand.u32 %s233, 1
          %s1841 = smul.addr %s1840, 16
          %s1842 = scalar_lea.vmem [#allocation17], %s1841
          %1843 = dma.done %s1839, 256
        $region104: #{tpu_custom_call.1} parent=99 // pred_fallthru
          _
      $region100: #{tpu_custom_call.1} parent=5 // pred_fallthru
        _
    $region6: #{tpu_custom_call.1} parent=1 // loop_footer
      %s29 = sadd.s32 1, %s25
    $region7: #{tpu_custom_call.1} parent=1 // loop_footer_branch
      %24 = sbr.rel target = $region3
    $region8: #{tpu_custom_call.1} parent=1 // loop_exit
      _
    %1844 = vsyncpa [#allocation3], 1
    %s1845 = scalar_lea.sflag [#allocation3], 1
    %1846 = vsyncpa %s1845, 1
    %1847 = vsyncpa [#allocation6], 1
    %1848 = vsyncpa [#allocation9], 1
    %1849 = vsyncpa [#allocation12], 1
    %1850 = vsyncpa [#allocation15], 1
    %1851 = vsyncpa [#allocation4], 1
    %s1852 = scalar_lea.sflag [#allocation4], 1
    %1853 = vsyncpa %s1852, 1

</llo_original>
